<compile_context>
chip_gen: v6e
topology: v6e:2x2x1
jax: 0.10.0
libtpu: 0.0.40
codegen_flags: <defaults>
</compile_context>

<pallas_src>
import jax
import jax.numpy as jnp
from jax import lax
from jax.experimental import pallas as pl
from jax.experimental.pallas import tpu as pltpu  # noqa: F401  (kept for TPU-specific tuning hooks)

# ---------------- problem sizes (small, consistent with the forward) --------
B = 2            # batch
C_IN = 3         # RGB image channels
H_IMG = 16
W_IMG = 16
HW = H_IMG * W_IMG
FEAT_C = 512     # backbone feature channels (== FPN in_channels_list[0])
FPN_C = 128      # FPN out_channels
T_SEQ = 8        # tabular sequence length
TAB_D = 32       # tabular_input_dim
ATT_D = 64       # self-attention output_dim
FUS_D = 128      # fc_fusion out
FC1_D = 64       # fc1 out
OUT_D = 4        # output_dim
OUT_PAD = 128    # lane-dense padded width of the final layer / output
STRIP = 64       # image rows streamed per step (<= 64 keeps the strip in vregs)


# ---------------------------- fused Pallas kernel ----------------------------
def medfusion_fused_kernel(x_ref, tab_ref, mask_ref, pmean_ref,
                           wf_ref, bf_ref,
                           wq_ref, bq_ref, wk_ref, bk_ref, wv_ref, bv_ref,
                           wfpn_ref, bfpn_ref,
                           wfa_ref, wfb_ref, bfu_ref,
                           w1_ref, b1_ref, w2_ref, b2_ref,
                           o_ref):
    """Entire MedFusionNet forward; batch folded into the row (sublane) dim."""
    f32 = jnp.float32

    # ---- backbone replacement: streamed channel mix + ReLU + global avg pool
    # TODO(synk): DenseNet-121 features replaced by 1x1 channel mix + ReLU +
    # global average pool (acknowledged approximation of the backbone).
    wf = wf_ref[...]                                  # (C_IN, FEAT_C)
    bf = bf_ref[...]                                  # (1, FEAT_C)
    inv_hw = f32(1.0 / HW)
    feat_rows = []
    for bi in range(B):                               # static unroll (B = 2)
        acc = jnp.zeros((1, FEAT_C), f32)
        for s in range(HW // STRIP):                  # 4 strips per batch
            row0 = bi * HW + s * STRIP
            xc = x_ref[pl.ds(row0, STRIP), :]         # (STRIP, C_IN)
            # K=3 channel mix on the VPU (avoids padded-K MXU + MRF drain).
            hc = bf
            for c in range(C_IN):
                hc = hc + xc[:, c:c + 1] * wf[c:c + 1, :]
            hc = jnp.maximum(hc, 0.0)                 # (STRIP, FEAT_C)
            acc = acc + jnp.sum(hc, axis=0, keepdims=True)
        feat_rows.append(acc * inv_hw)
    feat = jnp.concatenate(feat_rows, axis=0)         # (B, FEAT_C)

    # ---- batched self-attention on tabular input + mean over sequence ----
    # 1/sqrt(ATT_D) score scale is pre-folded into wq/bq in the wrapper.
    t = tab_ref[...]                                  # (B*T, TAB_D)
    q = jnp.dot(t, wq_ref[...], preferred_element_type=f32) + bq_ref[...]
    k = jnp.dot(t, wk_ref[...], preferred_element_type=f32) + bk_ref[...]
    v = jnp.dot(t, wv_ref[...], preferred_element_type=f32) + bv_ref[...]
    # one MXU push for all batches; block-diagonal additive mask keeps batches
    # independent (q @ k^T without materializing k.T).
    s = lax.dot_general(q, k, (((1,), (1,)), ((), ())),
                        preferred_element_type=f32)   # (B*T, B*T)
    s = s + mask_ref[...]                             # 0 / -1e30 block-diag mask
    s = s - jnp.max(s, axis=-1, keepdims=True)        # stable softmax
    p = jnp.exp(s)
    p = p * pl.reciprocal(jnp.sum(p, axis=-1, keepdims=True), approx=True)
    o_att = jnp.dot(p, v, preferred_element_type=f32)  # (B*T, ATT_D)
    # per-batch mean over the sequence as a tiny MXU contraction (no concat)
    tabf = jnp.dot(pmean_ref[...], o_att, preferred_element_type=f32)  # (B, ATT_D)

    # ---- FPN 1x1 conv (1x1 spatial == linear) + fusion MLP head ----
    fpn = jnp.dot(feat, wfpn_ref[...], preferred_element_type=f32) + bfpn_ref[...]
    # concat([fpn, tabf]) @ w_fus  ==  fpn @ w_fus[:128] + tabf @ w_fus[128:]
    hf = jnp.maximum(
        jnp.dot(fpn, wfa_ref[...], preferred_element_type=f32)
        + jnp.dot(tabf, wfb_ref[...], preferred_element_type=f32)
        + bfu_ref[...], 0.0)                          # relu(fc_fusion)
    h1 = jnp.maximum(
        jnp.dot(hf, w1_ref[...], preferred_element_type=f32) + b1_ref[...],
        0.0)                                          # relu(fc1)
    z = jnp.dot(h1, w2_ref[...], preferred_element_type=f32) + b2_ref[...]
    # sigmoid(fc2): EUP exp + approx reciprocal, clamped to the valid range.
    sig = pl.reciprocal(1.0 + jnp.exp(-z), approx=True)
    o_ref[...] = jnp.clip(sig, 0.0, 1.0)              # (B, OUT_PAD)


# ---------------------------- wrapper ----------------------------------------
def medfusionnet_forward(image_nchw, tabular, params):
    assert image_nchw.shape == (B, C_IN, H_IMG, W_IMG)
    assert tabular.shape == (B, T_SEQ, TAB_D)

    # glue: NCHW -> channels-last rows; fold batch into the row (sublane) dim.
    x = jnp.transpose(image_nchw, (0, 2, 3, 1)).reshape(B * HW, C_IN)
    tab = tabular.reshape(B * T_SEQ, TAB_D)

    # fold 1/sqrt(ATT_D) attention-score scale into the query projection
    # (scales both wq and bq, so (x@wq+bq)/sqrt(d) is reproduced exactly).
    inv_scale = jnp.float32(1.0 / (ATT_D ** 0.5))
    wq = params["wq"] * inv_scale
    bq = params["bq"] * inv_scale

    # split fc_fusion weights so the kernel avoids a 192-lane concat operand.
    w_fus_a = params["w_fus"][:FPN_C]        # (128, 128) -> multiplies fpn part
    w_fus_b = params["w_fus"][FPN_C:]        # (64, 128)  -> multiplies tab part

    # lane-dense final layer: pad fc2 to 128 output lanes (sliced off below).
    w2p = jnp.zeros((FC1_D, OUT_PAD), jnp.float32).at[:, :OUT_D].set(params["w2"])
    b2p = jnp.zeros((1, OUT_PAD), jnp.float32).at[:, :OUT_D].set(params["b2"])

    # block-diagonal additive attention mask + per-batch mean-pool matrix.
    bid = jnp.repeat(jnp.arange(B), T_SEQ)                       # (B*T,)
    attn_mask = jnp.where(bid[:, None] == bid[None, :],
                          0.0, -1e30).astype(jnp.float32)        # (B*T, B*T)
    pmean = (jnp.arange(B)[:, None] == bid[None, :]).astype(jnp.float32) / T_SEQ

    operands = (
        x, tab, attn_mask, pmean,
        params["w_feat"], params["b_feat"],
        wq, bq, params["wk"], params["bk"], params["wv"], params["bv"],
        params["w_fpn"], params["b_fpn"],
        w_fus_a, w_fus_b, params["b_fus"],
        params["w1"], params["b1"], w2p, b2p,
    )

    # Gridless pallas_call: all operands become full-array VMEM refs (no
    # size-1 grid prologue/epilogue, no double-buffered DMA for ~0.45 MiB).
    out = pl.pallas_call(
        medfusion_fused_kernel,
        out_shape=jax.ShapeDtypeStruct((B, OUT_PAD), jnp.float32),
    )(*operands)
    return out[:, :OUT_D]


# ---------------------------- pure-JAX reference ------------------------------
def medfusionnet_reference(image_nchw, tabular, params):
    x = jnp.transpose(image_nchw, (0, 2, 3, 1)).reshape(B, HW, C_IN)
    h = jnp.maximum(
        jnp.einsum("bpc,cf->bpf", x, params["w_feat"]) + params["b_feat"], 0.0)
    feat = jnp.mean(h, axis=1)                                   # (B, FEAT_C)
    fpn = feat @ params["w_fpn"] + params["b_fpn"]               # (B, FPN_C)
    q = tabular @ params["wq"] + params["bq"]
    k = tabular @ params["wk"] + params["bk"]
    v = tabular @ params["wv"] + params["bv"]
    s = jnp.einsum("btd,bsd->bts", q, k) / (ATT_D ** 0.5)
    p = jax.nn.softmax(s, axis=-1)
    tabf = jnp.mean(jnp.einsum("bts,bsd->btd", p, v), axis=1)    # (B, ATT_D)
    fused = jnp.concatenate([fpn, tabf], axis=1)
    hf = jnp.maximum(fused @ params["w_fus"] + params["b_fus"], 0.0)
    h1 = jnp.maximum(hf @ params["w1"] + params["b1"], 0.0)
    return jax.nn.sigmoid(h1 @ params["w2"] + params["b2"])


# ---------------------------- deterministic params ---------------------------
def init_params(key):
    ks = jax.random.split(key, 13)
    s = 0.05

    def nrm(k, shape):
        return (s * jax.random.normal(k, shape)).astype(jnp.float32)

    return {
        # backbone replacement (1x1 conv channel mix): Linear(3 -> 512)
        "w_feat": nrm(ks[0], (C_IN, FEAT_C)),
        "b_feat": nrm(ks[1], (1, FEAT_C)),
        # FPN layer 0: Conv2d(512, 128, k=1) == Linear(512 -> 128)
        "w_fpn": nrm(ks[2], (FEAT_C, FPN_C)),
        "b_fpn": nrm(ks[3], (1, FPN_C)),
        # self-attention projections
        "wq": nrm(ks[4], (TAB_D, ATT_D)), "bq": nrm(ks[5], (1, ATT_D)),
        "wk": nrm(ks[6], (TAB_D, ATT_D)), "bk": nrm(ks[7], (1, ATT_D)),
        "wv": nrm(ks[8], (TAB_D, ATT_D)), "bv": nrm(ks[9], (1, ATT_D)),
        # fusion head
        "w_fus": nrm(ks[10], (FPN_C + ATT_D, FUS_D)),
        "b_fus": jnp.zeros((1, FUS_D), jnp.float32),
        "w1": nrm(ks[11], (FUS_D, FC1_D)),
        "b1": jnp.zeros((1, FC1_D), jnp.float32),
        "w2": nrm(ks[12], (FC1_D, OUT_D)),
        "b2": jnp.zeros((1, OUT_D), jnp.float32),
    }


if __name__ == "__main__":
    key = jax.random.PRNGKey(0)
    k_img, k_tab, k_par = jax.random.split(key, 3)
    image = jax.random.normal(k_img, (B, C_IN, H_IMG, W_IMG), dtype=jnp.float32)
    tabular = jax.random.normal(k_tab, (B, T_SEQ, TAB_D), dtype=jnp.float32)
    params = init_params(k_par)

    out = jax.block_until_ready(medfusionnet_forward(image, tabular, params))

    assert out.shape == (B, OUT_D), out.shape
    assert bool(jnp.all(jnp.isfinite(out)))
    assert bool(jnp.all((out >= 0.0) & (out <= 1.0)))   # sigmoid output range

    # loose tolerance: approx reciprocal in softmax / sigmoid (~1e-3 rel err)
    ref = jax.block_until_ready(medfusionnet_reference(image, tabular, params))
    assert bool(jnp.allclose(out, ref, rtol=2e-2, atol=2e-2)), (out, ref)

    print("KERNEL_OK")
</pallas_src>

<mosaic_0001>
module attributes {stable_mosaic.version = 11 : i64} {
  func.func @medfusion_fused_kernel(%arg0: memref<512x3xf32, #tpu.memory_space<vmem>>, %arg1: memref<16x32xf32, #tpu.memory_space<vmem>>, %arg2: memref<16x16xf32, #tpu.memory_space<vmem>>, %arg3: memref<2x16xf32, #tpu.memory_space<vmem>>, %arg4: memref<3x512xf32, #tpu.memory_space<vmem>>, %arg5: memref<1x512xf32, #tpu.memory_space<vmem>>, %arg6: memref<32x64xf32, #tpu.memory_space<vmem>>, %arg7: memref<1x64xf32, #tpu.memory_space<vmem>>, %arg8: memref<32x64xf32, #tpu.memory_space<vmem>>, %arg9: memref<1x64xf32, #tpu.memory_space<vmem>>, %arg10: memref<32x64xf32, #tpu.memory_space<vmem>>, %arg11: memref<1x64xf32, #tpu.memory_space<vmem>>, %arg12: memref<512x128xf32, #tpu.memory_space<vmem>>, %arg13: memref<1x128xf32, #tpu.memory_space<vmem>>, %arg14: memref<128x128xf32, #tpu.memory_space<vmem>>, %arg15: memref<64x128xf32, #tpu.memory_space<vmem>>, %arg16: memref<1x128xf32, #tpu.memory_space<vmem>>, %arg17: memref<128x64xf32, #tpu.memory_space<vmem>>, %arg18: memref<1x64xf32, #tpu.memory_space<vmem>>, %arg19: memref<64x128xf32, #tpu.memory_space<vmem>>, %arg20: memref<1x128xf32, #tpu.memory_space<vmem>>, %arg21: memref<2x128xf32, #tpu.memory_space<vmem>>) attributes {dimension_semantics = [], scalar_prefetch = 0 : i64, scratch_operands = 0 : i64, tpu.core_type = #tpu.core_type<tc>} {
    %c0 = arith.constant 0 : index
    %c0_0 = arith.constant 0 : index
    %0 = vector.load %arg4[%c0, %c0_0] : memref<3x512xf32, #tpu.memory_space<vmem>>, vector<3x512xf32>
    %c0_1 = arith.constant 0 : index
    %c0_2 = arith.constant 0 : index
    %1 = vector.load %arg5[%c0_1, %c0_2] : memref<1x512xf32, #tpu.memory_space<vmem>>, vector<1x512xf32>
    %cst = arith.constant 0.000000e+00 : f32
    %2 = vector.broadcast %cst : f32 to vector<1x512xf32>
    %c0_3 = arith.constant 0 : index
    %c0_4 = arith.constant 0 : index
    %3 = vector.load %arg0[%c0_3, %c0_4] : memref<512x3xf32, #tpu.memory_space<vmem>>, vector<64x3xf32>
    %4 = vector.extract_strided_slice %3 {offsets = [0, 0], sizes = [64, 1], strides = [1, 1]} : vector<64x3xf32> to vector<64x1xf32>
    %5 = vector.extract_strided_slice %0 {offsets = [0, 0], sizes = [1, 512], strides = [1, 1]} : vector<3x512xf32> to vector<1x512xf32>
    %6 = vector.broadcast %4 : vector<64x1xf32> to vector<64x512xf32>
    %7 = vector.broadcast %5 : vector<1x512xf32> to vector<64x512xf32>
    %8 = arith.mulf %6, %7 : vector<64x512xf32>
    %9 = vector.broadcast %1 : vector<1x512xf32> to vector<64x512xf32>
    %10 = arith.addf %9, %8 : vector<64x512xf32>
    %11 = vector.extract_strided_slice %3 {offsets = [0, 1], sizes = [64, 1], strides = [1, 1]} : vector<64x3xf32> to vector<64x1xf32>
    %12 = vector.extract_strided_slice %0 {offsets = [1, 0], sizes = [1, 512], strides = [1, 1]} : vector<3x512xf32> to vector<1x512xf32>
    %13 = vector.broadcast %11 : vector<64x1xf32> to vector<64x512xf32>
    %14 = vector.broadcast %12 : vector<1x512xf32> to vector<64x512xf32>
    %15 = arith.mulf %13, %14 : vector<64x512xf32>
    %16 = arith.addf %10, %15 : vector<64x512xf32>
    %17 = vector.extract_strided_slice %3 {offsets = [0, 2], sizes = [64, 1], strides = [1, 1]} : vector<64x3xf32> to vector<64x1xf32>
    %18 = vector.extract_strided_slice %0 {offsets = [2, 0], sizes = [1, 512], strides = [1, 1]} : vector<3x512xf32> to vector<1x512xf32>
    %19 = vector.broadcast %17 : vector<64x1xf32> to vector<64x512xf32>
    %20 = vector.broadcast %18 : vector<1x512xf32> to vector<64x512xf32>
    %21 = arith.mulf %19, %20 : vector<64x512xf32>
    %22 = arith.addf %16, %21 : vector<64x512xf32>
    %cst_5 = arith.constant 0.000000e+00 : f32
    %23 = vector.broadcast %cst_5 : f32 to vector<64x512xf32>
    %24 = arith.maximumf %22, %23 : vector<64x512xf32>
    %cst_6 = arith.constant dense<0.000000e+00> : vector<512xf32>
    %25 = vector.multi_reduction <add>, %24, %cst_6 [0] : vector<64x512xf32> to vector<512xf32>
    %26 = vector.shape_cast %25 : vector<512xf32> to vector<1x512xf32>
    %27 = arith.addf %2, %26 : vector<1x512xf32>
    %c64 = arith.constant 64 : index
    %c0_7 = arith.constant 0 : index
    %28 = vector.load %arg0[%c64, %c0_7] : memref<512x3xf32, #tpu.memory_space<vmem>>, vector<64x3xf32>
    %29 = vector.extract_strided_slice %28 {offsets = [0, 0], sizes = [64, 1], strides = [1, 1]} : vector<64x3xf32> to vector<64x1xf32>
    %30 = vector.extract_strided_slice %0 {offsets = [0, 0], sizes = [1, 512], strides = [1, 1]} : vector<3x512xf32> to vector<1x512xf32>
    %31 = vector.broadcast %29 : vector<64x1xf32> to vector<64x512xf32>
    %32 = vector.broadcast %30 : vector<1x512xf32> to vector<64x512xf32>
    %33 = arith.mulf %31, %32 : vector<64x512xf32>
    %34 = vector.broadcast %1 : vector<1x512xf32> to vector<64x512xf32>
    %35 = arith.addf %34, %33 : vector<64x512xf32>
    %36 = vector.extract_strided_slice %28 {offsets = [0, 1], sizes = [64, 1], strides = [1, 1]} : vector<64x3xf32> to vector<64x1xf32>
    %37 = vector.extract_strided_slice %0 {offsets = [1, 0], sizes = [1, 512], strides = [1, 1]} : vector<3x512xf32> to vector<1x512xf32>
    %38 = vector.broadcast %36 : vector<64x1xf32> to vector<64x512xf32>
    %39 = vector.broadcast %37 : vector<1x512xf32> to vector<64x512xf32>
    %40 = arith.mulf %38, %39 : vector<64x512xf32>
    %41 = arith.addf %35, %40 : vector<64x512xf32>
    %42 = vector.extract_strided_slice %28 {offsets = [0, 2], sizes = [64, 1], strides = [1, 1]} : vector<64x3xf32> to vector<64x1xf32>
    %43 = vector.extract_strided_slice %0 {offsets = [2, 0], sizes = [1, 512], strides = [1, 1]} : vector<3x512xf32> to vector<1x512xf32>
    %44 = vector.broadcast %42 : vector<64x1xf32> to vector<64x512xf32>
    %45 = vector.broadcast %43 : vector<1x512xf32> to vector<64x512xf32>
    %46 = arith.mulf %44, %45 : vector<64x512xf32>
    %47 = arith.addf %41, %46 : vector<64x512xf32>
    %cst_8 = arith.constant 0.000000e+00 : f32
    %48 = vector.broadcast %cst_8 : f32 to vector<64x512xf32>
    %49 = arith.maximumf %47, %48 : vector<64x512xf32>
    %cst_9 = arith.constant dense<0.000000e+00> : vector<512xf32>
    %50 = vector.multi_reduction <add>, %49, %cst_9 [0] : vector<64x512xf32> to vector<512xf32>
    %51 = vector.shape_cast %50 : vector<512xf32> to vector<1x512xf32>
    %52 = arith.addf %27, %51 : vector<1x512xf32>
    %c128 = arith.constant 128 : index
    %c0_10 = arith.constant 0 : index
    %53 = vector.load %arg0[%c128, %c0_10] : memref<512x3xf32, #tpu.memory_space<vmem>>, vector<64x3xf32>
    %54 = vector.extract_strided_slice %53 {offsets = [0, 0], sizes = [64, 1], strides = [1, 1]} : vector<64x3xf32> to vector<64x1xf32>
    %55 = vector.extract_strided_slice %0 {offsets = [0, 0], sizes = [1, 512], strides = [1, 1]} : vector<3x512xf32> to vector<1x512xf32>
    %56 = vector.broadcast %54 : vector<64x1xf32> to vector<64x512xf32>
    %57 = vector.broadcast %55 : vector<1x512xf32> to vector<64x512xf32>
    %58 = arith.mulf %56, %57 : vector<64x512xf32>
    %59 = vector.broadcast %1 : vector<1x512xf32> to vector<64x512xf32>
    %60 = arith.addf %59, %58 : vector<64x512xf32>
    %61 = vector.extract_strided_slice %53 {offsets = [0, 1], sizes = [64, 1], strides = [1, 1]} : vector<64x3xf32> to vector<64x1xf32>
    %62 = vector.extract_strided_slice %0 {offsets = [1, 0], sizes = [1, 512], strides = [1, 1]} : vector<3x512xf32> to vector<1x512xf32>
    %63 = vector.broadcast %61 : vector<64x1xf32> to vector<64x512xf32>
    %64 = vector.broadcast %62 : vector<1x512xf32> to vector<64x512xf32>
    %65 = arith.mulf %63, %64 : vector<64x512xf32>
    %66 = arith.addf %60, %65 : vector<64x512xf32>
    %67 = vector.extract_strided_slice %53 {offsets = [0, 2], sizes = [64, 1], strides = [1, 1]} : vector<64x3xf32> to vector<64x1xf32>
    %68 = vector.extract_strided_slice %0 {offsets = [2, 0], sizes = [1, 512], strides = [1, 1]} : vector<3x512xf32> to vector<1x512xf32>
    %69 = vector.broadcast %67 : vector<64x1xf32> to vector<64x512xf32>
    %70 = vector.broadcast %68 : vector<1x512xf32> to vector<64x512xf32>
    %71 = arith.mulf %69, %70 : vector<64x512xf32>
    %72 = arith.addf %66, %71 : vector<64x512xf32>
    %cst_11 = arith.constant 0.000000e+00 : f32
    %73 = vector.broadcast %cst_11 : f32 to vector<64x512xf32>
    %74 = arith.maximumf %72, %73 : vector<64x512xf32>
    %cst_12 = arith.constant dense<0.000000e+00> : vector<512xf32>
    %75 = vector.multi_reduction <add>, %74, %cst_12 [0] : vector<64x512xf32> to vector<512xf32>
    %76 = vector.shape_cast %75 : vector<512xf32> to vector<1x512xf32>
    %77 = arith.addf %52, %76 : vector<1x512xf32>
    %c192 = arith.constant 192 : index
    %c0_13 = arith.constant 0 : index
    %78 = vector.load %arg0[%c192, %c0_13] : memref<512x3xf32, #tpu.memory_space<vmem>>, vector<64x3xf32>
    %79 = vector.extract_strided_slice %78 {offsets = [0, 0], sizes = [64, 1], strides = [1, 1]} : vector<64x3xf32> to vector<64x1xf32>
    %80 = vector.extract_strided_slice %0 {offsets = [0, 0], sizes = [1, 512], strides = [1, 1]} : vector<3x512xf32> to vector<1x512xf32>
    %81 = vector.broadcast %79 : vector<64x1xf32> to vector<64x512xf32>
    %82 = vector.broadcast %80 : vector<1x512xf32> to vector<64x512xf32>
    %83 = arith.mulf %81, %82 : vector<64x512xf32>
    %84 = vector.broadcast %1 : vector<1x512xf32> to vector<64x512xf32>
    %85 = arith.addf %84, %83 : vector<64x512xf32>
    %86 = vector.extract_strided_slice %78 {offsets = [0, 1], sizes = [64, 1], strides = [1, 1]} : vector<64x3xf32> to vector<64x1xf32>
    %87 = vector.extract_strided_slice %0 {offsets = [1, 0], sizes = [1, 512], strides = [1, 1]} : vector<3x512xf32> to vector<1x512xf32>
    %88 = vector.broadcast %86 : vector<64x1xf32> to vector<64x512xf32>
    %89 = vector.broadcast %87 : vector<1x512xf32> to vector<64x512xf32>
    %90 = arith.mulf %88, %89 : vector<64x512xf32>
    %91 = arith.addf %85, %90 : vector<64x512xf32>
    %92 = vector.extract_strided_slice %78 {offsets = [0, 2], sizes = [64, 1], strides = [1, 1]} : vector<64x3xf32> to vector<64x1xf32>
    %93 = vector.extract_strided_slice %0 {offsets = [2, 0], sizes = [1, 512], strides = [1, 1]} : vector<3x512xf32> to vector<1x512xf32>
    %94 = vector.broadcast %92 : vector<64x1xf32> to vector<64x512xf32>
    %95 = vector.broadcast %93 : vector<1x512xf32> to vector<64x512xf32>
    %96 = arith.mulf %94, %95 : vector<64x512xf32>
    %97 = arith.addf %91, %96 : vector<64x512xf32>
    %cst_14 = arith.constant 0.000000e+00 : f32
    %98 = vector.broadcast %cst_14 : f32 to vector<64x512xf32>
    %99 = arith.maximumf %97, %98 : vector<64x512xf32>
    %cst_15 = arith.constant dense<0.000000e+00> : vector<512xf32>
    %100 = vector.multi_reduction <add>, %99, %cst_15 [0] : vector<64x512xf32> to vector<512xf32>
    %101 = vector.shape_cast %100 : vector<512xf32> to vector<1x512xf32>
    %102 = arith.addf %77, %101 : vector<1x512xf32>
    %cst_16 = arith.constant 3.906250e-03 : f32
    %103 = vector.broadcast %cst_16 : f32 to vector<1x512xf32>
    %104 = arith.mulf %102, %103 : vector<1x512xf32>
    %cst_17 = arith.constant 0.000000e+00 : f32
    %105 = vector.broadcast %cst_17 : f32 to vector<1x512xf32>
    %c256 = arith.constant 256 : index
    %c0_18 = arith.constant 0 : index
    %106 = vector.load %arg0[%c256, %c0_18] : memref<512x3xf32, #tpu.memory_space<vmem>>, vector<64x3xf32>
    %107 = vector.extract_strided_slice %106 {offsets = [0, 0], sizes = [64, 1], strides = [1, 1]} : vector<64x3xf32> to vector<64x1xf32>
    %108 = vector.extract_strided_slice %0 {offsets = [0, 0], sizes = [1, 512], strides = [1, 1]} : vector<3x512xf32> to vector<1x512xf32>
    %109 = vector.broadcast %107 : vector<64x1xf32> to vector<64x512xf32>
    %110 = vector.broadcast %108 : vector<1x512xf32> to vector<64x512xf32>
    %111 = arith.mulf %109, %110 : vector<64x512xf32>
    %112 = vector.broadcast %1 : vector<1x512xf32> to vector<64x512xf32>
    %113 = arith.addf %112, %111 : vector<64x512xf32>
    %114 = vector.extract_strided_slice %106 {offsets = [0, 1], sizes = [64, 1], strides = [1, 1]} : vector<64x3xf32> to vector<64x1xf32>
    %115 = vector.extract_strided_slice %0 {offsets = [1, 0], sizes = [1, 512], strides = [1, 1]} : vector<3x512xf32> to vector<1x512xf32>
    %116 = vector.broadcast %114 : vector<64x1xf32> to vector<64x512xf32>
    %117 = vector.broadcast %115 : vector<1x512xf32> to vector<64x512xf32>
    %118 = arith.mulf %116, %117 : vector<64x512xf32>
    %119 = arith.addf %113, %118 : vector<64x512xf32>
    %120 = vector.extract_strided_slice %106 {offsets = [0, 2], sizes = [64, 1], strides = [1, 1]} : vector<64x3xf32> to vector<64x1xf32>
    %121 = vector.extract_strided_slice %0 {offsets = [2, 0], sizes = [1, 512], strides = [1, 1]} : vector<3x512xf32> to vector<1x512xf32>
    %122 = vector.broadcast %120 : vector<64x1xf32> to vector<64x512xf32>
    %123 = vector.broadcast %121 : vector<1x512xf32> to vector<64x512xf32>
    %124 = arith.mulf %122, %123 : vector<64x512xf32>
    %125 = arith.addf %119, %124 : vector<64x512xf32>
    %cst_19 = arith.constant 0.000000e+00 : f32
    %126 = vector.broadcast %cst_19 : f32 to vector<64x512xf32>
    %127 = arith.maximumf %125, %126 : vector<64x512xf32>
    %cst_20 = arith.constant dense<0.000000e+00> : vector<512xf32>
    %128 = vector.multi_reduction <add>, %127, %cst_20 [0] : vector<64x512xf32> to vector<512xf32>
    %129 = vector.shape_cast %128 : vector<512xf32> to vector<1x512xf32>
    %130 = arith.addf %105, %129 : vector<1x512xf32>
    %c320 = arith.constant 320 : index
    %c0_21 = arith.constant 0 : index
    %131 = vector.load %arg0[%c320, %c0_21] : memref<512x3xf32, #tpu.memory_space<vmem>>, vector<64x3xf32>
    %132 = vector.extract_strided_slice %131 {offsets = [0, 0], sizes = [64, 1], strides = [1, 1]} : vector<64x3xf32> to vector<64x1xf32>
    %133 = vector.extract_strided_slice %0 {offsets = [0, 0], sizes = [1, 512], strides = [1, 1]} : vector<3x512xf32> to vector<1x512xf32>
    %134 = vector.broadcast %132 : vector<64x1xf32> to vector<64x512xf32>
    %135 = vector.broadcast %133 : vector<1x512xf32> to vector<64x512xf32>
    %136 = arith.mulf %134, %135 : vector<64x512xf32>
    %137 = vector.broadcast %1 : vector<1x512xf32> to vector<64x512xf32>
    %138 = arith.addf %137, %136 : vector<64x512xf32>
    %139 = vector.extract_strided_slice %131 {offsets = [0, 1], sizes = [64, 1], strides = [1, 1]} : vector<64x3xf32> to vector<64x1xf32>
    %140 = vector.extract_strided_slice %0 {offsets = [1, 0], sizes = [1, 512], strides = [1, 1]} : vector<3x512xf32> to vector<1x512xf32>
    %141 = vector.broadcast %139 : vector<64x1xf32> to vector<64x512xf32>
    %142 = vector.broadcast %140 : vector<1x512xf32> to vector<64x512xf32>
    %143 = arith.mulf %141, %142 : vector<64x512xf32>
    %144 = arith.addf %138, %143 : vector<64x512xf32>
    %145 = vector.extract_strided_slice %131 {offsets = [0, 2], sizes = [64, 1], strides = [1, 1]} : vector<64x3xf32> to vector<64x1xf32>
    %146 = vector.extract_strided_slice %0 {offsets = [2, 0], sizes = [1, 512], strides = [1, 1]} : vector<3x512xf32> to vector<1x512xf32>
    %147 = vector.broadcast %145 : vector<64x1xf32> to vector<64x512xf32>
    %148 = vector.broadcast %146 : vector<1x512xf32> to vector<64x512xf32>
    %149 = arith.mulf %147, %148 : vector<64x512xf32>
    %150 = arith.addf %144, %149 : vector<64x512xf32>
    %cst_22 = arith.constant 0.000000e+00 : f32
    %151 = vector.broadcast %cst_22 : f32 to vector<64x512xf32>
    %152 = arith.maximumf %150, %151 : vector<64x512xf32>
    %cst_23 = arith.constant dense<0.000000e+00> : vector<512xf32>
    %153 = vector.multi_reduction <add>, %152, %cst_23 [0] : vector<64x512xf32> to vector<512xf32>
    %154 = vector.shape_cast %153 : vector<512xf32> to vector<1x512xf32>
    %155 = arith.addf %130, %154 : vector<1x512xf32>
    %c384 = arith.constant 384 : index
    %c0_24 = arith.constant 0 : index
    %156 = vector.load %arg0[%c384, %c0_24] : memref<512x3xf32, #tpu.memory_space<vmem>>, vector<64x3xf32>
    %157 = vector.extract_strided_slice %156 {offsets = [0, 0], sizes = [64, 1], strides = [1, 1]} : vector<64x3xf32> to vector<64x1xf32>
    %158 = vector.extract_strided_slice %0 {offsets = [0, 0], sizes = [1, 512], strides = [1, 1]} : vector<3x512xf32> to vector<1x512xf32>
    %159 = vector.broadcast %157 : vector<64x1xf32> to vector<64x512xf32>
    %160 = vector.broadcast %158 : vector<1x512xf32> to vector<64x512xf32>
    %161 = arith.mulf %159, %160 : vector<64x512xf32>
    %162 = vector.broadcast %1 : vector<1x512xf32> to vector<64x512xf32>
    %163 = arith.addf %162, %161 : vector<64x512xf32>
    %164 = vector.extract_strided_slice %156 {offsets = [0, 1], sizes = [64, 1], strides = [1, 1]} : vector<64x3xf32> to vector<64x1xf32>
    %165 = vector.extract_strided_slice %0 {offsets = [1, 0], sizes = [1, 512], strides = [1, 1]} : vector<3x512xf32> to vector<1x512xf32>
    %166 = vector.broadcast %164 : vector<64x1xf32> to vector<64x512xf32>
    %167 = vector.broadcast %165 : vector<1x512xf32> to vector<64x512xf32>
    %168 = arith.mulf %166, %167 : vector<64x512xf32>
    %169 = arith.addf %163, %168 : vector<64x512xf32>
    %170 = vector.extract_strided_slice %156 {offsets = [0, 2], sizes = [64, 1], strides = [1, 1]} : vector<64x3xf32> to vector<64x1xf32>
    %171 = vector.extract_strided_slice %0 {offsets = [2, 0], sizes = [1, 512], strides = [1, 1]} : vector<3x512xf32> to vector<1x512xf32>
    %172 = vector.broadcast %170 : vector<64x1xf32> to vector<64x512xf32>
    %173 = vector.broadcast %171 : vector<1x512xf32> to vector<64x512xf32>
    %174 = arith.mulf %172, %173 : vector<64x512xf32>
    %175 = arith.addf %169, %174 : vector<64x512xf32>
    %cst_25 = arith.constant 0.000000e+00 : f32
    %176 = vector.broadcast %cst_25 : f32 to vector<64x512xf32>
    %177 = arith.maximumf %175, %176 : vector<64x512xf32>
    %cst_26 = arith.constant dense<0.000000e+00> : vector<512xf32>
    %178 = vector.multi_reduction <add>, %177, %cst_26 [0] : vector<64x512xf32> to vector<512xf32>
    %179 = vector.shape_cast %178 : vector<512xf32> to vector<1x512xf32>
    %180 = arith.addf %155, %179 : vector<1x512xf32>
    %c448 = arith.constant 448 : index
    %c0_27 = arith.constant 0 : index
    %181 = vector.load %arg0[%c448, %c0_27] : memref<512x3xf32, #tpu.memory_space<vmem>>, vector<64x3xf32>
    %182 = vector.extract_strided_slice %181 {offsets = [0, 0], sizes = [64, 1], strides = [1, 1]} : vector<64x3xf32> to vector<64x1xf32>
    %183 = vector.extract_strided_slice %0 {offsets = [0, 0], sizes = [1, 512], strides = [1, 1]} : vector<3x512xf32> to vector<1x512xf32>
    %184 = vector.broadcast %182 : vector<64x1xf32> to vector<64x512xf32>
    %185 = vector.broadcast %183 : vector<1x512xf32> to vector<64x512xf32>
    %186 = arith.mulf %184, %185 : vector<64x512xf32>
    %187 = vector.broadcast %1 : vector<1x512xf32> to vector<64x512xf32>
    %188 = arith.addf %187, %186 : vector<64x512xf32>
    %189 = vector.extract_strided_slice %181 {offsets = [0, 1], sizes = [64, 1], strides = [1, 1]} : vector<64x3xf32> to vector<64x1xf32>
    %190 = vector.extract_strided_slice %0 {offsets = [1, 0], sizes = [1, 512], strides = [1, 1]} : vector<3x512xf32> to vector<1x512xf32>
    %191 = vector.broadcast %189 : vector<64x1xf32> to vector<64x512xf32>
    %192 = vector.broadcast %190 : vector<1x512xf32> to vector<64x512xf32>
    %193 = arith.mulf %191, %192 : vector<64x512xf32>
    %194 = arith.addf %188, %193 : vector<64x512xf32>
    %195 = vector.extract_strided_slice %181 {offsets = [0, 2], sizes = [64, 1], strides = [1, 1]} : vector<64x3xf32> to vector<64x1xf32>
    %196 = vector.extract_strided_slice %0 {offsets = [2, 0], sizes = [1, 512], strides = [1, 1]} : vector<3x512xf32> to vector<1x512xf32>
    %197 = vector.broadcast %195 : vector<64x1xf32> to vector<64x512xf32>
    %198 = vector.broadcast %196 : vector<1x512xf32> to vector<64x512xf32>
    %199 = arith.mulf %197, %198 : vector<64x512xf32>
    %200 = arith.addf %194, %199 : vector<64x512xf32>
    %cst_28 = arith.constant 0.000000e+00 : f32
    %201 = vector.broadcast %cst_28 : f32 to vector<64x512xf32>
    %202 = arith.maximumf %200, %201 : vector<64x512xf32>
    %cst_29 = arith.constant dense<0.000000e+00> : vector<512xf32>
    %203 = vector.multi_reduction <add>, %202, %cst_29 [0] : vector<64x512xf32> to vector<512xf32>
    %204 = vector.shape_cast %203 : vector<512xf32> to vector<1x512xf32>
    %205 = arith.addf %180, %204 : vector<1x512xf32>
    %cst_30 = arith.constant 3.906250e-03 : f32
    %206 = vector.broadcast %cst_30 : f32 to vector<1x512xf32>
    %207 = arith.mulf %205, %206 : vector<1x512xf32>
    %208 = tpu.concatenate %104, %207 in 0 : vector<1x512xf32>, vector<1x512xf32> -> vector<2x512xf32>
    %c0_31 = arith.constant 0 : index
    %c0_32 = arith.constant 0 : index
    %209 = vector.load %arg1[%c0_31, %c0_32] : memref<16x32xf32, #tpu.memory_space<vmem>>, vector<16x32xf32>
    %c0_33 = arith.constant 0 : index
    %c0_34 = arith.constant 0 : index
    %210 = vector.load %arg6[%c0_33, %c0_34] : memref<32x64xf32, #tpu.memory_space<vmem>>, vector<32x64xf32>
    %cst_35 = arith.constant dense<0.000000e+00> : vector<16x64xf32>
    %211 = tpu.matmul %209, %210, %cst_35 {dimension_numbers = #tpu.dot_dimension_numbers<[1], [0], [0], [1], [0, 0, 1, 1], [], []>} : vector<16x32xf32>, vector<32x64xf32>, vector<16x64xf32> -> vector<16x64xf32>
    %c0_36 = arith.constant 0 : index
    %c0_37 = arith.constant 0 : index
    %212 = vector.load %arg7[%c0_36, %c0_37] : memref<1x64xf32, #tpu.memory_space<vmem>>, vector<1x64xf32>
    %213 = vector.broadcast %212 : vector<1x64xf32> to vector<16x64xf32>
    %214 = arith.addf %211, %213 : vector<16x64xf32>
    %c0_38 = arith.constant 0 : index
    %c0_39 = arith.constant 0 : index
    %215 = vector.load %arg8[%c0_38, %c0_39] : memref<32x64xf32, #tpu.memory_space<vmem>>, vector<32x64xf32>
    %cst_40 = arith.constant dense<0.000000e+00> : vector<16x64xf32>
    %216 = tpu.matmul %209, %215, %cst_40 {dimension_numbers = #tpu.dot_dimension_numbers<[1], [0], [0], [1], [0, 0, 1, 1], [], []>} : vector<16x32xf32>, vector<32x64xf32>, vector<16x64xf32> -> vector<16x64xf32>
    %c0_41 = arith.constant 0 : index
    %c0_42 = arith.constant 0 : index
    %217 = vector.load %arg9[%c0_41, %c0_42] : memref<1x64xf32, #tpu.memory_space<vmem>>, vector<1x64xf32>
    %218 = vector.broadcast %217 : vector<1x64xf32> to vector<16x64xf32>
    %219 = arith.addf %216, %218 : vector<16x64xf32>
    %c0_43 = arith.constant 0 : index
    %c0_44 = arith.constant 0 : index
    %220 = vector.load %arg10[%c0_43, %c0_44] : memref<32x64xf32, #tpu.memory_space<vmem>>, vector<32x64xf32>
    %cst_45 = arith.constant dense<0.000000e+00> : vector<16x64xf32>
    %221 = tpu.matmul %209, %220, %cst_45 {dimension_numbers = #tpu.dot_dimension_numbers<[1], [0], [0], [1], [0, 0, 1, 1], [], []>} : vector<16x32xf32>, vector<32x64xf32>, vector<16x64xf32> -> vector<16x64xf32>
    %c0_46 = arith.constant 0 : index
    %c0_47 = arith.constant 0 : index
    %222 = vector.load %arg11[%c0_46, %c0_47] : memref<1x64xf32, #tpu.memory_space<vmem>>, vector<1x64xf32>
    %223 = vector.broadcast %222 : vector<1x64xf32> to vector<16x64xf32>
    %224 = arith.addf %221, %223 : vector<16x64xf32>
    %cst_48 = arith.constant dense<0.000000e+00> : vector<16x16xf32>
    %225 = tpu.matmul %214, %219, %cst_48 {dimension_numbers = #tpu.dot_dimension_numbers<[1], [1], [0], [0], [0, 0, 1, 0], [], []>} : vector<16x64xf32>, vector<16x64xf32>, vector<16x16xf32> -> vector<16x16xf32>
    %c0_49 = arith.constant 0 : index
    %c0_50 = arith.constant 0 : index
    %226 = vector.load %arg2[%c0_49, %c0_50] : memref<16x16xf32, #tpu.memory_space<vmem>>, vector<16x16xf32>
    %227 = arith.addf %225, %226 : vector<16x16xf32>
    %cst_51 = arith.constant dense<0xFF800000> : vector<16xf32>
    %228 = vector.multi_reduction <maximumf>, %227, %cst_51 [1] : vector<16x16xf32> to vector<16xf32>
    %229 = vector.shape_cast %228 : vector<16xf32> to vector<16x1xf32>
    %230 = vector.broadcast %229 : vector<16x1xf32> to vector<16x16xf32>
    %231 = arith.subf %227, %230 : vector<16x16xf32>
    %232 = math.exp %231 : vector<16x16xf32>
    %cst_52 = arith.constant dense<0.000000e+00> : vector<16xf32>
    %233 = vector.multi_reduction <add>, %232, %cst_52 [1] : vector<16x16xf32> to vector<16xf32>
    %234 = vector.shape_cast %233 : vector<16xf32> to vector<16x1xf32>
    %235 = tpu.reciprocal %234 {approx = true} : vector<16x1xf32> -> vector<16x1xf32>
    %236 = vector.broadcast %235 : vector<16x1xf32> to vector<16x16xf32>
    %237 = arith.mulf %232, %236 : vector<16x16xf32>
    %cst_53 = arith.constant dense<0.000000e+00> : vector<16x64xf32>
    %238 = tpu.matmul %237, %224, %cst_53 {dimension_numbers = #tpu.dot_dimension_numbers<[1], [0], [0], [1], [0, 0, 1, 1], [], []>} : vector<16x16xf32>, vector<16x64xf32>, vector<16x64xf32> -> vector<16x64xf32>
    %c0_54 = arith.constant 0 : index
    %c0_55 = arith.constant 0 : index
    %239 = vector.load %arg3[%c0_54, %c0_55] : memref<2x16xf32, #tpu.memory_space<vmem>>, vector<2x16xf32>
    %cst_56 = arith.constant dense<0.000000e+00> : vector<2x64xf32>
    %240 = tpu.matmul %239, %238, %cst_56 {dimension_numbers = #tpu.dot_dimension_numbers<[1], [0], [0], [1], [0, 0, 1, 1], [], []>} : vector<2x16xf32>, vector<16x64xf32>, vector<2x64xf32> -> vector<2x64xf32>
    %c0_57 = arith.constant 0 : index
    %c0_58 = arith.constant 0 : index
    %241 = vector.load %arg12[%c0_57, %c0_58] : memref<512x128xf32, #tpu.memory_space<vmem>>, vector<512x128xf32>
    %cst_59 = arith.constant dense<0.000000e+00> : vector<2x128xf32>
    %242 = tpu.matmul %208, %241, %cst_59 {dimension_numbers = #tpu.dot_dimension_numbers<[1], [0], [0], [1], [0, 0, 1, 1], [], []>} : vector<2x512xf32>, vector<512x128xf32>, vector<2x128xf32> -> vector<2x128xf32>
    %c0_60 = arith.constant 0 : index
    %c0_61 = arith.constant 0 : index
    %243 = vector.load %arg13[%c0_60, %c0_61] : memref<1x128xf32, #tpu.memory_space<vmem>>, vector<1x128xf32>
    %244 = vector.broadcast %243 : vector<1x128xf32> to vector<2x128xf32>
    %245 = arith.addf %242, %244 : vector<2x128xf32>
    %c0_62 = arith.constant 0 : index
    %c0_63 = arith.constant 0 : index
    %246 = vector.load %arg14[%c0_62, %c0_63] : memref<128x128xf32, #tpu.memory_space<vmem>>, vector<128x128xf32>
    %cst_64 = arith.constant dense<0.000000e+00> : vector<2x128xf32>
    %247 = tpu.matmul %245, %246, %cst_64 {dimension_numbers = #tpu.dot_dimension_numbers<[1], [0], [0], [1], [0, 0, 1, 1], [], []>} : vector<2x128xf32>, vector<128x128xf32>, vector<2x128xf32> -> vector<2x128xf32>
    %c0_65 = arith.constant 0 : index
    %c0_66 = arith.constant 0 : index
    %248 = vector.load %arg15[%c0_65, %c0_66] : memref<64x128xf32, #tpu.memory_space<vmem>>, vector<64x128xf32>
    %cst_67 = arith.constant dense<0.000000e+00> : vector<2x128xf32>
    %249 = tpu.matmul %240, %248, %cst_67 {dimension_numbers = #tpu.dot_dimension_numbers<[1], [0], [0], [1], [0, 0, 1, 1], [], []>} : vector<2x64xf32>, vector<64x128xf32>, vector<2x128xf32> -> vector<2x128xf32>
    %250 = arith.addf %247, %249 : vector<2x128xf32>
    %c0_68 = arith.constant 0 : index
    %c0_69 = arith.constant 0 : index
    %251 = vector.load %arg16[%c0_68, %c0_69] : memref<1x128xf32, #tpu.memory_space<vmem>>, vector<1x128xf32>
    %252 = vector.broadcast %251 : vector<1x128xf32> to vector<2x128xf32>
    %253 = arith.addf %250, %252 : vector<2x128xf32>
    %cst_70 = arith.constant 0.000000e+00 : f32
    %254 = vector.broadcast %cst_70 : f32 to vector<2x128xf32>
    %255 = arith.maximumf %253, %254 : vector<2x128xf32>
    %c0_71 = arith.constant 0 : index
    %c0_72 = arith.constant 0 : index
    %256 = vector.load %arg17[%c0_71, %c0_72] : memref<128x64xf32, #tpu.memory_space<vmem>>, vector<128x64xf32>
    %cst_73 = arith.constant dense<0.000000e+00> : vector<2x64xf32>
    %257 = tpu.matmul %255, %256, %cst_73 {dimension_numbers = #tpu.dot_dimension_numbers<[1], [0], [0], [1], [0, 0, 1, 1], [], []>} : vector<2x128xf32>, vector<128x64xf32>, vector<2x64xf32> -> vector<2x64xf32>
    %c0_74 = arith.constant 0 : index
    %c0_75 = arith.constant 0 : index
    %258 = vector.load %arg18[%c0_74, %c0_75] : memref<1x64xf32, #tpu.memory_space<vmem>>, vector<1x64xf32>
    %259 = vector.broadcast %258 : vector<1x64xf32> to vector<2x64xf32>
    %260 = arith.addf %257, %259 : vector<2x64xf32>
    %cst_76 = arith.constant 0.000000e+00 : f32
    %261 = vector.broadcast %cst_76 : f32 to vector<2x64xf32>
    %262 = arith.maximumf %260, %261 : vector<2x64xf32>
    %c0_77 = arith.constant 0 : index
    %c0_78 = arith.constant 0 : index
    %263 = vector.load %arg19[%c0_77, %c0_78] : memref<64x128xf32, #tpu.memory_space<vmem>>, vector<64x128xf32>
    %cst_79 = arith.constant dense<0.000000e+00> : vector<2x128xf32>
    %264 = tpu.matmul %262, %263, %cst_79 {dimension_numbers = #tpu.dot_dimension_numbers<[1], [0], [0], [1], [0, 0, 1, 1], [], []>} : vector<2x64xf32>, vector<64x128xf32>, vector<2x128xf32> -> vector<2x128xf32>
    %c0_80 = arith.constant 0 : index
    %c0_81 = arith.constant 0 : index
    %265 = vector.load %arg20[%c0_80, %c0_81] : memref<1x128xf32, #tpu.memory_space<vmem>>, vector<1x128xf32>
    %266 = vector.broadcast %265 : vector<1x128xf32> to vector<2x128xf32>
    %267 = arith.addf %264, %266 : vector<2x128xf32>
    %cst_82 = arith.constant 0.000000e+00 : f32
    %268 = vector.broadcast %cst_82 : f32 to vector<2x128xf32>
    %269 = arith.subf %268, %267 : vector<2x128xf32>
    %270 = math.exp %269 : vector<2x128xf32>
    %cst_83 = arith.constant 1.000000e+00 : f32
    %271 = vector.broadcast %cst_83 : f32 to vector<2x128xf32>
    %272 = arith.addf %271, %270 : vector<2x128xf32>
    %273 = tpu.reciprocal %272 {approx = true} : vector<2x128xf32> -> vector<2x128xf32>
    %cst_84 = arith.constant 0.000000e+00 : f32
    %cst_85 = arith.constant 1.000000e+00 : f32
    %274 = vector.broadcast %cst_84 : f32 to vector<2x128xf32>
    %275 = arith.maximumf %274, %273 : vector<2x128xf32>
    %276 = vector.broadcast %cst_85 : f32 to vector<2x128xf32>
    %277 = arith.minimumf %276, %275 : vector<2x128xf32>
    %c0_86 = arith.constant 0 : index
    %c0_87 = arith.constant 0 : index
    %278 = vector.load %arg21[%c0_86, %c0_87] : memref<2x128xf32, #tpu.memory_space<vmem>>, vector<2x128xf32>
    tpu.vector_store %arg21[%c0_86, %c0_87], %277 {strides = array<i32>} : memref<2x128xf32, #tpu.memory_space<vmem>>, vector<2x128xf32>,
    return
  }
}

</mosaic_0001>

<llo_original>
// kernel: tpu_custom_call.1
$region0: #{tpu_custom_call.1}
  #allocation0 [shape = 'u32[]', space=smem, size = 0x4, offset = 0x4, fixed_abs, tag = 'smem constant byte address 0x4 - core index']
  #allocation1 [shape = 'u32[144,128]{1,0:T(1,128)}', space=vmem, size = 0x12000, scoped, tag = 'internal scratch']
  %s0 = inlined_call_operand.vmem [shape: f32[512,3], index: 0, kind: input, shape index: {}]
  %s1 = inlined_call_operand.hbm [shape: f32[16,32], index: 1, kind: input, shape index: {}]
  %s2 = inlined_call_operand.hbm [shape: f32[16,16], index: 2, kind: input, shape index: {}]
  %s3 = inlined_call_operand.hbm [shape: f32[2,16], index: 3, kind: input, shape index: {}]
  %s4 = inlined_call_operand.hbm [shape: f32[3,512], index: 4, kind: input, shape index: {}]
  %s5 = inlined_call_operand.vmem [shape: f32[1,512], index: 5, kind: input, shape index: {}]
  %s6 = inlined_call_operand.vmem [shape: f32[32,64], index: 6, kind: input, shape index: {}]
  %s7 = inlined_call_operand.vmem [shape: f32[1,64], index: 7, kind: input, shape index: {}]
  %s8 = inlined_call_operand.hbm [shape: f32[32,64], index: 8, kind: input, shape index: {}]
  %s9 = inlined_call_operand.hbm [shape: f32[1,64], index: 9, kind: input, shape index: {}]
  %s10 = inlined_call_operand.hbm [shape: f32[32,64], index: 10, kind: input, shape index: {}]
  %s11 = inlined_call_operand.hbm [shape: f32[1,64], index: 11, kind: input, shape index: {}]
  %s12 = inlined_call_operand.vmem [shape: f32[512,128], index: 12, kind: input, shape index: {}]
  %s13 = inlined_call_operand.hbm [shape: f32[1,128], index: 13, kind: input, shape index: {}]
  %s14 = inlined_call_operand.vmem [shape: f32[128,128], index: 14, kind: input, shape index: {}]
  %s15 = inlined_call_operand.vmem [shape: f32[64,128], index: 15, kind: input, shape index: {}]
  %s16 = inlined_call_operand.vmem [shape: f32[1,128], index: 16, kind: input, shape index: {}]
  %s17 = inlined_call_operand.vmem [shape: f32[128,64], index: 17, kind: input, shape index: {}]
  %s18 = inlined_call_operand.vmem [shape: f32[1,64], index: 18, kind: input, shape index: {}]
  %s19 = inlined_call_operand.hbm [shape: f32[64,128], index: 19, kind: input, shape index: {}]
  %s20 = inlined_call_operand.vmem [shape: f32[1,128], index: 20, kind: input, shape index: {}]
  %s21 = inlined_call_operand.hbm [shape: f32[2,128], index: 21, kind: output, shape index: {}]
  %s22 = sld [smem:[#allocation0]]
  $region134: #{tpu_custom_call.1} parent=0
    _
  %s24 = ssub.s32 1, %s22
  %s25 = scalar_select 0, %s24, %s22
  $region1: #{tpu_custom_call.1} parent=0
    #allocation2 [shape = 'u8[8192]{0}', space=vmem, size = 0x2000, scoped, tag = 'input window, operand 1, single buffered']
    #allocation3 [shape = 's32[1]{0}', space=sflag, size = 0x4, scoped, tag = 'scoped memory for tpu_custom_call.1']
    #allocation4 [shape = 's32[1]{0}', space=sflag, size = 0x4, scoped, tag = 'scoped memory for tpu_custom_call.1']
    #allocation5 [shape = 'u8[8192]{0}', space=vmem, size = 0x2000, scoped, tag = 'input window, operand 2, single buffered']
    #allocation6 [shape = 's32[1]{0}', space=sflag, size = 0x4, scoped, tag = 'scoped memory for tpu_custom_call.1']
    #allocation7 [shape = 'u8[1024]{0}', space=vmem, size = 0x400, scoped, tag = 'input window, operand 3, single buffered']
    #allocation8 [shape = 'u8[8192]{0}', space=vmem, size = 0x2000, scoped, tag = 'input window, operand 4, single buffered']
    #allocation9 [shape = 's32[1]{0}', space=sflag, size = 0x4, scoped, tag = 'scoped memory for tpu_custom_call.1']
    #allocation10 [shape = 'u8[16384]{0}', space=vmem, size = 0x4000, scoped, tag = 'input window, operand 8, single buffered']
    #allocation11 [shape = 'u8[512]{0}', space=vmem, size = 0x400, scoped, tag = 'input window, operand 9, single buffered']
    #allocation12 [shape = 's32[1]{0}', space=sflag, size = 0x4, scoped, tag = 'scoped memory for tpu_custom_call.1']
    #allocation13 [shape = 'u8[16384]{0}', space=vmem, size = 0x4000, scoped, tag = 'input window, operand 10, single buffered']
    #allocation14 [shape = 'u8[512]{0}', space=vmem, size = 0x400, scoped, tag = 'input window, operand 11, single buffered']
    #allocation15 [shape = 's32[1]{0}', space=sflag, size = 0x4, scoped, tag = 'scoped memory for tpu_custom_call.1']
    #allocation16 [shape = 'u8[512]{0}', space=vmem, size = 0x400, scoped, tag = 'input window, operand 13, single buffered']
    #allocation17 [shape = 'u8[32768]{0}', space=vmem, size = 0x8000, scoped, tag = 'input window, operand 19, single buffered']
    #allocation18 [shape = 's32[1]{0}', space=sflag, size = 0x4, scoped, tag = 'scoped memory for tpu_custom_call.1']
    #allocation19 [shape = 'u8[1024]{0}', space=vmem, size = 0x400, scoped, tag = 'output window, operand 0, single buffered']
    %26 = vsyncpa [#allocation3], 0
    %27 = vsyncpa [#allocation6], 0
    %28 = vsyncpa [#allocation9], 0
    %29 = vsyncpa [#allocation12], 0
    %30 = vsyncpa [#allocation15], 0
    %31 = vsyncpa [#allocation18], 0
    %32 = vsyncpa [#allocation4], 0
    // Predicated region
    $region2: #{tpu_custom_call.1} parent=1 // pred_check
      _
    $region3: #{tpu_custom_call.1} parent=1 // pred_check_branch
      %34 = sbr.rel (0) target = $region5
    $region4: #{tpu_custom_call.1} parent=1 // pred_region
      _
    $region5: #{tpu_custom_call.1} parent=1 // pred_fallthru
      _
    // Predicated region
    $region6: #{tpu_custom_call.1} parent=1 // pred_check
      _
    $region7: #{tpu_custom_call.1} parent=1 // pred_check_branch
      %36 = sbr.rel (0) target = $region9
    $region8: #{tpu_custom_call.1} parent=1 // pred_region
      %s38 = ssub.s32 256, 256
      %39 = vsyncadd [#allocation3], %s38
      %s40 = sshll.u32 [#allocation2], 4
      %s41 = int_to_ptr.vmem [resolvable:$true] %s40
      %46 = dma.hbm_to_vmem [thread:$0]  %s1, 256, %s41, [#allocation3], 128, 128, 8
    $region9: #{tpu_custom_call.1} parent=1 // pred_fallthru
      _
    // Predicated region
    $region10: #{tpu_custom_call.1} parent=1 // pred_check
      _
    $region11: #{tpu_custom_call.1} parent=1 // pred_check_branch
      %48 = sbr.rel (0) target = $region13
    $region12: #{tpu_custom_call.1} parent=1 // pred_region
      %s50 = ssub.s32 256, 256
      %51 = vsyncadd [#allocation6], %s50
      %s52 = sshll.u32 [#allocation5], 4
      %s53 = int_to_ptr.vmem [resolvable:$true] %s52
      %58 = dma.hbm_to_vmem [thread:$0]  %s2, 256, %s53, [#allocation6], 128, 128, 8
    $region13: #{tpu_custom_call.1} parent=1 // pred_fallthru
      _
    // Predicated region
    $region14: #{tpu_custom_call.1} parent=1 // pred_check
      _
    $region15: #{tpu_custom_call.1} parent=1 // pred_check_branch
      %60 = sbr.rel (0) target = $region17
    $region16: #{tpu_custom_call.1} parent=1 // pred_region
      %s62 = ssub.s32 32, 32
      %63 = vsyncadd [#allocation6], %s62
      %s65 = sshll.u32 [#allocation7], 4
      %s66 = int_to_ptr.vmem [resolvable:$true] %s65
      %68 = dma.hbm_to_vmem [thread:$0]  %s3, 32, %s66, [#allocation6]
    $region17: #{tpu_custom_call.1} parent=1 // pred_fallthru
      _
    // Predicated region
    $region18: #{tpu_custom_call.1} parent=1 // pred_check
      _
    $region19: #{tpu_custom_call.1} parent=1 // pred_check_branch
      %70 = sbr.rel (0) target = $region21
    $region20: #{tpu_custom_call.1} parent=1 // pred_region
      %s72 = ssub.s32 256, 256
      %73 = vsyncadd [#allocation9], %s72
      %s75 = sshll.u32 [#allocation8], 4
      %s76 = int_to_ptr.vmem [resolvable:$true] %s75
      %78 = dma.hbm_to_vmem [thread:$0]  %s4, 256, %s76, [#allocation9]
    $region21: #{tpu_custom_call.1} parent=1 // pred_fallthru
      _
    // Predicated region
    $region22: #{tpu_custom_call.1} parent=1 // pred_check
      _
    $region23: #{tpu_custom_call.1} parent=1 // pred_check_branch
      %80 = sbr.rel (0) target = $region25
    $region24: #{tpu_custom_call.1} parent=1 // pred_region
      _
    $region25: #{tpu_custom_call.1} parent=1 // pred_fallthru
      _
    // Predicated region
    $region26: #{tpu_custom_call.1} parent=1 // pred_check
      _
    $region27: #{tpu_custom_call.1} parent=1 // pred_check_branch
      %82 = sbr.rel (0) target = $region29
    $region28: #{tpu_custom_call.1} parent=1 // pred_region
      _
    $region29: #{tpu_custom_call.1} parent=1 // pred_fallthru
      _
    // Predicated region
    $region30: #{tpu_custom_call.1} parent=1 // pred_check
      _
    $region31: #{tpu_custom_call.1} parent=1 // pred_check_branch
      %84 = sbr.rel (0) target = $region33
    $region32: #{tpu_custom_call.1} parent=1 // pred_region
      _
    $region33: #{tpu_custom_call.1} parent=1 // pred_fallthru
      _
    // Predicated region
    $region34: #{tpu_custom_call.1} parent=1 // pred_check
      _
    $region35: #{tpu_custom_call.1} parent=1 // pred_check_branch
      %86 = sbr.rel (0) target = $region37
    $region36: #{tpu_custom_call.1} parent=1 // pred_region
      %s88 = ssub.s32 512, 512
      %89 = vsyncadd [#allocation9], %s88
      %s90 = sshll.u32 [#allocation10], 4
      %s91 = int_to_ptr.vmem [resolvable:$true] %s90
      %96 = dma.hbm_to_vmem [thread:$0]  %s8, 512, %s91, [#allocation9], 128, 128, 8
    $region37: #{tpu_custom_call.1} parent=1 // pred_fallthru
      _
    // Predicated region
    $region38: #{tpu_custom_call.1} parent=1 // pred_check
      _
    $region39: #{tpu_custom_call.1} parent=1 // pred_check_branch
      %98 = sbr.rel (0) target = $region41
    $region40: #{tpu_custom_call.1} parent=1 // pred_region
      %s100 = ssub.s32 16, 16
      %101 = vsyncadd [#allocation12], %s100
      %s103 = sshll.u32 [#allocation11], 4
      %s104 = int_to_ptr.vmem [resolvable:$true] %s103
      %106 = dma.hbm_to_vmem [thread:$0]  %s9, 16, %s104, [#allocation12]
    $region41: #{tpu_custom_call.1} parent=1 // pred_fallthru
      _
    // Predicated region
    $region42: #{tpu_custom_call.1} parent=1 // pred_check
      _
    $region43: #{tpu_custom_call.1} parent=1 // pred_check_branch
      %108 = sbr.rel (0) target = $region45
    $region44: #{tpu_custom_call.1} parent=1 // pred_region
      %s110 = ssub.s32 512, 512
      %111 = vsyncadd [#allocation12], %s110
      %s112 = sshll.u32 [#allocation13], 4
      %s113 = int_to_ptr.vmem [resolvable:$true] %s112
      %118 = dma.hbm_to_vmem [thread:$0]  %s10, 512, %s113, [#allocation12], 128, 128, 8
    $region45: #{tpu_custom_call.1} parent=1 // pred_fallthru
      _
    // Predicated region
    $region46: #{tpu_custom_call.1} parent=1 // pred_check
      _
    $region47: #{tpu_custom_call.1} parent=1 // pred_check_branch
      %120 = sbr.rel (0) target = $region49
    $region48: #{tpu_custom_call.1} parent=1 // pred_region
      %s122 = ssub.s32 16, 16
      %123 = vsyncadd [#allocation15], %s122
      %s125 = sshll.u32 [#allocation14], 4
      %s126 = int_to_ptr.vmem [resolvable:$true] %s125
      %128 = dma.hbm_to_vmem [thread:$0]  %s11, 16, %s126, [#allocation15]
    $region49: #{tpu_custom_call.1} parent=1 // pred_fallthru
      _
    // Predicated region
    $region50: #{tpu_custom_call.1} parent=1 // pred_check
      _
    $region51: #{tpu_custom_call.1} parent=1 // pred_check_branch
      %130 = sbr.rel (0) target = $region53
    $region52: #{tpu_custom_call.1} parent=1 // pred_region
      _
    $region53: #{tpu_custom_call.1} parent=1 // pred_fallthru
      _
    // Predicated region
    $region54: #{tpu_custom_call.1} parent=1 // pred_check
      _
    $region55: #{tpu_custom_call.1} parent=1 // pred_check_branch
      %132 = sbr.rel (0) target = $region57
    $region56: #{tpu_custom_call.1} parent=1 // pred_region
      %s134 = ssub.s32 16, 16
      %135 = vsyncadd [#allocation15], %s134
      %s137 = sshll.u32 [#allocation16], 4
      %s138 = int_to_ptr.vmem [resolvable:$true] %s137
      %140 = dma.hbm_to_vmem [thread:$0]  %s13, 16, %s138, [#allocation15]
    $region57: #{tpu_custom_call.1} parent=1 // pred_fallthru
      _
    // Predicated region
    $region58: #{tpu_custom_call.1} parent=1 // pred_check
      _
    $region59: #{tpu_custom_call.1} parent=1 // pred_check_branch
      %142 = sbr.rel (0) target = $region61
    $region60: #{tpu_custom_call.1} parent=1 // pred_region
      _
    $region61: #{tpu_custom_call.1} parent=1 // pred_fallthru
      _
    // Predicated region
    $region62: #{tpu_custom_call.1} parent=1 // pred_check
      _
    $region63: #{tpu_custom_call.1} parent=1 // pred_check_branch
      %144 = sbr.rel (0) target = $region65
    $region64: #{tpu_custom_call.1} parent=1 // pred_region
      _
    $region65: #{tpu_custom_call.1} parent=1 // pred_fallthru
      _
    // Predicated region
    $region66: #{tpu_custom_call.1} parent=1 // pred_check
      _
    $region67: #{tpu_custom_call.1} parent=1 // pred_check_branch
      %146 = sbr.rel (0) target = $region69
    $region68: #{tpu_custom_call.1} parent=1 // pred_region
      _
    $region69: #{tpu_custom_call.1} parent=1 // pred_fallthru
      _
    // Predicated region
    $region70: #{tpu_custom_call.1} parent=1 // pred_check
      _
    $region71: #{tpu_custom_call.1} parent=1 // pred_check_branch
      %148 = sbr.rel (0) target = $region73
    $region72: #{tpu_custom_call.1} parent=1 // pred_region
      _
    $region73: #{tpu_custom_call.1} parent=1 // pred_fallthru
      _
    // Predicated region
    $region74: #{tpu_custom_call.1} parent=1 // pred_check
      _
    $region75: #{tpu_custom_call.1} parent=1 // pred_check_branch
      %150 = sbr.rel (0) target = $region77
    $region76: #{tpu_custom_call.1} parent=1 // pred_region
      _
    $region77: #{tpu_custom_call.1} parent=1 // pred_fallthru
      _
    // Predicated region
    $region78: #{tpu_custom_call.1} parent=1 // pred_check
      _
    $region79: #{tpu_custom_call.1} parent=1 // pred_check_branch
      %152 = sbr.rel (0) target = $region81
    $region80: #{tpu_custom_call.1} parent=1 // pred_region
      %s154 = ssub.s32 1024, 1024
      %155 = vsyncadd [#allocation18], %s154
      %s156 = sshll.u32 [#allocation17], 4
      %s157 = int_to_ptr.vmem [resolvable:$true] %s156
      %162 = dma.hbm_to_vmem [thread:$0]  %s19, 1024, %s157, [#allocation18], 128, 128, 8
    $region81: #{tpu_custom_call.1} parent=1 // pred_fallthru
      _
    // Predicated region
    $region82: #{tpu_custom_call.1} parent=1 // pred_check
      _
    $region83: #{tpu_custom_call.1} parent=1 // pred_check_branch
      %164 = sbr.rel (0) target = $region85
    $region84: #{tpu_custom_call.1} parent=1 // pred_region
      _
    $region85: #{tpu_custom_call.1} parent=1 // pred_fallthru
      _
    // Predicated region
    $region86: #{tpu_custom_call.1} parent=1 // pred_check
      _
    $region87: #{tpu_custom_call.1} parent=1 // pred_check_branch
      %166 = sbr.rel (0) target = $region89
    $region88: #{tpu_custom_call.1} parent=1 // pred_region
      %167 = dma.done [#allocation3], 256
    $region89: #{tpu_custom_call.1} parent=1 // pred_fallthru
      _
    // Predicated region
    $region90: #{tpu_custom_call.1} parent=1 // pred_check
      _
    $region91: #{tpu_custom_call.1} parent=1 // pred_check_branch
      %169 = sbr.rel (0) target = $region93
    $region92: #{tpu_custom_call.1} parent=1 // pred_region
      %170 = dma.done [#allocation6], 256
    $region93: #{tpu_custom_call.1} parent=1 // pred_fallthru
      _
    // Predicated region
    $region94: #{tpu_custom_call.1} parent=1 // pred_check
      _
    $region95: #{tpu_custom_call.1} parent=1 // pred_check_branch
      %172 = sbr.rel (0) target = $region97
    $region96: #{tpu_custom_call.1} parent=1 // pred_region
      %173 = dma.done [#allocation6], 32
    $region97: #{tpu_custom_call.1} parent=1 // pred_fallthru
      _
    // Predicated region
    $region98: #{tpu_custom_call.1} parent=1 // pred_check
      _
    $region99: #{tpu_custom_call.1} parent=1 // pred_check_branch
      %175 = sbr.rel (0) target = $region101
    $region100: #{tpu_custom_call.1} parent=1 // pred_region
      %176 = dma.done [#allocation9], 256
    $region101: #{tpu_custom_call.1} parent=1 // pred_fallthru
      _
    // Predicated region
    $region102: #{tpu_custom_call.1} parent=1 // pred_check
      _
    $region103: #{tpu_custom_call.1} parent=1 // pred_check_branch
      %178 = sbr.rel (0) target = $region105
    $region104: #{tpu_custom_call.1} parent=1 // pred_region
      %179 = dma.done [#allocation9], 512
    $region105: #{tpu_custom_call.1} parent=1 // pred_fallthru
      _
    // Predicated region
    $region106: #{tpu_custom_call.1} parent=1 // pred_check
      _
    $region107: #{tpu_custom_call.1} parent=1 // pred_check_branch
      %181 = sbr.rel (0) target = $region109
    $region108: #{tpu_custom_call.1} parent=1 // pred_region
      %182 = dma.done [#allocation12], 16
    $region109: #{tpu_custom_call.1} parent=1 // pred_fallthru
      _
    // Predicated region
    $region110: #{tpu_custom_call.1} parent=1 // pred_check
      _
    $region111: #{tpu_custom_call.1} parent=1 // pred_check_branch
      %184 = sbr.rel (0) target = $region113
    $region112: #{tpu_custom_call.1} parent=1 // pred_region
      %185 = dma.done [#allocation12], 512
    $region113: #{tpu_custom_call.1} parent=1 // pred_fallthru
      _
    // Predicated region
    $region114: #{tpu_custom_call.1} parent=1 // pred_check
      _
    $region115: #{tpu_custom_call.1} parent=1 // pred_check_branch
      %187 = sbr.rel (0) target = $region117
    $region116: #{tpu_custom_call.1} parent=1 // pred_region
      %188 = dma.done [#allocation15], 16
    $region117: #{tpu_custom_call.1} parent=1 // pred_fallthru
      _
    // Predicated region
    $region118: #{tpu_custom_call.1} parent=1 // pred_check
      _
    $region119: #{tpu_custom_call.1} parent=1 // pred_check_branch
      %190 = sbr.rel (0) target = $region121
    $region120: #{tpu_custom_call.1} parent=1 // pred_region
      %191 = dma.done [#allocation15], 16
    $region121: #{tpu_custom_call.1} parent=1 // pred_fallthru
      _
    // Predicated region
    $region122: #{tpu_custom_call.1} parent=1 // pred_check
      _
    $region123: #{tpu_custom_call.1} parent=1 // pred_check_branch
      %193 = sbr.rel (0) target = $region125
    $region124: #{tpu_custom_call.1} parent=1 // pred_region
      %194 = dma.done [#allocation18], 1024
    $region125: #{tpu_custom_call.1} parent=1 // pred_fallthru
      _
    %v195 = vld [vmem:[#allocation8] sm:$0x77]
    %v196 = vld [vmem:[#allocation8 + $0x8] sm:$0x77]
    %v197 = vld [vmem:[%s5] sm:$0xf]
    %v198 = vld [vmem:[%s0] sm:$0xff]
    %v199 = vld [vmem:[%s0 + $0x8] sm:$0xff]
    %v200 = vld [vmem:[%s0 + $0x10] sm:$0xff]
    %v201 = vld [vmem:[%s0 + $0x18] sm:$0xff]
    %v202 = vld [vmem:[%s0 + $0x20] sm:$0xff]
    %v203 = vld [vmem:[%s0 + $0x28] sm:$0xff]
    %v204 = vld [vmem:[%s0 + $0x30] sm:$0xff]
    %v205 = vld [vmem:[%s0 + $0x38] sm:$0xff]
    %207 = vset.pattern.permute.xlu0 0
    %208 = vperm.xlu0 %207, %v198
    %v209 = vpop.permute.xlu0 %208
    %212 = vset.pattern.permute.xlu0 0
    %213 = vperm.xlu0 %212, %v199
    %v214 = vpop.permute.xlu0 %213
    %217 = vset.pattern.permute.xlu0 0
    %218 = vperm.xlu0 %217, %v200
    %v219 = vpop.permute.xlu0 %218
    %222 = vset.pattern.permute.xlu0 0
    %223 = vperm.xlu0 %222, %v201
    %v224 = vpop.permute.xlu0 %223
    %227 = vset.pattern.permute.xlu0 0
    %228 = vperm.xlu0 %227, %v202
    %v229 = vpop.permute.xlu0 %228
    %232 = vset.pattern.permute.xlu0 0
    %233 = vperm.xlu0 %232, %v203
    %v234 = vpop.permute.xlu0 %233
    %237 = vset.pattern.permute.xlu0 0
    %238 = vperm.xlu0 %237, %v204
    %v239 = vpop.permute.xlu0 %238
    %242 = vset.pattern.permute.xlu0 0
    %243 = vperm.xlu0 %242, %v205
    %v244 = vpop.permute.xlu0 %243
    %v248 = vlaneseq
    %v249 = vshrl.u32 %v248, 7
    %v250 = vsub.s32 0, %v249
    %v251 = vrot.slane %v195, %v250
    %v252 = vlaneseq
    %v253 = vshrl.u32 %v252, 7
    %v254 = vsub.s32 4, %v253
    %v255 = vrot.slane %v195, %v254
    %v256 = vlaneseq
    %v257 = vshrl.u32 %v256, 7
    %v258 = vsub.s32 0, %v257
    %v259 = vrot.slane %v196, %v258
    %v260 = vlaneseq
    %v261 = vshrl.u32 %v260, 7
    %v262 = vsub.s32 4, %v261
    %v263 = vrot.slane %v196, %v262
    %v268 = vlaneseq
    %v269 = vshrl.u32 %v268, 7
    %v270 = vsub.s32 0, %v269
    %v271 = vrot.slane %v251, %v270
    %v272 = vlaneseq
    %v273 = vshrl.u32 %v272, 7
    %v274 = vsub.s32 0, %v273
    %v275 = vrot.slane %v255, %v274
    %v276 = vlaneseq
    %v277 = vshrl.u32 %v276, 7
    %v278 = vsub.s32 0, %v277
    %v279 = vrot.slane %v259, %v278
    %v280 = vlaneseq
    %v281 = vshrl.u32 %v280, 7
    %v282 = vsub.s32 0, %v281
    %v283 = vrot.slane %v263, %v282
    %v284 = vmul.f32 %v209, %v271
    %v285 = vmul.f32 %v209, %v275
    %v286 = vmul.f32 %v209, %v279
    %v287 = vmul.f32 %v209, %v283
    %v288 = vmul.f32 %v214, %v271
    %v289 = vmul.f32 %v214, %v275
    %v290 = vmul.f32 %v214, %v279
    %v291 = vmul.f32 %v214, %v283
    %v292 = vmul.f32 %v219, %v271
    %v293 = vmul.f32 %v219, %v275
    %v294 = vmul.f32 %v219, %v279
    %v295 = vmul.f32 %v219, %v283
    %v296 = vmul.f32 %v224, %v271
    %v297 = vmul.f32 %v224, %v275
    %v298 = vmul.f32 %v224, %v279
    %v299 = vmul.f32 %v224, %v283
    %v300 = vmul.f32 %v229, %v271
    %v301 = vmul.f32 %v229, %v275
    %v302 = vmul.f32 %v229, %v279
    %v303 = vmul.f32 %v229, %v283
    %v304 = vmul.f32 %v234, %v271
    %v305 = vmul.f32 %v234, %v275
    %v306 = vmul.f32 %v234, %v279
    %v307 = vmul.f32 %v234, %v283
    %v308 = vmul.f32 %v239, %v271
    %v309 = vmul.f32 %v239, %v275
    %v310 = vmul.f32 %v239, %v279
    %v311 = vmul.f32 %v239, %v283
    %v312 = vmul.f32 %v244, %v271
    %v313 = vmul.f32 %v244, %v275
    %v314 = vmul.f32 %v244, %v279
    %v315 = vmul.f32 %v244, %v283
    %v317 = vlaneseq
    %v318 = vshrl.u32 %v317, 7
    %v319 = vsub.s32 0, %v318
    %v320 = vrot.slane %v197, %v319
    %v321 = vlaneseq
    %v322 = vshrl.u32 %v321, 7
    %v323 = vsub.s32 1, %v322
    %v324 = vrot.slane %v197, %v323
    %v325 = vlaneseq
    %v326 = vshrl.u32 %v325, 7
    %v327 = vsub.s32 2, %v326
    %v328 = vrot.slane %v197, %v327
    %v329 = vlaneseq
    %v330 = vshrl.u32 %v329, 7
    %v331 = vsub.s32 3, %v330
    %v332 = vrot.slane %v197, %v331
    %v337 = vadd.f32 %v320, %v284
    %v338 = vadd.f32 %v324, %v285
    %v339 = vadd.f32 %v328, %v286
    %v340 = vadd.f32 %v332, %v287
    %v341 = vadd.f32 %v320, %v288
    %v342 = vadd.f32 %v324, %v289
    %v343 = vadd.f32 %v328, %v290
    %v344 = vadd.f32 %v332, %v291
    %v345 = vadd.f32 %v320, %v292
    %v346 = vadd.f32 %v324, %v293
    %v347 = vadd.f32 %v328, %v294
    %v348 = vadd.f32 %v332, %v295
    %v349 = vadd.f32 %v320, %v296
    %v350 = vadd.f32 %v324, %v297
    %v351 = vadd.f32 %v328, %v298
    %v352 = vadd.f32 %v332, %v299
    %v353 = vadd.f32 %v320, %v300
    %v354 = vadd.f32 %v324, %v301
    %v355 = vadd.f32 %v328, %v302
    %v356 = vadd.f32 %v332, %v303
    %v357 = vadd.f32 %v320, %v304
    %v358 = vadd.f32 %v324, %v305
    %v359 = vadd.f32 %v328, %v306
    %v360 = vadd.f32 %v332, %v307
    %v361 = vadd.f32 %v320, %v308
    %v362 = vadd.f32 %v324, %v309
    %v363 = vadd.f32 %v328, %v310
    %v364 = vadd.f32 %v332, %v311
    %v365 = vadd.f32 %v320, %v312
    %v366 = vadd.f32 %v324, %v313
    %v367 = vadd.f32 %v328, %v314
    %v368 = vadd.f32 %v332, %v315
    %369 = vset.pattern.permute.xlu0 1
    %370 = vperm.xlu0 %369, %v198
    %v371 = vpop.permute.xlu0 %370
    %373 = vset.pattern.permute.xlu0 1
    %374 = vperm.xlu0 %373, %v199
    %v375 = vpop.permute.xlu0 %374
    %377 = vset.pattern.permute.xlu0 1
    %378 = vperm.xlu0 %377, %v200
    %v379 = vpop.permute.xlu0 %378
    %381 = vset.pattern.permute.xlu0 1
    %382 = vperm.xlu0 %381, %v201
    %v383 = vpop.permute.xlu0 %382
    %385 = vset.pattern.permute.xlu0 1
    %386 = vperm.xlu0 %385, %v202
    %v387 = vpop.permute.xlu0 %386
    %389 = vset.pattern.permute.xlu0 1
    %390 = vperm.xlu0 %389, %v203
    %v391 = vpop.permute.xlu0 %390
    %393 = vset.pattern.permute.xlu0 1
    %394 = vperm.xlu0 %393, %v204
    %v395 = vpop.permute.xlu0 %394
    %397 = vset.pattern.permute.xlu0 1
    %398 = vperm.xlu0 %397, %v205
    %v399 = vpop.permute.xlu0 %398
    %v401 = vlaneseq
    %v402 = vshrl.u32 %v401, 7
    %v403 = vsub.s32 1, %v402
    %v404 = vrot.slane %v195, %v403
    %v405 = vlaneseq
    %v406 = vshrl.u32 %v405, 7
    %v407 = vsub.s32 5, %v406
    %v408 = vrot.slane %v195, %v407
    %v409 = vlaneseq
    %v410 = vshrl.u32 %v409, 7
    %v411 = vsub.s32 1, %v410
    %v412 = vrot.slane %v196, %v411
    %v413 = vlaneseq
    %v414 = vshrl.u32 %v413, 7
    %v415 = vsub.s32 5, %v414
    %v416 = vrot.slane %v196, %v415
    %v421 = vlaneseq
    %v422 = vshrl.u32 %v421, 7
    %v423 = vsub.s32 1, %v422
    %v424 = vrot.slane %v404, %v423
    %v425 = vlaneseq
    %v426 = vshrl.u32 %v425, 7
    %v427 = vsub.s32 1, %v426
    %v428 = vrot.slane %v408, %v427
    %v429 = vlaneseq
    %v430 = vshrl.u32 %v429, 7
    %v431 = vsub.s32 1, %v430
    %v432 = vrot.slane %v412, %v431
    %v433 = vlaneseq
    %v434 = vshrl.u32 %v433, 7
    %v435 = vsub.s32 1, %v434
    %v436 = vrot.slane %v416, %v435
    %v437 = vmul.f32 %v371, %v424
    %v438 = vmul.f32 %v371, %v428
    %v439 = vmul.f32 %v371, %v432
    %v440 = vmul.f32 %v371, %v436
    %v441 = vmul.f32 %v375, %v424
    %v442 = vmul.f32 %v375, %v428
    %v443 = vmul.f32 %v375, %v432
    %v444 = vmul.f32 %v375, %v436
    %v445 = vmul.f32 %v379, %v424
    %v446 = vmul.f32 %v379, %v428
    %v447 = vmul.f32 %v379, %v432
    %v448 = vmul.f32 %v379, %v436
    %v449 = vmul.f32 %v383, %v424
    %v450 = vmul.f32 %v383, %v428
    %v451 = vmul.f32 %v383, %v432
    %v452 = vmul.f32 %v383, %v436
    %v453 = vmul.f32 %v387, %v424
    %v454 = vmul.f32 %v387, %v428
    %v455 = vmul.f32 %v387, %v432
    %v456 = vmul.f32 %v387, %v436
    %v457 = vmul.f32 %v391, %v424
    %v458 = vmul.f32 %v391, %v428
    %v459 = vmul.f32 %v391, %v432
    %v460 = vmul.f32 %v391, %v436
    %v461 = vmul.f32 %v395, %v424
    %v462 = vmul.f32 %v395, %v428
    %v463 = vmul.f32 %v395, %v432
    %v464 = vmul.f32 %v395, %v436
    %v465 = vmul.f32 %v399, %v424
    %v466 = vmul.f32 %v399, %v428
    %v467 = vmul.f32 %v399, %v432
    %v468 = vmul.f32 %v399, %v436
    %v469 = vadd.f32 %v337, %v437
    %v470 = vadd.f32 %v338, %v438
    %v471 = vadd.f32 %v339, %v439
    %v472 = vadd.f32 %v340, %v440
    %v473 = vadd.f32 %v341, %v441
    %v474 = vadd.f32 %v342, %v442
    %v475 = vadd.f32 %v343, %v443
    %v476 = vadd.f32 %v344, %v444
    %v477 = vadd.f32 %v345, %v445
    %v478 = vadd.f32 %v346, %v446
    %v479 = vadd.f32 %v347, %v447
    %v480 = vadd.f32 %v348, %v448
    %v481 = vadd.f32 %v349, %v449
    %v482 = vadd.f32 %v350, %v450
    %v483 = vadd.f32 %v351, %v451
    %v484 = vadd.f32 %v352, %v452
    %v485 = vadd.f32 %v353, %v453
    %v486 = vadd.f32 %v354, %v454
    %v487 = vadd.f32 %v355, %v455
    %v488 = vadd.f32 %v356, %v456
    %v489 = vadd.f32 %v357, %v457
    %v490 = vadd.f32 %v358, %v458
    %v491 = vadd.f32 %v359, %v459
    %v492 = vadd.f32 %v360, %v460
    %v493 = vadd.f32 %v361, %v461
    %v494 = vadd.f32 %v362, %v462
    %v495 = vadd.f32 %v363, %v463
    %v496 = vadd.f32 %v364, %v464
    %v497 = vadd.f32 %v365, %v465
    %v498 = vadd.f32 %v366, %v466
    %v499 = vadd.f32 %v367, %v467
    %v500 = vadd.f32 %v368, %v468
    %501 = vset.pattern.permute.xlu0 2
    %502 = vperm.xlu0 %501, %v198
    %v503 = vpop.permute.xlu0 %502
    %505 = vset.pattern.permute.xlu0 2
    %506 = vperm.xlu0 %505, %v199
    %v507 = vpop.permute.xlu0 %506
    %509 = vset.pattern.permute.xlu0 2
    %510 = vperm.xlu0 %509, %v200
    %v511 = vpop.permute.xlu0 %510
    %513 = vset.pattern.permute.xlu0 2
    %514 = vperm.xlu0 %513, %v201
    %v515 = vpop.permute.xlu0 %514
    %517 = vset.pattern.permute.xlu0 2
    %518 = vperm.xlu0 %517, %v202
    %v519 = vpop.permute.xlu0 %518
    %521 = vset.pattern.permute.xlu0 2
    %522 = vperm.xlu0 %521, %v203
    %v523 = vpop.permute.xlu0 %522
    %525 = vset.pattern.permute.xlu0 2
    %526 = vperm.xlu0 %525, %v204
    %v527 = vpop.permute.xlu0 %526
    %529 = vset.pattern.permute.xlu0 2
    %530 = vperm.xlu0 %529, %v205
    %v531 = vpop.permute.xlu0 %530
    %v533 = vlaneseq
    %v534 = vshrl.u32 %v533, 7
    %v535 = vsub.s32 2, %v534
    %v536 = vrot.slane %v195, %v535
    %v537 = vlaneseq
    %v538 = vshrl.u32 %v537, 7
    %v539 = vsub.s32 6, %v538
    %v540 = vrot.slane %v195, %v539
    %v541 = vlaneseq
    %v542 = vshrl.u32 %v541, 7
    %v543 = vsub.s32 2, %v542
    %v544 = vrot.slane %v196, %v543
    %v545 = vlaneseq
    %v546 = vshrl.u32 %v545, 7
    %v547 = vsub.s32 6, %v546
    %v548 = vrot.slane %v196, %v547
    %v553 = vlaneseq
    %v554 = vshrl.u32 %v553, 7
    %v555 = vsub.s32 2, %v554
    %v556 = vrot.slane %v536, %v555
    %v557 = vlaneseq
    %v558 = vshrl.u32 %v557, 7
    %v559 = vsub.s32 2, %v558
    %v560 = vrot.slane %v540, %v559
    %v561 = vlaneseq
    %v562 = vshrl.u32 %v561, 7
    %v563 = vsub.s32 2, %v562
    %v564 = vrot.slane %v544, %v563
    %v565 = vlaneseq
    %v566 = vshrl.u32 %v565, 7
    %v567 = vsub.s32 2, %v566
    %v568 = vrot.slane %v548, %v567
    %v569 = vmul.f32 %v503, %v556
    %v570 = vmul.f32 %v503, %v560
    %v571 = vmul.f32 %v503, %v564
    %v572 = vmul.f32 %v503, %v568
    %v573 = vmul.f32 %v507, %v556
    %v574 = vmul.f32 %v507, %v560
    %v575 = vmul.f32 %v507, %v564
    %v576 = vmul.f32 %v507, %v568
    %v577 = vmul.f32 %v511, %v556
    %v578 = vmul.f32 %v511, %v560
    %v579 = vmul.f32 %v511, %v564
    %v580 = vmul.f32 %v511, %v568
    %v581 = vmul.f32 %v515, %v556
    %v582 = vmul.f32 %v515, %v560
    %v583 = vmul.f32 %v515, %v564
    %v584 = vmul.f32 %v515, %v568
    %v585 = vmul.f32 %v519, %v556
    %v586 = vmul.f32 %v519, %v560
    %v587 = vmul.f32 %v519, %v564
    %v588 = vmul.f32 %v519, %v568
    %v589 = vmul.f32 %v523, %v556
    %v590 = vmul.f32 %v523, %v560
    %v591 = vmul.f32 %v523, %v564
    %v592 = vmul.f32 %v523, %v568
    %v593 = vmul.f32 %v527, %v556
    %v594 = vmul.f32 %v527, %v560
    %v595 = vmul.f32 %v527, %v564
    %v596 = vmul.f32 %v527, %v568
    %v597 = vmul.f32 %v531, %v556
    %v598 = vmul.f32 %v531, %v560
    %v599 = vmul.f32 %v531, %v564
    %v600 = vmul.f32 %v531, %v568
    %v601 = vadd.f32 %v469, %v569
    %v602 = vadd.f32 %v470, %v570
    %v603 = vadd.f32 %v471, %v571
    %v604 = vadd.f32 %v472, %v572
    %v605 = vadd.f32 %v473, %v573
    %v606 = vadd.f32 %v474, %v574
    %v607 = vadd.f32 %v475, %v575
    %v608 = vadd.f32 %v476, %v576
    %v609 = vadd.f32 %v477, %v577
    %v610 = vadd.f32 %v478, %v578
    %v611 = vadd.f32 %v479, %v579
    %v612 = vadd.f32 %v480, %v580
    %v613 = vadd.f32 %v481, %v581
    %v614 = vadd.f32 %v482, %v582
    %v615 = vadd.f32 %v483, %v583
    %v616 = vadd.f32 %v484, %v584
    %v617 = vadd.f32 %v485, %v585
    %v618 = vadd.f32 %v486, %v586
    %v619 = vadd.f32 %v487, %v587
    %v620 = vadd.f32 %v488, %v588
    %v621 = vadd.f32 %v489, %v589
    %v622 = vadd.f32 %v490, %v590
    %v623 = vadd.f32 %v491, %v591
    %v624 = vadd.f32 %v492, %v592
    %v625 = vadd.f32 %v493, %v593
    %v626 = vadd.f32 %v494, %v594
    %v627 = vadd.f32 %v495, %v595
    %v628 = vadd.f32 %v496, %v596
    %v629 = vadd.f32 %v497, %v597
    %v630 = vadd.f32 %v498, %v598
    %v631 = vadd.f32 %v499, %v599
    %v632 = vadd.f32 %v500, %v600
    %v633 = vmax.f32 %v601, 0.0
    %v634 = vmax.f32 %v602, 0.0
    %v635 = vmax.f32 %v603, 0.0
    %v636 = vmax.f32 %v604, 0.0
    %v637 = vmax.f32 %v605, 0.0
    %v638 = vmax.f32 %v606, 0.0
    %v639 = vmax.f32 %v607, 0.0
    %v640 = vmax.f32 %v608, 0.0
    %v641 = vmax.f32 %v609, 0.0
    %v642 = vmax.f32 %v610, 0.0
    %v643 = vmax.f32 %v611, 0.0
    %v644 = vmax.f32 %v612, 0.0
    %v645 = vmax.f32 %v613, 0.0
    %v646 = vmax.f32 %v614, 0.0
    %v647 = vmax.f32 %v615, 0.0
    %v648 = vmax.f32 %v616, 0.0
    %v649 = vmax.f32 %v617, 0.0
    %v650 = vmax.f32 %v618, 0.0
    %v651 = vmax.f32 %v619, 0.0
    %v652 = vmax.f32 %v620, 0.0
    %v653 = vmax.f32 %v621, 0.0
    %v654 = vmax.f32 %v622, 0.0
    %v655 = vmax.f32 %v623, 0.0
    %v656 = vmax.f32 %v624, 0.0
    %v657 = vmax.f32 %v625, 0.0
    %v658 = vmax.f32 %v626, 0.0
    %v659 = vmax.f32 %v627, 0.0
    %v660 = vmax.f32 %v628, 0.0
    %v661 = vmax.f32 %v629, 0.0
    %v662 = vmax.f32 %v630, 0.0
    %v663 = vmax.f32 %v631, 0.0
    %v664 = vmax.f32 %v632, 0.0
    %v665 = vadd.f32 %v633, %v637
    %v666 = vadd.f32 %v665, %v641
    %v667 = vadd.f32 %v666, %v645
    %v668 = vadd.f32 %v667, %v649
    %v669 = vadd.f32 %v668, %v653
    %v670 = vadd.f32 %v669, %v657
    %v671 = vadd.f32 %v670, %v661
    %v672 = vrot.slane %v671, 4
    %v673 = vadd.f32 %v671, %v672
    %v674 = vrot.slane %v673, 2
    %v675 = vadd.f32 %v673, %v674
    %v676 = vrot.slane %v675, 1
    %v677 = vadd.f32 %v675, %v676
    %v678 = vadd.f32 %v634, %v638
    %v679 = vadd.f32 %v678, %v642
    %v680 = vadd.f32 %v679, %v646
    %v681 = vadd.f32 %v680, %v650
    %v682 = vadd.f32 %v681, %v654
    %v683 = vadd.f32 %v682, %v658
    %v684 = vadd.f32 %v683, %v662
    %v685 = vrot.slane %v684, 4
    %v686 = vadd.f32 %v684, %v685
    %v687 = vrot.slane %v686, 2
    %v688 = vadd.f32 %v686, %v687
    %v689 = vrot.slane %v688, 1
    %v690 = vadd.f32 %v688, %v689
    %v691 = vadd.f32 %v635, %v639
    %v692 = vadd.f32 %v691, %v643
    %v693 = vadd.f32 %v692, %v647
    %v694 = vadd.f32 %v693, %v651
    %v695 = vadd.f32 %v694, %v655
    %v696 = vadd.f32 %v695, %v659
    %v697 = vadd.f32 %v696, %v663
    %v698 = vrot.slane %v697, 4
    %v699 = vadd.f32 %v697, %v698
    %v700 = vrot.slane %v699, 2
    %v701 = vadd.f32 %v699, %v700
    %v702 = vrot.slane %v701, 1
    %v703 = vadd.f32 %v701, %v702
    %v704 = vadd.f32 %v636, %v640
    %v705 = vadd.f32 %v704, %v644
    %v706 = vadd.f32 %v705, %v648
    %v707 = vadd.f32 %v706, %v652
    %v708 = vadd.f32 %v707, %v656
    %v709 = vadd.f32 %v708, %v660
    %v710 = vadd.f32 %v709, %v664
    %v711 = vrot.slane %v710, 4
    %v712 = vadd.f32 %v710, %v711
    %v713 = vrot.slane %v712, 2
    %v714 = vadd.f32 %v712, %v713
    %v715 = vrot.slane %v714, 1
    %v716 = vadd.f32 %v714, %v715
    %v717 = vadd.f32 %v677, 0.0
    %v718 = vadd.f32 %v690, 0.0
    %v719 = vadd.f32 %v703, 0.0
    %v720 = vadd.f32 %v716, 0.0
    %v721 = vld [vmem:[%s0 + $0x40] sm:$0xff]
    %v722 = vld [vmem:[%s0 + $0x48] sm:$0xff]
    %v723 = vld [vmem:[%s0 + $0x50] sm:$0xff]
    %v724 = vld [vmem:[%s0 + $0x58] sm:$0xff]
    %v725 = vld [vmem:[%s0 + $0x60] sm:$0xff]
    %v726 = vld [vmem:[%s0 + $0x68] sm:$0xff]
    %v727 = vld [vmem:[%s0 + $0x70] sm:$0xff]
    %v728 = vld [vmem:[%s0 + $0x78] sm:$0xff]
    %730 = vset.pattern.permute.xlu0 0
    %731 = vperm.xlu0 %730, %v721
    %v732 = vpop.permute.xlu0 %731
    %735 = vset.pattern.permute.xlu0 0
    %736 = vperm.xlu0 %735, %v722
    %v737 = vpop.permute.xlu0 %736
    %740 = vset.pattern.permute.xlu0 0
    %741 = vperm.xlu0 %740, %v723
    %v742 = vpop.permute.xlu0 %741
    %745 = vset.pattern.permute.xlu0 0
    %746 = vperm.xlu0 %745, %v724
    %v747 = vpop.permute.xlu0 %746
    %750 = vset.pattern.permute.xlu0 0
    %751 = vperm.xlu0 %750, %v725
    %v752 = vpop.permute.xlu0 %751
    %755 = vset.pattern.permute.xlu0 0
    %756 = vperm.xlu0 %755, %v726
    %v757 = vpop.permute.xlu0 %756
    %760 = vset.pattern.permute.xlu0 0
    %761 = vperm.xlu0 %760, %v727
    %v762 = vpop.permute.xlu0 %761
    %765 = vset.pattern.permute.xlu0 0
    %766 = vperm.xlu0 %765, %v728
    %v767 = vpop.permute.xlu0 %766
    %v769 = vmul.f32 %v732, %v271
    %v770 = vmul.f32 %v732, %v275
    %v771 = vmul.f32 %v732, %v279
    %v772 = vmul.f32 %v732, %v283
    %v773 = vmul.f32 %v737, %v271
    %v774 = vmul.f32 %v737, %v275
    %v775 = vmul.f32 %v737, %v279
    %v776 = vmul.f32 %v737, %v283
    %v777 = vmul.f32 %v742, %v271
    %v778 = vmul.f32 %v742, %v275
    %v779 = vmul.f32 %v742, %v279
    %v780 = vmul.f32 %v742, %v283
    %v781 = vmul.f32 %v747, %v271
    %v782 = vmul.f32 %v747, %v275
    %v783 = vmul.f32 %v747, %v279
    %v784 = vmul.f32 %v747, %v283
    %v785 = vmul.f32 %v752, %v271
    %v786 = vmul.f32 %v752, %v275
    %v787 = vmul.f32 %v752, %v279
    %v788 = vmul.f32 %v752, %v283
    %v789 = vmul.f32 %v757, %v271
    %v790 = vmul.f32 %v757, %v275
    %v791 = vmul.f32 %v757, %v279
    %v792 = vmul.f32 %v757, %v283
    %v793 = vmul.f32 %v762, %v271
    %v794 = vmul.f32 %v762, %v275
    %v795 = vmul.f32 %v762, %v279
    %v796 = vmul.f32 %v762, %v283
    %v797 = vmul.f32 %v767, %v271
    %v798 = vmul.f32 %v767, %v275
    %v799 = vmul.f32 %v767, %v279
    %v800 = vmul.f32 %v767, %v283
    %v801 = vadd.f32 %v320, %v769
    %v802 = vadd.f32 %v324, %v770
    %v803 = vadd.f32 %v328, %v771
    %v804 = vadd.f32 %v332, %v772
    %v805 = vadd.f32 %v320, %v773
    %v806 = vadd.f32 %v324, %v774
    %v807 = vadd.f32 %v328, %v775
    %v808 = vadd.f32 %v332, %v776
    %v809 = vadd.f32 %v320, %v777
    %v810 = vadd.f32 %v324, %v778
    %v811 = vadd.f32 %v328, %v779
    %v812 = vadd.f32 %v332, %v780
    %v813 = vadd.f32 %v320, %v781
    %v814 = vadd.f32 %v324, %v782
    %v815 = vadd.f32 %v328, %v783
    %v816 = vadd.f32 %v332, %v784
    %v817 = vadd.f32 %v320, %v785
    %v818 = vadd.f32 %v324, %v786
    %v819 = vadd.f32 %v328, %v787
    %v820 = vadd.f32 %v332, %v788
    %v821 = vadd.f32 %v320, %v789
    %v822 = vadd.f32 %v324, %v790
    %v823 = vadd.f32 %v328, %v791
    %v824 = vadd.f32 %v332, %v792
    %v825 = vadd.f32 %v320, %v793
    %v826 = vadd.f32 %v324, %v794
    %v827 = vadd.f32 %v328, %v795
    %v828 = vadd.f32 %v332, %v796
    %v829 = vadd.f32 %v320, %v797
    %v830 = vadd.f32 %v324, %v798
    %v831 = vadd.f32 %v328, %v799
    %v832 = vadd.f32 %v332, %v800
    %833 = vset.pattern.permute.xlu0 1
    %834 = vperm.xlu0 %833, %v721
    %v835 = vpop.permute.xlu0 %834
    %837 = vset.pattern.permute.xlu0 1
    %838 = vperm.xlu0 %837, %v722
    %v839 = vpop.permute.xlu0 %838
    %841 = vset.pattern.permute.xlu0 1
    %842 = vperm.xlu0 %841, %v723
    %v843 = vpop.permute.xlu0 %842
    %845 = vset.pattern.permute.xlu0 1
    %846 = vperm.xlu0 %845, %v724
    %v847 = vpop.permute.xlu0 %846
    %849 = vset.pattern.permute.xlu0 1
    %850 = vperm.xlu0 %849, %v725
    %v851 = vpop.permute.xlu0 %850
    %853 = vset.pattern.permute.xlu0 1
    %854 = vperm.xlu0 %853, %v726
    %v855 = vpop.permute.xlu0 %854
    %857 = vset.pattern.permute.xlu0 1
    %858 = vperm.xlu0 %857, %v727
    %v859 = vpop.permute.xlu0 %858
    %861 = vset.pattern.permute.xlu0 1
    %862 = vperm.xlu0 %861, %v728
    %v863 = vpop.permute.xlu0 %862
    %v865 = vmul.f32 %v835, %v424
    %v866 = vmul.f32 %v835, %v428
    %v867 = vmul.f32 %v835, %v432
    %v868 = vmul.f32 %v835, %v436
    %v869 = vmul.f32 %v839, %v424
    %v870 = vmul.f32 %v839, %v428
    %v871 = vmul.f32 %v839, %v432
    %v872 = vmul.f32 %v839, %v436
    %v873 = vmul.f32 %v843, %v424
    %v874 = vmul.f32 %v843, %v428
    %v875 = vmul.f32 %v843, %v432
    %v876 = vmul.f32 %v843, %v436
    %v877 = vmul.f32 %v847, %v424
    %v878 = vmul.f32 %v847, %v428
    %v879 = vmul.f32 %v847, %v432
    %v880 = vmul.f32 %v847, %v436
    %v881 = vmul.f32 %v851, %v424
    %v882 = vmul.f32 %v851, %v428
    %v883 = vmul.f32 %v851, %v432
    %v884 = vmul.f32 %v851, %v436
    %v885 = vmul.f32 %v855, %v424
    %v886 = vmul.f32 %v855, %v428
    %v887 = vmul.f32 %v855, %v432
    %v888 = vmul.f32 %v855, %v436
    %v889 = vmul.f32 %v859, %v424
    %v890 = vmul.f32 %v859, %v428
    %v891 = vmul.f32 %v859, %v432
    %v892 = vmul.f32 %v859, %v436
    %v893 = vmul.f32 %v863, %v424
    %v894 = vmul.f32 %v863, %v428
    %v895 = vmul.f32 %v863, %v432
    %v896 = vmul.f32 %v863, %v436
    %v897 = vadd.f32 %v801, %v865
    %v898 = vadd.f32 %v802, %v866
    %v899 = vadd.f32 %v803, %v867
    %v900 = vadd.f32 %v804, %v868
    %v901 = vadd.f32 %v805, %v869
    %v902 = vadd.f32 %v806, %v870
    %v903 = vadd.f32 %v807, %v871
    %v904 = vadd.f32 %v808, %v872
    %v905 = vadd.f32 %v809, %v873
    %v906 = vadd.f32 %v810, %v874
    %v907 = vadd.f32 %v811, %v875
    %v908 = vadd.f32 %v812, %v876
    %v909 = vadd.f32 %v813, %v877
    %v910 = vadd.f32 %v814, %v878
    %v911 = vadd.f32 %v815, %v879
    %v912 = vadd.f32 %v816, %v880
    %v913 = vadd.f32 %v817, %v881
    %v914 = vadd.f32 %v818, %v882
    %v915 = vadd.f32 %v819, %v883
    %v916 = vadd.f32 %v820, %v884
    %v917 = vadd.f32 %v821, %v885
    %v918 = vadd.f32 %v822, %v886
    %v919 = vadd.f32 %v823, %v887
    %v920 = vadd.f32 %v824, %v888
    %v921 = vadd.f32 %v825, %v889
    %v922 = vadd.f32 %v826, %v890
    %v923 = vadd.f32 %v827, %v891
    %v924 = vadd.f32 %v828, %v892
    %v925 = vadd.f32 %v829, %v893
    %v926 = vadd.f32 %v830, %v894
    %v927 = vadd.f32 %v831, %v895
    %v928 = vadd.f32 %v832, %v896
    %929 = vset.pattern.permute.xlu0 2
    %930 = vperm.xlu0 %929, %v721
    %v931 = vpop.permute.xlu0 %930
    %933 = vset.pattern.permute.xlu0 2
    %934 = vperm.xlu0 %933, %v722
    %v935 = vpop.permute.xlu0 %934
    %937 = vset.pattern.permute.xlu0 2
    %938 = vperm.xlu0 %937, %v723
    %v939 = vpop.permute.xlu0 %938
    %941 = vset.pattern.permute.xlu0 2
    %942 = vperm.xlu0 %941, %v724
    %v943 = vpop.permute.xlu0 %942
    %945 = vset.pattern.permute.xlu0 2
    %946 = vperm.xlu0 %945, %v725
    %v947 = vpop.permute.xlu0 %946
    %949 = vset.pattern.permute.xlu0 2
    %950 = vperm.xlu0 %949, %v726
    %v951 = vpop.permute.xlu0 %950
    %953 = vset.pattern.permute.xlu0 2
    %954 = vperm.xlu0 %953, %v727
    %v955 = vpop.permute.xlu0 %954
    %957 = vset.pattern.permute.xlu0 2
    %958 = vperm.xlu0 %957, %v728
    %v959 = vpop.permute.xlu0 %958
    %v961 = vmul.f32 %v931, %v556
    %v962 = vmul.f32 %v931, %v560
    %v963 = vmul.f32 %v931, %v564
    %v964 = vmul.f32 %v931, %v568
    %v965 = vmul.f32 %v935, %v556
    %v966 = vmul.f32 %v935, %v560
    %v967 = vmul.f32 %v935, %v564
    %v968 = vmul.f32 %v935, %v568
    %v969 = vmul.f32 %v939, %v556
    %v970 = vmul.f32 %v939, %v560
    %v971 = vmul.f32 %v939, %v564
    %v972 = vmul.f32 %v939, %v568
    %v973 = vmul.f32 %v943, %v556
    %v974 = vmul.f32 %v943, %v560
    %v975 = vmul.f32 %v943, %v564
    %v976 = vmul.f32 %v943, %v568
    %v977 = vmul.f32 %v947, %v556
    %v978 = vmul.f32 %v947, %v560
    %v979 = vmul.f32 %v947, %v564
    %v980 = vmul.f32 %v947, %v568
    %v981 = vmul.f32 %v951, %v556
    %v982 = vmul.f32 %v951, %v560
    %v983 = vmul.f32 %v951, %v564
    %v984 = vmul.f32 %v951, %v568
    %v985 = vmul.f32 %v955, %v556
    %v986 = vmul.f32 %v955, %v560
    %v987 = vmul.f32 %v955, %v564
    %v988 = vmul.f32 %v955, %v568
    %v989 = vmul.f32 %v959, %v556
    %v990 = vmul.f32 %v959, %v560
    %v991 = vmul.f32 %v959, %v564
    %v992 = vmul.f32 %v959, %v568
    %v993 = vadd.f32 %v897, %v961
    %v994 = vadd.f32 %v898, %v962
    %v995 = vadd.f32 %v899, %v963
    %v996 = vadd.f32 %v900, %v964
    %v997 = vadd.f32 %v901, %v965
    %v998 = vadd.f32 %v902, %v966
    %v999 = vadd.f32 %v903, %v967
    %v1000 = vadd.f32 %v904, %v968
    %v1001 = vadd.f32 %v905, %v969
    %v1002 = vadd.f32 %v906, %v970
    %v1003 = vadd.f32 %v907, %v971
    %v1004 = vadd.f32 %v908, %v972
    %v1005 = vadd.f32 %v909, %v973
    %v1006 = vadd.f32 %v910, %v974
    %v1007 = vadd.f32 %v911, %v975
    %v1008 = vadd.f32 %v912, %v976
    %v1009 = vadd.f32 %v913, %v977
    %v1010 = vadd.f32 %v914, %v978
    %v1011 = vadd.f32 %v915, %v979
    %v1012 = vadd.f32 %v916, %v980
    %v1013 = vadd.f32 %v917, %v981
    %v1014 = vadd.f32 %v918, %v982
    %v1015 = vadd.f32 %v919, %v983
    %v1016 = vadd.f32 %v920, %v984
    %v1017 = vadd.f32 %v921, %v985
    %v1018 = vadd.f32 %v922, %v986
    %v1019 = vadd.f32 %v923, %v987
    %v1020 = vadd.f32 %v924, %v988
    %v1021 = vadd.f32 %v925, %v989
    %v1022 = vadd.f32 %v926, %v990
    %v1023 = vadd.f32 %v927, %v991
    %v1024 = vadd.f32 %v928, %v992
    %v1025 = vmax.f32 %v993, 0.0
    %v1026 = vmax.f32 %v994, 0.0
    %v1027 = vmax.f32 %v995, 0.0
    %v1028 = vmax.f32 %v996, 0.0
    %v1029 = vmax.f32 %v997, 0.0
    %v1030 = vmax.f32 %v998, 0.0
    %v1031 = vmax.f32 %v999, 0.0
    %v1032 = vmax.f32 %v1000, 0.0
    %v1033 = vmax.f32 %v1001, 0.0
    %v1034 = vmax.f32 %v1002, 0.0
    %v1035 = vmax.f32 %v1003, 0.0
    %v1036 = vmax.f32 %v1004, 0.0
    %v1037 = vmax.f32 %v1005, 0.0
    %v1038 = vmax.f32 %v1006, 0.0
    %v1039 = vmax.f32 %v1007, 0.0
    %v1040 = vmax.f32 %v1008, 0.0
    %v1041 = vmax.f32 %v1009, 0.0
    %v1042 = vmax.f32 %v1010, 0.0
    %v1043 = vmax.f32 %v1011, 0.0
    %v1044 = vmax.f32 %v1012, 0.0
    %v1045 = vmax.f32 %v1013, 0.0
    %v1046 = vmax.f32 %v1014, 0.0
    %v1047 = vmax.f32 %v1015, 0.0
    %v1048 = vmax.f32 %v1016, 0.0
    %v1049 = vmax.f32 %v1017, 0.0
    %v1050 = vmax.f32 %v1018, 0.0
    %v1051 = vmax.f32 %v1019, 0.0
    %v1052 = vmax.f32 %v1020, 0.0
    %v1053 = vmax.f32 %v1021, 0.0
    %v1054 = vmax.f32 %v1022, 0.0
    %v1055 = vmax.f32 %v1023, 0.0
    %v1056 = vmax.f32 %v1024, 0.0
    %v1057 = vadd.f32 %v1025, %v1029
    %v1058 = vadd.f32 %v1057, %v1033
    %v1059 = vadd.f32 %v1058, %v1037
    %v1060 = vadd.f32 %v1059, %v1041
    %v1061 = vadd.f32 %v1060, %v1045
    %v1062 = vadd.f32 %v1061, %v1049
    %v1063 = vadd.f32 %v1062, %v1053
    %v1064 = vrot.slane %v1063, 4
    %v1065 = vadd.f32 %v1063, %v1064
    %v1066 = vrot.slane %v1065, 2
    %v1067 = vadd.f32 %v1065, %v1066
    %v1068 = vrot.slane %v1067, 1
    %v1069 = vadd.f32 %v1067, %v1068
    %v1070 = vadd.f32 %v1026, %v1030
    %v1071 = vadd.f32 %v1070, %v1034
    %v1072 = vadd.f32 %v1071, %v1038
    %v1073 = vadd.f32 %v1072, %v1042
    %v1074 = vadd.f32 %v1073, %v1046
    %v1075 = vadd.f32 %v1074, %v1050
    %v1076 = vadd.f32 %v1075, %v1054
    %v1077 = vrot.slane %v1076, 4
    %v1078 = vadd.f32 %v1076, %v1077
    %v1079 = vrot.slane %v1078, 2
    %v1080 = vadd.f32 %v1078, %v1079
    %v1081 = vrot.slane %v1080, 1
    %v1082 = vadd.f32 %v1080, %v1081
    %v1083 = vadd.f32 %v1027, %v1031
    %v1084 = vadd.f32 %v1083, %v1035
    %v1085 = vadd.f32 %v1084, %v1039
    %v1086 = vadd.f32 %v1085, %v1043
    %v1087 = vadd.f32 %v1086, %v1047
    %v1088 = vadd.f32 %v1087, %v1051
    %v1089 = vadd.f32 %v1088, %v1055
    %v1090 = vrot.slane %v1089, 4
    %v1091 = vadd.f32 %v1089, %v1090
    %v1092 = vrot.slane %v1091, 2
    %v1093 = vadd.f32 %v1091, %v1092
    %v1094 = vrot.slane %v1093, 1
    %v1095 = vadd.f32 %v1093, %v1094
    %v1096 = vadd.f32 %v1028, %v1032
    %v1097 = vadd.f32 %v1096, %v1036
    %v1098 = vadd.f32 %v1097, %v1040
    %v1099 = vadd.f32 %v1098, %v1044
    %v1100 = vadd.f32 %v1099, %v1048
    %v1101 = vadd.f32 %v1100, %v1052
    %v1102 = vadd.f32 %v1101, %v1056
    %v1103 = vrot.slane %v1102, 4
    %v1104 = vadd.f32 %v1102, %v1103
    %v1105 = vrot.slane %v1104, 2
    %v1106 = vadd.f32 %v1104, %v1105
    %v1107 = vrot.slane %v1106, 1
    %v1108 = vadd.f32 %v1106, %v1107
    %v1109 = vadd.f32 %v717, %v1069
    %v1110 = vadd.f32 %v718, %v1082
    %v1111 = vadd.f32 %v719, %v1095
    %v1112 = vadd.f32 %v720, %v1108
    %v1113 = vld [vmem:[%s0 + $0x80] sm:$0xff]
    %v1114 = vld [vmem:[%s0 + $0x88] sm:$0xff]
    %v1115 = vld [vmem:[%s0 + $0x90] sm:$0xff]
    %v1116 = vld [vmem:[%s0 + $0x98] sm:$0xff]
    %v1117 = vld [vmem:[%s0 + $0xa0] sm:$0xff]
    %v1118 = vld [vmem:[%s0 + $0xa8] sm:$0xff]
    %v1119 = vld [vmem:[%s0 + $0xb0] sm:$0xff]
    %v1120 = vld [vmem:[%s0 + $0xb8] sm:$0xff]
    %1122 = vset.pattern.permute.xlu0 0
    %1123 = vperm.xlu0 %1122, %v1113
    %v1124 = vpop.permute.xlu0 %1123
    %1127 = vset.pattern.permute.xlu0 0
    %1128 = vperm.xlu0 %1127, %v1114
    %v1129 = vpop.permute.xlu0 %1128
    %1132 = vset.pattern.permute.xlu0 0
    %1133 = vperm.xlu0 %1132, %v1115
    %v1134 = vpop.permute.xlu0 %1133
    %1137 = vset.pattern.permute.xlu0 0
    %1138 = vperm.xlu0 %1137, %v1116
    %v1139 = vpop.permute.xlu0 %1138
    %1142 = vset.pattern.permute.xlu0 0
    %1143 = vperm.xlu0 %1142, %v1117
    %v1144 = vpop.permute.xlu0 %1143
    %1147 = vset.pattern.permute.xlu0 0
    %1148 = vperm.xlu0 %1147, %v1118
    %v1149 = vpop.permute.xlu0 %1148
    %1152 = vset.pattern.permute.xlu0 0
    %1153 = vperm.xlu0 %1152, %v1119
    %v1154 = vpop.permute.xlu0 %1153
    %1157 = vset.pattern.permute.xlu0 0
    %1158 = vperm.xlu0 %1157, %v1120
    %v1159 = vpop.permute.xlu0 %1158
    %v1161 = vmul.f32 %v1124, %v271
    %v1162 = vmul.f32 %v1124, %v275
    %v1163 = vmul.f32 %v1124, %v279
    %v1164 = vmul.f32 %v1124, %v283
    %v1165 = vmul.f32 %v1129, %v271
    %v1166 = vmul.f32 %v1129, %v275
    %v1167 = vmul.f32 %v1129, %v279
    %v1168 = vmul.f32 %v1129, %v283
    %v1169 = vmul.f32 %v1134, %v271
    %v1170 = vmul.f32 %v1134, %v275
    %v1171 = vmul.f32 %v1134, %v279
    %v1172 = vmul.f32 %v1134, %v283
    %v1173 = vmul.f32 %v1139, %v271
    %v1174 = vmul.f32 %v1139, %v275
    %v1175 = vmul.f32 %v1139, %v279
    %v1176 = vmul.f32 %v1139, %v283
    %v1177 = vmul.f32 %v1144, %v271
    %v1178 = vmul.f32 %v1144, %v275
    %v1179 = vmul.f32 %v1144, %v279
    %v1180 = vmul.f32 %v1144, %v283
    %v1181 = vmul.f32 %v1149, %v271
    %v1182 = vmul.f32 %v1149, %v275
    %v1183 = vmul.f32 %v1149, %v279
    %v1184 = vmul.f32 %v1149, %v283
    %v1185 = vmul.f32 %v1154, %v271
    %v1186 = vmul.f32 %v1154, %v275
    %v1187 = vmul.f32 %v1154, %v279
    %v1188 = vmul.f32 %v1154, %v283
    %v1189 = vmul.f32 %v1159, %v271
    %v1190 = vmul.f32 %v1159, %v275
    %v1191 = vmul.f32 %v1159, %v279
    %v1192 = vmul.f32 %v1159, %v283
    %v1193 = vadd.f32 %v320, %v1161
    %v1194 = vadd.f32 %v324, %v1162
    %v1195 = vadd.f32 %v328, %v1163
    %v1196 = vadd.f32 %v332, %v1164
    %v1197 = vadd.f32 %v320, %v1165
    %v1198 = vadd.f32 %v324, %v1166
    %v1199 = vadd.f32 %v328, %v1167
    %v1200 = vadd.f32 %v332, %v1168
    %v1201 = vadd.f32 %v320, %v1169
    %v1202 = vadd.f32 %v324, %v1170
    %v1203 = vadd.f32 %v328, %v1171
    %v1204 = vadd.f32 %v332, %v1172
    %v1205 = vadd.f32 %v320, %v1173
    %v1206 = vadd.f32 %v324, %v1174
    %v1207 = vadd.f32 %v328, %v1175
    %v1208 = vadd.f32 %v332, %v1176
    %v1209 = vadd.f32 %v320, %v1177
    %v1210 = vadd.f32 %v324, %v1178
    %v1211 = vadd.f32 %v328, %v1179
    %v1212 = vadd.f32 %v332, %v1180
    %v1213 = vadd.f32 %v320, %v1181
    %v1214 = vadd.f32 %v324, %v1182
    %v1215 = vadd.f32 %v328, %v1183
    %v1216 = vadd.f32 %v332, %v1184
    %v1217 = vadd.f32 %v320, %v1185
    %v1218 = vadd.f32 %v324, %v1186
    %v1219 = vadd.f32 %v328, %v1187
    %v1220 = vadd.f32 %v332, %v1188
    %v1221 = vadd.f32 %v320, %v1189
    %v1222 = vadd.f32 %v324, %v1190
    %v1223 = vadd.f32 %v328, %v1191
    %v1224 = vadd.f32 %v332, %v1192
    %1225 = vset.pattern.permute.xlu0 1
    %1226 = vperm.xlu0 %1225, %v1113
    %v1227 = vpop.permute.xlu0 %1226
    %1229 = vset.pattern.permute.xlu0 1
    %1230 = vperm.xlu0 %1229, %v1114
    %v1231 = vpop.permute.xlu0 %1230
    %1233 = vset.pattern.permute.xlu0 1
    %1234 = vperm.xlu0 %1233, %v1115
    %v1235 = vpop.permute.xlu0 %1234
    %1237 = vset.pattern.permute.xlu0 1
    %1238 = vperm.xlu0 %1237, %v1116
    %v1239 = vpop.permute.xlu0 %1238
    %1241 = vset.pattern.permute.xlu0 1
    %1242 = vperm.xlu0 %1241, %v1117
    %v1243 = vpop.permute.xlu0 %1242
    %1245 = vset.pattern.permute.xlu0 1
    %1246 = vperm.xlu0 %1245, %v1118
    %v1247 = vpop.permute.xlu0 %1246
    %1249 = vset.pattern.permute.xlu0 1
    %1250 = vperm.xlu0 %1249, %v1119
    %v1251 = vpop.permute.xlu0 %1250
    %1253 = vset.pattern.permute.xlu0 1
    %1254 = vperm.xlu0 %1253, %v1120
    %v1255 = vpop.permute.xlu0 %1254
    %v1257 = vmul.f32 %v1227, %v424
    %v1258 = vmul.f32 %v1227, %v428
    %v1259 = vmul.f32 %v1227, %v432
    %v1260 = vmul.f32 %v1227, %v436
    %v1261 = vmul.f32 %v1231, %v424
    %v1262 = vmul.f32 %v1231, %v428
    %v1263 = vmul.f32 %v1231, %v432
    %v1264 = vmul.f32 %v1231, %v436
    %v1265 = vmul.f32 %v1235, %v424
    %v1266 = vmul.f32 %v1235, %v428
    %v1267 = vmul.f32 %v1235, %v432
    %v1268 = vmul.f32 %v1235, %v436
    %v1269 = vmul.f32 %v1239, %v424
    %v1270 = vmul.f32 %v1239, %v428
    %v1271 = vmul.f32 %v1239, %v432
    %v1272 = vmul.f32 %v1239, %v436
    %v1273 = vmul.f32 %v1243, %v424
    %v1274 = vmul.f32 %v1243, %v428
    %v1275 = vmul.f32 %v1243, %v432
    %v1276 = vmul.f32 %v1243, %v436
    %v1277 = vmul.f32 %v1247, %v424
    %v1278 = vmul.f32 %v1247, %v428
    %v1279 = vmul.f32 %v1247, %v432
    %v1280 = vmul.f32 %v1247, %v436
    %v1281 = vmul.f32 %v1251, %v424
    %v1282 = vmul.f32 %v1251, %v428
    %v1283 = vmul.f32 %v1251, %v432
    %v1284 = vmul.f32 %v1251, %v436
    %v1285 = vmul.f32 %v1255, %v424
    %v1286 = vmul.f32 %v1255, %v428
    %v1287 = vmul.f32 %v1255, %v432
    %v1288 = vmul.f32 %v1255, %v436
    %v1289 = vadd.f32 %v1193, %v1257
    %v1290 = vadd.f32 %v1194, %v1258
    %v1291 = vadd.f32 %v1195, %v1259
    %v1292 = vadd.f32 %v1196, %v1260
    %v1293 = vadd.f32 %v1197, %v1261
    %v1294 = vadd.f32 %v1198, %v1262
    %v1295 = vadd.f32 %v1199, %v1263
    %v1296 = vadd.f32 %v1200, %v1264
    %v1297 = vadd.f32 %v1201, %v1265
    %v1298 = vadd.f32 %v1202, %v1266
    %v1299 = vadd.f32 %v1203, %v1267
    %v1300 = vadd.f32 %v1204, %v1268
    %v1301 = vadd.f32 %v1205, %v1269
    %v1302 = vadd.f32 %v1206, %v1270
    %v1303 = vadd.f32 %v1207, %v1271
    %v1304 = vadd.f32 %v1208, %v1272
    %v1305 = vadd.f32 %v1209, %v1273
    %v1306 = vadd.f32 %v1210, %v1274
    %v1307 = vadd.f32 %v1211, %v1275
    %v1308 = vadd.f32 %v1212, %v1276
    %v1309 = vadd.f32 %v1213, %v1277
    %v1310 = vadd.f32 %v1214, %v1278
    %v1311 = vadd.f32 %v1215, %v1279
    %v1312 = vadd.f32 %v1216, %v1280
    %v1313 = vadd.f32 %v1217, %v1281
    %v1314 = vadd.f32 %v1218, %v1282
    %v1315 = vadd.f32 %v1219, %v1283
    %v1316 = vadd.f32 %v1220, %v1284
    %v1317 = vadd.f32 %v1221, %v1285
    %v1318 = vadd.f32 %v1222, %v1286
    %v1319 = vadd.f32 %v1223, %v1287
    %v1320 = vadd.f32 %v1224, %v1288
    %1321 = vset.pattern.permute.xlu0 2
    %1322 = vperm.xlu0 %1321, %v1113
    %v1323 = vpop.permute.xlu0 %1322
    %1325 = vset.pattern.permute.xlu0 2
    %1326 = vperm.xlu0 %1325, %v1114
    %v1327 = vpop.permute.xlu0 %1326
    %1329 = vset.pattern.permute.xlu0 2
    %1330 = vperm.xlu0 %1329, %v1115
    %v1331 = vpop.permute.xlu0 %1330
    %1333 = vset.pattern.permute.xlu0 2
    %1334 = vperm.xlu0 %1333, %v1116
    %v1335 = vpop.permute.xlu0 %1334
    %1337 = vset.pattern.permute.xlu0 2
    %1338 = vperm.xlu0 %1337, %v1117
    %v1339 = vpop.permute.xlu0 %1338
    %1341 = vset.pattern.permute.xlu0 2
    %1342 = vperm.xlu0 %1341, %v1118
    %v1343 = vpop.permute.xlu0 %1342
    %1345 = vset.pattern.permute.xlu0 2
    %1346 = vperm.xlu0 %1345, %v1119
    %v1347 = vpop.permute.xlu0 %1346
    %1349 = vset.pattern.permute.xlu0 2
    %1350 = vperm.xlu0 %1349, %v1120
    %v1351 = vpop.permute.xlu0 %1350
    %v1353 = vmul.f32 %v1323, %v556
    %v1354 = vmul.f32 %v1323, %v560
    %v1355 = vmul.f32 %v1323, %v564
    %v1356 = vmul.f32 %v1323, %v568
    %v1357 = vmul.f32 %v1327, %v556
    %v1358 = vmul.f32 %v1327, %v560
    %v1359 = vmul.f32 %v1327, %v564
    %v1360 = vmul.f32 %v1327, %v568
    %v1361 = vmul.f32 %v1331, %v556
    %v1362 = vmul.f32 %v1331, %v560
    %v1363 = vmul.f32 %v1331, %v564
    %v1364 = vmul.f32 %v1331, %v568
    %v1365 = vmul.f32 %v1335, %v556
    %v1366 = vmul.f32 %v1335, %v560
    %v1367 = vmul.f32 %v1335, %v564
    %v1368 = vmul.f32 %v1335, %v568
    %v1369 = vmul.f32 %v1339, %v556
    %v1370 = vmul.f32 %v1339, %v560
    %v1371 = vmul.f32 %v1339, %v564
    %v1372 = vmul.f32 %v1339, %v568
    %v1373 = vmul.f32 %v1343, %v556
    %v1374 = vmul.f32 %v1343, %v560
    %v1375 = vmul.f32 %v1343, %v564
    %v1376 = vmul.f32 %v1343, %v568
    %v1377 = vmul.f32 %v1347, %v556
    %v1378 = vmul.f32 %v1347, %v560
    %v1379 = vmul.f32 %v1347, %v564
    %v1380 = vmul.f32 %v1347, %v568
    %v1381 = vmul.f32 %v1351, %v556
    %v1382 = vmul.f32 %v1351, %v560
    %v1383 = vmul.f32 %v1351, %v564
    %v1384 = vmul.f32 %v1351, %v568
    %v1385 = vadd.f32 %v1289, %v1353
    %v1386 = vadd.f32 %v1290, %v1354
    %v1387 = vadd.f32 %v1291, %v1355
    %v1388 = vadd.f32 %v1292, %v1356
    %v1389 = vadd.f32 %v1293, %v1357
    %v1390 = vadd.f32 %v1294, %v1358
    %v1391 = vadd.f32 %v1295, %v1359
    %v1392 = vadd.f32 %v1296, %v1360
    %v1393 = vadd.f32 %v1297, %v1361
    %v1394 = vadd.f32 %v1298, %v1362
    %v1395 = vadd.f32 %v1299, %v1363
    %v1396 = vadd.f32 %v1300, %v1364
    %v1397 = vadd.f32 %v1301, %v1365
    %v1398 = vadd.f32 %v1302, %v1366
    %v1399 = vadd.f32 %v1303, %v1367
    %v1400 = vadd.f32 %v1304, %v1368
    %v1401 = vadd.f32 %v1305, %v1369
    %v1402 = vadd.f32 %v1306, %v1370
    %v1403 = vadd.f32 %v1307, %v1371
    %v1404 = vadd.f32 %v1308, %v1372
    %v1405 = vadd.f32 %v1309, %v1373
    %v1406 = vadd.f32 %v1310, %v1374
    %v1407 = vadd.f32 %v1311, %v1375
    %v1408 = vadd.f32 %v1312, %v1376
    %v1409 = vadd.f32 %v1313, %v1377
    %v1410 = vadd.f32 %v1314, %v1378
    %v1411 = vadd.f32 %v1315, %v1379
    %v1412 = vadd.f32 %v1316, %v1380
    %v1413 = vadd.f32 %v1317, %v1381
    %v1414 = vadd.f32 %v1318, %v1382
    %v1415 = vadd.f32 %v1319, %v1383
    %v1416 = vadd.f32 %v1320, %v1384
    %v1417 = vmax.f32 %v1385, 0.0
    %v1418 = vmax.f32 %v1386, 0.0
    %v1419 = vmax.f32 %v1387, 0.0
    %v1420 = vmax.f32 %v1388, 0.0
    %v1421 = vmax.f32 %v1389, 0.0
    %v1422 = vmax.f32 %v1390, 0.0
    %v1423 = vmax.f32 %v1391, 0.0
    %v1424 = vmax.f32 %v1392, 0.0
    %v1425 = vmax.f32 %v1393, 0.0
    %v1426 = vmax.f32 %v1394, 0.0
    %v1427 = vmax.f32 %v1395, 0.0
    %v1428 = vmax.f32 %v1396, 0.0
    %v1429 = vmax.f32 %v1397, 0.0
    %v1430 = vmax.f32 %v1398, 0.0
    %v1431 = vmax.f32 %v1399, 0.0
    %v1432 = vmax.f32 %v1400, 0.0
    %v1433 = vmax.f32 %v1401, 0.0
    %v1434 = vmax.f32 %v1402, 0.0
    %v1435 = vmax.f32 %v1403, 0.0
    %v1436 = vmax.f32 %v1404, 0.0
    %v1437 = vmax.f32 %v1405, 0.0
    %v1438 = vmax.f32 %v1406, 0.0
    %v1439 = vmax.f32 %v1407, 0.0
    %v1440 = vmax.f32 %v1408, 0.0
    %v1441 = vmax.f32 %v1409, 0.0
    %v1442 = vmax.f32 %v1410, 0.0
    %v1443 = vmax.f32 %v1411, 0.0
    %v1444 = vmax.f32 %v1412, 0.0
    %v1445 = vmax.f32 %v1413, 0.0
    %v1446 = vmax.f32 %v1414, 0.0
    %v1447 = vmax.f32 %v1415, 0.0
    %v1448 = vmax.f32 %v1416, 0.0
    %v1449 = vadd.f32 %v1417, %v1421
    %v1450 = vadd.f32 %v1449, %v1425
    %v1451 = vadd.f32 %v1450, %v1429
    %v1452 = vadd.f32 %v1451, %v1433
    %v1453 = vadd.f32 %v1452, %v1437
    %v1454 = vadd.f32 %v1453, %v1441
    %v1455 = vadd.f32 %v1454, %v1445
    %v1456 = vrot.slane %v1455, 4
    %v1457 = vadd.f32 %v1455, %v1456
    %v1458 = vrot.slane %v1457, 2
    %v1459 = vadd.f32 %v1457, %v1458
    %v1460 = vrot.slane %v1459, 1
    %v1461 = vadd.f32 %v1459, %v1460
    %v1462 = vadd.f32 %v1418, %v1422
    %v1463 = vadd.f32 %v1462, %v1426
    %v1464 = vadd.f32 %v1463, %v1430
    %v1465 = vadd.f32 %v1464, %v1434
    %v1466 = vadd.f32 %v1465, %v1438
    %v1467 = vadd.f32 %v1466, %v1442
    %v1468 = vadd.f32 %v1467, %v1446
    %v1469 = vrot.slane %v1468, 4
    %v1470 = vadd.f32 %v1468, %v1469
    %v1471 = vrot.slane %v1470, 2
    %v1472 = vadd.f32 %v1470, %v1471
    %v1473 = vrot.slane %v1472, 1
    %v1474 = vadd.f32 %v1472, %v1473
    %v1475 = vadd.f32 %v1419, %v1423
    %v1476 = vadd.f32 %v1475, %v1427
    %v1477 = vadd.f32 %v1476, %v1431
    %v1478 = vadd.f32 %v1477, %v1435
    %v1479 = vadd.f32 %v1478, %v1439
    %v1480 = vadd.f32 %v1479, %v1443
    %v1481 = vadd.f32 %v1480, %v1447
    %v1482 = vrot.slane %v1481, 4
    %v1483 = vadd.f32 %v1481, %v1482
    %v1484 = vrot.slane %v1483, 2
    %v1485 = vadd.f32 %v1483, %v1484
    %v1486 = vrot.slane %v1485, 1
    %v1487 = vadd.f32 %v1485, %v1486
    %v1488 = vadd.f32 %v1420, %v1424
    %v1489 = vadd.f32 %v1488, %v1428
    %v1490 = vadd.f32 %v1489, %v1432
    %v1491 = vadd.f32 %v1490, %v1436
    %v1492 = vadd.f32 %v1491, %v1440
    %v1493 = vadd.f32 %v1492, %v1444
    %v1494 = vadd.f32 %v1493, %v1448
    %v1495 = vrot.slane %v1494, 4
    %v1496 = vadd.f32 %v1494, %v1495
    %v1497 = vrot.slane %v1496, 2
    %v1498 = vadd.f32 %v1496, %v1497
    %v1499 = vrot.slane %v1498, 1
    %v1500 = vadd.f32 %v1498, %v1499
    %v1501 = vadd.f32 %v1109, %v1461
    %v1502 = vadd.f32 %v1110, %v1474
    %v1503 = vadd.f32 %v1111, %v1487
    %v1504 = vadd.f32 %v1112, %v1500
    %v1505 = vld [vmem:[%s0 + $0xc0] sm:$0xff]
    %v1506 = vld [vmem:[%s0 + $0xc8] sm:$0xff]
    %v1507 = vld [vmem:[%s0 + $0xd0] sm:$0xff]
    %v1508 = vld [vmem:[%s0 + $0xd8] sm:$0xff]
    %v1509 = vld [vmem:[%s0 + $0xe0] sm:$0xff]
    %v1510 = vld [vmem:[%s0 + $0xe8] sm:$0xff]
    %v1511 = vld [vmem:[%s0 + $0xf0] sm:$0xff]
    %v1512 = vld [vmem:[%s0 + $0xf8] sm:$0xff]
    %1514 = vset.pattern.permute.xlu0 0
    %1515 = vperm.xlu0 %1514, %v1505
    %v1516 = vpop.permute.xlu0 %1515
    %1519 = vset.pattern.permute.xlu0 0
    %1520 = vperm.xlu0 %1519, %v1506
    %v1521 = vpop.permute.xlu0 %1520
    %1524 = vset.pattern.permute.xlu0 0
    %1525 = vperm.xlu0 %1524, %v1507
    %v1526 = vpop.permute.xlu0 %1525
    %1529 = vset.pattern.permute.xlu0 0
    %1530 = vperm.xlu0 %1529, %v1508
    %v1531 = vpop.permute.xlu0 %1530
    %1534 = vset.pattern.permute.xlu0 0
    %1535 = vperm.xlu0 %1534, %v1509
    %v1536 = vpop.permute.xlu0 %1535
    %1539 = vset.pattern.permute.xlu0 0
    %1540 = vperm.xlu0 %1539, %v1510
    %v1541 = vpop.permute.xlu0 %1540
    %1544 = vset.pattern.permute.xlu0 0
    %1545 = vperm.xlu0 %1544, %v1511
    %v1546 = vpop.permute.xlu0 %1545
    %1549 = vset.pattern.permute.xlu0 0
    %1550 = vperm.xlu0 %1549, %v1512
    %v1551 = vpop.permute.xlu0 %1550
    %v1553 = vmul.f32 %v1516, %v271
    %v1554 = vmul.f32 %v1516, %v275
    %v1555 = vmul.f32 %v1516, %v279
    %v1556 = vmul.f32 %v1516, %v283
    %v1557 = vmul.f32 %v1521, %v271
    %v1558 = vmul.f32 %v1521, %v275
    %v1559 = vmul.f32 %v1521, %v279
    %v1560 = vmul.f32 %v1521, %v283
    %v1561 = vmul.f32 %v1526, %v271
    %v1562 = vmul.f32 %v1526, %v275
    %v1563 = vmul.f32 %v1526, %v279
    %v1564 = vmul.f32 %v1526, %v283
    %v1565 = vmul.f32 %v1531, %v271
    %v1566 = vmul.f32 %v1531, %v275
    %v1567 = vmul.f32 %v1531, %v279
    %v1568 = vmul.f32 %v1531, %v283
    %v1569 = vmul.f32 %v1536, %v271
    %v1570 = vmul.f32 %v1536, %v275
    %v1571 = vmul.f32 %v1536, %v279
    %v1572 = vmul.f32 %v1536, %v283
    %v1573 = vmul.f32 %v1541, %v271
    %v1574 = vmul.f32 %v1541, %v275
    %v1575 = vmul.f32 %v1541, %v279
    %v1576 = vmul.f32 %v1541, %v283
    %v1577 = vmul.f32 %v1546, %v271
    %v1578 = vmul.f32 %v1546, %v275
    %v1579 = vmul.f32 %v1546, %v279
    %v1580 = vmul.f32 %v1546, %v283
    %v1581 = vmul.f32 %v1551, %v271
    %v1582 = vmul.f32 %v1551, %v275
    %v1583 = vmul.f32 %v1551, %v279
    %v1584 = vmul.f32 %v1551, %v283
    %v1585 = vadd.f32 %v320, %v1553
    %v1586 = vadd.f32 %v324, %v1554
    %v1587 = vadd.f32 %v328, %v1555
    %v1588 = vadd.f32 %v332, %v1556
    %v1589 = vadd.f32 %v320, %v1557
    %v1590 = vadd.f32 %v324, %v1558
    %v1591 = vadd.f32 %v328, %v1559
    %v1592 = vadd.f32 %v332, %v1560
    %v1593 = vadd.f32 %v320, %v1561
    %v1594 = vadd.f32 %v324, %v1562
    %v1595 = vadd.f32 %v328, %v1563
    %v1596 = vadd.f32 %v332, %v1564
    %v1597 = vadd.f32 %v320, %v1565
    %v1598 = vadd.f32 %v324, %v1566
    %v1599 = vadd.f32 %v328, %v1567
    %v1600 = vadd.f32 %v332, %v1568
    %v1601 = vadd.f32 %v320, %v1569
    %v1602 = vadd.f32 %v324, %v1570
    %v1603 = vadd.f32 %v328, %v1571
    %v1604 = vadd.f32 %v332, %v1572
    %v1605 = vadd.f32 %v320, %v1573
    %v1606 = vadd.f32 %v324, %v1574
    %v1607 = vadd.f32 %v328, %v1575
    %v1608 = vadd.f32 %v332, %v1576
    %v1609 = vadd.f32 %v320, %v1577
    %v1610 = vadd.f32 %v324, %v1578
    %v1611 = vadd.f32 %v328, %v1579
    %v1612 = vadd.f32 %v332, %v1580
    %v1613 = vadd.f32 %v320, %v1581
    %v1614 = vadd.f32 %v324, %v1582
    %v1615 = vadd.f32 %v328, %v1583
    %v1616 = vadd.f32 %v332, %v1584
    %1617 = vset.pattern.permute.xlu0 1
    %1618 = vperm.xlu0 %1617, %v1505
    %v1619 = vpop.permute.xlu0 %1618
    %1621 = vset.pattern.permute.xlu0 1
    %1622 = vperm.xlu0 %1621, %v1506
    %v1623 = vpop.permute.xlu0 %1622
    %1625 = vset.pattern.permute.xlu0 1
    %1626 = vperm.xlu0 %1625, %v1507
    %v1627 = vpop.permute.xlu0 %1626
    %1629 = vset.pattern.permute.xlu0 1
    %1630 = vperm.xlu0 %1629, %v1508
    %v1631 = vpop.permute.xlu0 %1630
    %1633 = vset.pattern.permute.xlu0 1
    %1634 = vperm.xlu0 %1633, %v1509
    %v1635 = vpop.permute.xlu0 %1634
    %1637 = vset.pattern.permute.xlu0 1
    %1638 = vperm.xlu0 %1637, %v1510
    %v1639 = vpop.permute.xlu0 %1638
    %1641 = vset.pattern.permute.xlu0 1
    %1642 = vperm.xlu0 %1641, %v1511
    %v1643 = vpop.permute.xlu0 %1642
    %1645 = vset.pattern.permute.xlu0 1
    %1646 = vperm.xlu0 %1645, %v1512
    %v1647 = vpop.permute.xlu0 %1646
    %v1649 = vmul.f32 %v1619, %v424
    %v1650 = vmul.f32 %v1619, %v428
    %v1651 = vmul.f32 %v1619, %v432
    %v1652 = vmul.f32 %v1619, %v436
    %v1653 = vmul.f32 %v1623, %v424
    %v1654 = vmul.f32 %v1623, %v428
    %v1655 = vmul.f32 %v1623, %v432
    %v1656 = vmul.f32 %v1623, %v436
    %v1657 = vmul.f32 %v1627, %v424
    %v1658 = vmul.f32 %v1627, %v428
    %v1659 = vmul.f32 %v1627, %v432
    %v1660 = vmul.f32 %v1627, %v436
    %v1661 = vmul.f32 %v1631, %v424
    %v1662 = vmul.f32 %v1631, %v428
    %v1663 = vmul.f32 %v1631, %v432
    %v1664 = vmul.f32 %v1631, %v436
    %v1665 = vmul.f32 %v1635, %v424
    %v1666 = vmul.f32 %v1635, %v428
    %v1667 = vmul.f32 %v1635, %v432
    %v1668 = vmul.f32 %v1635, %v436
    %v1669 = vmul.f32 %v1639, %v424
    %v1670 = vmul.f32 %v1639, %v428
    %v1671 = vmul.f32 %v1639, %v432
    %v1672 = vmul.f32 %v1639, %v436
    %v1673 = vmul.f32 %v1643, %v424
    %v1674 = vmul.f32 %v1643, %v428
    %v1675 = vmul.f32 %v1643, %v432
    %v1676 = vmul.f32 %v1643, %v436
    %v1677 = vmul.f32 %v1647, %v424
    %v1678 = vmul.f32 %v1647, %v428
    %v1679 = vmul.f32 %v1647, %v432
    %v1680 = vmul.f32 %v1647, %v436
    %v1681 = vadd.f32 %v1585, %v1649
    %v1682 = vadd.f32 %v1586, %v1650
    %v1683 = vadd.f32 %v1587, %v1651
    %v1684 = vadd.f32 %v1588, %v1652
    %v1685 = vadd.f32 %v1589, %v1653
    %v1686 = vadd.f32 %v1590, %v1654
    %v1687 = vadd.f32 %v1591, %v1655
    %v1688 = vadd.f32 %v1592, %v1656
    %v1689 = vadd.f32 %v1593, %v1657
    %v1690 = vadd.f32 %v1594, %v1658
    %v1691 = vadd.f32 %v1595, %v1659
    %v1692 = vadd.f32 %v1596, %v1660
    %v1693 = vadd.f32 %v1597, %v1661
    %v1694 = vadd.f32 %v1598, %v1662
    %v1695 = vadd.f32 %v1599, %v1663
    %v1696 = vadd.f32 %v1600, %v1664
    %v1697 = vadd.f32 %v1601, %v1665
    %v1698 = vadd.f32 %v1602, %v1666
    %v1699 = vadd.f32 %v1603, %v1667
    %v1700 = vadd.f32 %v1604, %v1668
    %v1701 = vadd.f32 %v1605, %v1669
    %v1702 = vadd.f32 %v1606, %v1670
    %v1703 = vadd.f32 %v1607, %v1671
    %v1704 = vadd.f32 %v1608, %v1672
    %v1705 = vadd.f32 %v1609, %v1673
    %v1706 = vadd.f32 %v1610, %v1674
    %v1707 = vadd.f32 %v1611, %v1675
    %v1708 = vadd.f32 %v1612, %v1676
    %v1709 = vadd.f32 %v1613, %v1677
    %v1710 = vadd.f32 %v1614, %v1678
    %v1711 = vadd.f32 %v1615, %v1679
    %v1712 = vadd.f32 %v1616, %v1680
    %1713 = vset.pattern.permute.xlu0 2
    %1714 = vperm.xlu0 %1713, %v1505
    %v1715 = vpop.permute.xlu0 %1714
    %1717 = vset.pattern.permute.xlu0 2
    %1718 = vperm.xlu0 %1717, %v1506
    %v1719 = vpop.permute.xlu0 %1718
    %1721 = vset.pattern.permute.xlu0 2
    %1722 = vperm.xlu0 %1721, %v1507
    %v1723 = vpop.permute.xlu0 %1722
    %1725 = vset.pattern.permute.xlu0 2
    %1726 = vperm.xlu0 %1725, %v1508
    %v1727 = vpop.permute.xlu0 %1726
    %1729 = vset.pattern.permute.xlu0 2
    %1730 = vperm.xlu0 %1729, %v1509
    %v1731 = vpop.permute.xlu0 %1730
    %1733 = vset.pattern.permute.xlu0 2
    %1734 = vperm.xlu0 %1733, %v1510
    %v1735 = vpop.permute.xlu0 %1734
    %1737 = vset.pattern.permute.xlu0 2
    %1738 = vperm.xlu0 %1737, %v1511
    %v1739 = vpop.permute.xlu0 %1738
    %1741 = vset.pattern.permute.xlu0 2
    %1742 = vperm.xlu0 %1741, %v1512
    %v1743 = vpop.permute.xlu0 %1742
    %v1745 = vmul.f32 %v1715, %v556
    %v1746 = vmul.f32 %v1715, %v560
    %v1747 = vmul.f32 %v1715, %v564
    %v1748 = vmul.f32 %v1715, %v568
    %v1749 = vmul.f32 %v1719, %v556
    %v1750 = vmul.f32 %v1719, %v560
    %v1751 = vmul.f32 %v1719, %v564
    %v1752 = vmul.f32 %v1719, %v568
    %v1753 = vmul.f32 %v1723, %v556
    %v1754 = vmul.f32 %v1723, %v560
    %v1755 = vmul.f32 %v1723, %v564
    %v1756 = vmul.f32 %v1723, %v568
    %v1757 = vmul.f32 %v1727, %v556
    %v1758 = vmul.f32 %v1727, %v560
    %v1759 = vmul.f32 %v1727, %v564
    %v1760 = vmul.f32 %v1727, %v568
    %v1761 = vmul.f32 %v1731, %v556
    %v1762 = vmul.f32 %v1731, %v560
    %v1763 = vmul.f32 %v1731, %v564
    %v1764 = vmul.f32 %v1731, %v568
    %v1765 = vmul.f32 %v1735, %v556
    %v1766 = vmul.f32 %v1735, %v560
    %v1767 = vmul.f32 %v1735, %v564
    %v1768 = vmul.f32 %v1735, %v568
    %v1769 = vmul.f32 %v1739, %v556
    %v1770 = vmul.f32 %v1739, %v560
    %v1771 = vmul.f32 %v1739, %v564
    %v1772 = vmul.f32 %v1739, %v568
    %v1773 = vmul.f32 %v1743, %v556
    %v1774 = vmul.f32 %v1743, %v560
    %v1775 = vmul.f32 %v1743, %v564
    %v1776 = vmul.f32 %v1743, %v568
    %v1777 = vadd.f32 %v1681, %v1745
    %v1778 = vadd.f32 %v1682, %v1746
    %v1779 = vadd.f32 %v1683, %v1747
    %v1780 = vadd.f32 %v1684, %v1748
    %v1781 = vadd.f32 %v1685, %v1749
    %v1782 = vadd.f32 %v1686, %v1750
    %v1783 = vadd.f32 %v1687, %v1751
    %v1784 = vadd.f32 %v1688, %v1752
    %v1785 = vadd.f32 %v1689, %v1753
    %v1786 = vadd.f32 %v1690, %v1754
    %v1787 = vadd.f32 %v1691, %v1755
    %v1788 = vadd.f32 %v1692, %v1756
    %v1789 = vadd.f32 %v1693, %v1757
    %v1790 = vadd.f32 %v1694, %v1758
    %v1791 = vadd.f32 %v1695, %v1759
    %v1792 = vadd.f32 %v1696, %v1760
    %v1793 = vadd.f32 %v1697, %v1761
    %v1794 = vadd.f32 %v1698, %v1762
    %v1795 = vadd.f32 %v1699, %v1763
    %v1796 = vadd.f32 %v1700, %v1764
    %v1797 = vadd.f32 %v1701, %v1765
    %v1798 = vadd.f32 %v1702, %v1766
    %v1799 = vadd.f32 %v1703, %v1767
    %v1800 = vadd.f32 %v1704, %v1768
    %v1801 = vadd.f32 %v1705, %v1769
    %v1802 = vadd.f32 %v1706, %v1770
    %v1803 = vadd.f32 %v1707, %v1771
    %v1804 = vadd.f32 %v1708, %v1772
    %v1805 = vadd.f32 %v1709, %v1773
    %v1806 = vadd.f32 %v1710, %v1774
    %v1807 = vadd.f32 %v1711, %v1775
    %v1808 = vadd.f32 %v1712, %v1776
    %v1809 = vmax.f32 %v1777, 0.0
    %v1810 = vmax.f32 %v1778, 0.0
    %v1811 = vmax.f32 %v1779, 0.0
    %v1812 = vmax.f32 %v1780, 0.0
    %v1813 = vmax.f32 %v1781, 0.0
    %v1814 = vmax.f32 %v1782, 0.0
    %v1815 = vmax.f32 %v1783, 0.0
    %v1816 = vmax.f32 %v1784, 0.0
    %v1817 = vmax.f32 %v1785, 0.0
    %v1818 = vmax.f32 %v1786, 0.0
    %v1819 = vmax.f32 %v1787, 0.0
    %v1820 = vmax.f32 %v1788, 0.0
    %v1821 = vmax.f32 %v1789, 0.0
    %v1822 = vmax.f32 %v1790, 0.0
    %v1823 = vmax.f32 %v1791, 0.0
    %v1824 = vmax.f32 %v1792, 0.0
    %v1825 = vmax.f32 %v1793, 0.0
    %v1826 = vmax.f32 %v1794, 0.0
    %v1827 = vmax.f32 %v1795, 0.0
    %v1828 = vmax.f32 %v1796, 0.0
    %v1829 = vmax.f32 %v1797, 0.0
    %v1830 = vmax.f32 %v1798, 0.0
    %v1831 = vmax.f32 %v1799, 0.0
    %v1832 = vmax.f32 %v1800, 0.0
    %v1833 = vmax.f32 %v1801, 0.0
    %v1834 = vmax.f32 %v1802, 0.0
    %v1835 = vmax.f32 %v1803, 0.0
    %v1836 = vmax.f32 %v1804, 0.0
    %v1837 = vmax.f32 %v1805, 0.0
    %v1838 = vmax.f32 %v1806, 0.0
    %v1839 = vmax.f32 %v1807, 0.0
    %v1840 = vmax.f32 %v1808, 0.0
    %v1841 = vadd.f32 %v1809, %v1813
    %v1842 = vadd.f32 %v1841, %v1817
    %v1843 = vadd.f32 %v1842, %v1821
    %v1844 = vadd.f32 %v1843, %v1825
    %v1845 = vadd.f32 %v1844, %v1829
    %v1846 = vadd.f32 %v1845, %v1833
    %v1847 = vadd.f32 %v1846, %v1837
    %v1848 = vrot.slane %v1847, 4
    %v1849 = vadd.f32 %v1847, %v1848
    %v1850 = vrot.slane %v1849, 2
    %v1851 = vadd.f32 %v1849, %v1850
    %v1852 = vrot.slane %v1851, 1
    %v1853 = vadd.f32 %v1851, %v1852
    %v1854 = vadd.f32 %v1810, %v1814
    %v1855 = vadd.f32 %v1854, %v1818
    %v1856 = vadd.f32 %v1855, %v1822
    %v1857 = vadd.f32 %v1856, %v1826
    %v1858 = vadd.f32 %v1857, %v1830
    %v1859 = vadd.f32 %v1858, %v1834
    %v1860 = vadd.f32 %v1859, %v1838
    %v1861 = vrot.slane %v1860, 4
    %v1862 = vadd.f32 %v1860, %v1861
    %v1863 = vrot.slane %v1862, 2
    %v1864 = vadd.f32 %v1862, %v1863
    %v1865 = vrot.slane %v1864, 1
    %v1866 = vadd.f32 %v1864, %v1865
    %v1867 = vadd.f32 %v1811, %v1815
    %v1868 = vadd.f32 %v1867, %v1819
    %v1869 = vadd.f32 %v1868, %v1823
    %v1870 = vadd.f32 %v1869, %v1827
    %v1871 = vadd.f32 %v1870, %v1831
    %v1872 = vadd.f32 %v1871, %v1835
    %v1873 = vadd.f32 %v1872, %v1839
    %v1874 = vrot.slane %v1873, 4
    %v1875 = vadd.f32 %v1873, %v1874
    %v1876 = vrot.slane %v1875, 2
    %v1877 = vadd.f32 %v1875, %v1876
    %v1878 = vrot.slane %v1877, 1
    %v1879 = vadd.f32 %v1877, %v1878
    %v1880 = vadd.f32 %v1812, %v1816
    %v1881 = vadd.f32 %v1880, %v1820
    %v1882 = vadd.f32 %v1881, %v1824
    %v1883 = vadd.f32 %v1882, %v1828
    %v1884 = vadd.f32 %v1883, %v1832
    %v1885 = vadd.f32 %v1884, %v1836
    %v1886 = vadd.f32 %v1885, %v1840
    %v1887 = vrot.slane %v1886, 4
    %v1888 = vadd.f32 %v1886, %v1887
    %v1889 = vrot.slane %v1888, 2
    %v1890 = vadd.f32 %v1888, %v1889
    %v1891 = vrot.slane %v1890, 1
    %v1892 = vadd.f32 %v1890, %v1891
    %v1893 = vadd.f32 %v1501, %v1853
    %v1894 = vadd.f32 %v1502, %v1866
    %v1895 = vadd.f32 %v1503, %v1879
    %v1896 = vadd.f32 %v1504, %v1892
    %v1897 = vmul.f32 %v1893, 0.00390625
    %v1898 = vmul.f32 %v1894, 0.00390625
    %v1899 = vmul.f32 %v1895, 0.00390625
    %v1900 = vmul.f32 %v1896, 0.00390625
    %v1901 = vld [vmem:[%s0 + $0x100] sm:$0xff]
    %v1902 = vld [vmem:[%s0 + $0x108] sm:$0xff]
    %v1903 = vld [vmem:[%s0 + $0x110] sm:$0xff]
    %v1904 = vld [vmem:[%s0 + $0x118] sm:$0xff]
    %v1905 = vld [vmem:[%s0 + $0x120] sm:$0xff]
    %v1906 = vld [vmem:[%s0 + $0x128] sm:$0xff]
    %v1907 = vld [vmem:[%s0 + $0x130] sm:$0xff]
    %v1908 = vld [vmem:[%s0 + $0x138] sm:$0xff]
    %1910 = vset.pattern.permute.xlu0 0
    %1911 = vperm.xlu0 %1910, %v1901
    %v1912 = vpop.permute.xlu0 %1911
    %1915 = vset.pattern.permute.xlu0 0
    %1916 = vperm.xlu0 %1915, %v1902
    %v1917 = vpop.permute.xlu0 %1916
    %1920 = vset.pattern.permute.xlu0 0
    %1921 = vperm.xlu0 %1920, %v1903
    %v1922 = vpop.permute.xlu0 %1921
    %1925 = vset.pattern.permute.xlu0 0
    %1926 = vperm.xlu0 %1925, %v1904
    %v1927 = vpop.permute.xlu0 %1926
    %1930 = vset.pattern.permute.xlu0 0
    %1931 = vperm.xlu0 %1930, %v1905
    %v1932 = vpop.permute.xlu0 %1931
    %1935 = vset.pattern.permute.xlu0 0
    %1936 = vperm.xlu0 %1935, %v1906
    %v1937 = vpop.permute.xlu0 %1936
    %1940 = vset.pattern.permute.xlu0 0
    %1941 = vperm.xlu0 %1940, %v1907
    %v1942 = vpop.permute.xlu0 %1941
    %1945 = vset.pattern.permute.xlu0 0
    %1946 = vperm.xlu0 %1945, %v1908
    %v1947 = vpop.permute.xlu0 %1946
    %v1949 = vmul.f32 %v1912, %v271
    %v1950 = vmul.f32 %v1912, %v275
    %v1951 = vmul.f32 %v1912, %v279
    %v1952 = vmul.f32 %v1912, %v283
    %v1953 = vmul.f32 %v1917, %v271
    %v1954 = vmul.f32 %v1917, %v275
    %v1955 = vmul.f32 %v1917, %v279
    %v1956 = vmul.f32 %v1917, %v283
    %v1957 = vmul.f32 %v1922, %v271
    %v1958 = vmul.f32 %v1922, %v275
    %v1959 = vmul.f32 %v1922, %v279
    %v1960 = vmul.f32 %v1922, %v283
    %v1961 = vmul.f32 %v1927, %v271
    %v1962 = vmul.f32 %v1927, %v275
    %v1963 = vmul.f32 %v1927, %v279
    %v1964 = vmul.f32 %v1927, %v283
    %v1965 = vmul.f32 %v1932, %v271
    %v1966 = vmul.f32 %v1932, %v275
    %v1967 = vmul.f32 %v1932, %v279
    %v1968 = vmul.f32 %v1932, %v283
    %v1969 = vmul.f32 %v1937, %v271
    %v1970 = vmul.f32 %v1937, %v275
    %v1971 = vmul.f32 %v1937, %v279
    %v1972 = vmul.f32 %v1937, %v283
    %v1973 = vmul.f32 %v1942, %v271
    %v1974 = vmul.f32 %v1942, %v275
    %v1975 = vmul.f32 %v1942, %v279
    %v1976 = vmul.f32 %v1942, %v283
    %v1977 = vmul.f32 %v1947, %v271
    %v1978 = vmul.f32 %v1947, %v275
    %v1979 = vmul.f32 %v1947, %v279
    %v1980 = vmul.f32 %v1947, %v283
    %v1981 = vadd.f32 %v320, %v1949
    %v1982 = vadd.f32 %v324, %v1950
    %v1983 = vadd.f32 %v328, %v1951
    %v1984 = vadd.f32 %v332, %v1952
    %v1985 = vadd.f32 %v320, %v1953
    %v1986 = vadd.f32 %v324, %v1954
    %v1987 = vadd.f32 %v328, %v1955
    %v1988 = vadd.f32 %v332, %v1956
    %v1989 = vadd.f32 %v320, %v1957
    %v1990 = vadd.f32 %v324, %v1958
    %v1991 = vadd.f32 %v328, %v1959
    %v1992 = vadd.f32 %v332, %v1960
    %v1993 = vadd.f32 %v320, %v1961
    %v1994 = vadd.f32 %v324, %v1962
    %v1995 = vadd.f32 %v328, %v1963
    %v1996 = vadd.f32 %v332, %v1964
    %v1997 = vadd.f32 %v320, %v1965
    %v1998 = vadd.f32 %v324, %v1966
    %v1999 = vadd.f32 %v328, %v1967
    %v2000 = vadd.f32 %v332, %v1968
    %v2001 = vadd.f32 %v320, %v1969
    %v2002 = vadd.f32 %v324, %v1970
    %v2003 = vadd.f32 %v328, %v1971
    %v2004 = vadd.f32 %v332, %v1972
    %v2005 = vadd.f32 %v320, %v1973
    %v2006 = vadd.f32 %v324, %v1974
    %v2007 = vadd.f32 %v328, %v1975
    %v2008 = vadd.f32 %v332, %v1976
    %v2009 = vadd.f32 %v320, %v1977
    %v2010 = vadd.f32 %v324, %v1978
    %v2011 = vadd.f32 %v328, %v1979
    %v2012 = vadd.f32 %v332, %v1980
    %2013 = vset.pattern.permute.xlu0 1
    %2014 = vperm.xlu0 %2013, %v1901
    %v2015 = vpop.permute.xlu0 %2014
    %2017 = vset.pattern.permute.xlu0 1
    %2018 = vperm.xlu0 %2017, %v1902
    %v2019 = vpop.permute.xlu0 %2018
    %2021 = vset.pattern.permute.xlu0 1
    %2022 = vperm.xlu0 %2021, %v1903
    %v2023 = vpop.permute.xlu0 %2022
    %2025 = vset.pattern.permute.xlu0 1
    %2026 = vperm.xlu0 %2025, %v1904
    %v2027 = vpop.permute.xlu0 %2026
    %2029 = vset.pattern.permute.xlu0 1
    %2030 = vperm.xlu0 %2029, %v1905
    %v2031 = vpop.permute.xlu0 %2030
    %2033 = vset.pattern.permute.xlu0 1
    %2034 = vperm.xlu0 %2033, %v1906
    %v2035 = vpop.permute.xlu0 %2034
    %2037 = vset.pattern.permute.xlu0 1
    %2038 = vperm.xlu0 %2037, %v1907
    %v2039 = vpop.permute.xlu0 %2038
    %2041 = vset.pattern.permute.xlu0 1
    %2042 = vperm.xlu0 %2041, %v1908
    %v2043 = vpop.permute.xlu0 %2042
    %v2045 = vmul.f32 %v2015, %v424
    %v2046 = vmul.f32 %v2015, %v428
    %v2047 = vmul.f32 %v2015, %v432
    %v2048 = vmul.f32 %v2015, %v436
    %v2049 = vmul.f32 %v2019, %v424
    %v2050 = vmul.f32 %v2019, %v428
    %v2051 = vmul.f32 %v2019, %v432
    %v2052 = vmul.f32 %v2019, %v436
    %v2053 = vmul.f32 %v2023, %v424
    %v2054 = vmul.f32 %v2023, %v428
    %v2055 = vmul.f32 %v2023, %v432
    %v2056 = vmul.f32 %v2023, %v436
    %v2057 = vmul.f32 %v2027, %v424
    %v2058 = vmul.f32 %v2027, %v428
    %v2059 = vmul.f32 %v2027, %v432
    %v2060 = vmul.f32 %v2027, %v436
    %v2061 = vmul.f32 %v2031, %v424
    %v2062 = vmul.f32 %v2031, %v428
    %v2063 = vmul.f32 %v2031, %v432
    %v2064 = vmul.f32 %v2031, %v436
    %v2065 = vmul.f32 %v2035, %v424
    %v2066 = vmul.f32 %v2035, %v428
    %v2067 = vmul.f32 %v2035, %v432
    %v2068 = vmul.f32 %v2035, %v436
    %v2069 = vmul.f32 %v2039, %v424
    %v2070 = vmul.f32 %v2039, %v428
    %v2071 = vmul.f32 %v2039, %v432
    %v2072 = vmul.f32 %v2039, %v436
    %v2073 = vmul.f32 %v2043, %v424
    %v2074 = vmul.f32 %v2043, %v428
    %v2075 = vmul.f32 %v2043, %v432
    %v2076 = vmul.f32 %v2043, %v436
    %v2077 = vadd.f32 %v1981, %v2045
    %v2078 = vadd.f32 %v1982, %v2046
    %v2079 = vadd.f32 %v1983, %v2047
    %v2080 = vadd.f32 %v1984, %v2048
    %v2081 = vadd.f32 %v1985, %v2049
    %v2082 = vadd.f32 %v1986, %v2050
    %v2083 = vadd.f32 %v1987, %v2051
    %v2084 = vadd.f32 %v1988, %v2052
    %v2085 = vadd.f32 %v1989, %v2053
    %v2086 = vadd.f32 %v1990, %v2054
    %v2087 = vadd.f32 %v1991, %v2055
    %v2088 = vadd.f32 %v1992, %v2056
    %v2089 = vadd.f32 %v1993, %v2057
    %v2090 = vadd.f32 %v1994, %v2058
    %v2091 = vadd.f32 %v1995, %v2059
    %v2092 = vadd.f32 %v1996, %v2060
    %v2093 = vadd.f32 %v1997, %v2061
    %v2094 = vadd.f32 %v1998, %v2062
    %v2095 = vadd.f32 %v1999, %v2063
    %v2096 = vadd.f32 %v2000, %v2064
    %v2097 = vadd.f32 %v2001, %v2065
    %v2098 = vadd.f32 %v2002, %v2066
    %v2099 = vadd.f32 %v2003, %v2067
    %v2100 = vadd.f32 %v2004, %v2068
    %v2101 = vadd.f32 %v2005, %v2069
    %v2102 = vadd.f32 %v2006, %v2070
    %v2103 = vadd.f32 %v2007, %v2071
    %v2104 = vadd.f32 %v2008, %v2072
    %v2105 = vadd.f32 %v2009, %v2073
    %v2106 = vadd.f32 %v2010, %v2074
    %v2107 = vadd.f32 %v2011, %v2075
    %v2108 = vadd.f32 %v2012, %v2076
    %2109 = vset.pattern.permute.xlu0 2
    %2110 = vperm.xlu0 %2109, %v1901
    %v2111 = vpop.permute.xlu0 %2110
    %2113 = vset.pattern.permute.xlu0 2
    %2114 = vperm.xlu0 %2113, %v1902
    %v2115 = vpop.permute.xlu0 %2114
    %2117 = vset.pattern.permute.xlu0 2
    %2118 = vperm.xlu0 %2117, %v1903
    %v2119 = vpop.permute.xlu0 %2118
    %2121 = vset.pattern.permute.xlu0 2
    %2122 = vperm.xlu0 %2121, %v1904
    %v2123 = vpop.permute.xlu0 %2122
    %2125 = vset.pattern.permute.xlu0 2
    %2126 = vperm.xlu0 %2125, %v1905
    %v2127 = vpop.permute.xlu0 %2126
    %2129 = vset.pattern.permute.xlu0 2
    %2130 = vperm.xlu0 %2129, %v1906
    %v2131 = vpop.permute.xlu0 %2130
    %2133 = vset.pattern.permute.xlu0 2
    %2134 = vperm.xlu0 %2133, %v1907
    %v2135 = vpop.permute.xlu0 %2134
    %2137 = vset.pattern.permute.xlu0 2
    %2138 = vperm.xlu0 %2137, %v1908
    %v2139 = vpop.permute.xlu0 %2138
    %v2141 = vmul.f32 %v2111, %v556
    %v2142 = vmul.f32 %v2111, %v560
    %v2143 = vmul.f32 %v2111, %v564
    %v2144 = vmul.f32 %v2111, %v568
    %v2145 = vmul.f32 %v2115, %v556
    %v2146 = vmul.f32 %v2115, %v560
    %v2147 = vmul.f32 %v2115, %v564
    %v2148 = vmul.f32 %v2115, %v568
    %v2149 = vmul.f32 %v2119, %v556
    %v2150 = vmul.f32 %v2119, %v560
    %v2151 = vmul.f32 %v2119, %v564
    %v2152 = vmul.f32 %v2119, %v568
    %v2153 = vmul.f32 %v2123, %v556
    %v2154 = vmul.f32 %v2123, %v560
    %v2155 = vmul.f32 %v2123, %v564
    %v2156 = vmul.f32 %v2123, %v568
    %v2157 = vmul.f32 %v2127, %v556
    %v2158 = vmul.f32 %v2127, %v560
    %v2159 = vmul.f32 %v2127, %v564
    %v2160 = vmul.f32 %v2127, %v568
    %v2161 = vmul.f32 %v2131, %v556
    %v2162 = vmul.f32 %v2131, %v560
    %v2163 = vmul.f32 %v2131, %v564
    %v2164 = vmul.f32 %v2131, %v568
    %v2165 = vmul.f32 %v2135, %v556
    %v2166 = vmul.f32 %v2135, %v560
    %v2167 = vmul.f32 %v2135, %v564
    %v2168 = vmul.f32 %v2135, %v568
    %v2169 = vmul.f32 %v2139, %v556
    %v2170 = vmul.f32 %v2139, %v560
    %v2171 = vmul.f32 %v2139, %v564
    %v2172 = vmul.f32 %v2139, %v568
    %v2173 = vadd.f32 %v2077, %v2141
    %v2174 = vadd.f32 %v2078, %v2142
    %v2175 = vadd.f32 %v2079, %v2143
    %v2176 = vadd.f32 %v2080, %v2144
    %v2177 = vadd.f32 %v2081, %v2145
    %v2178 = vadd.f32 %v2082, %v2146
    %v2179 = vadd.f32 %v2083, %v2147
    %v2180 = vadd.f32 %v2084, %v2148
    %v2181 = vadd.f32 %v2085, %v2149
    %v2182 = vadd.f32 %v2086, %v2150
    %v2183 = vadd.f32 %v2087, %v2151
    %v2184 = vadd.f32 %v2088, %v2152
    %v2185 = vadd.f32 %v2089, %v2153
    %v2186 = vadd.f32 %v2090, %v2154
    %v2187 = vadd.f32 %v2091, %v2155
    %v2188 = vadd.f32 %v2092, %v2156
    %v2189 = vadd.f32 %v2093, %v2157
    %v2190 = vadd.f32 %v2094, %v2158
    %v2191 = vadd.f32 %v2095, %v2159
    %v2192 = vadd.f32 %v2096, %v2160
    %v2193 = vadd.f32 %v2097, %v2161
    %v2194 = vadd.f32 %v2098, %v2162
    %v2195 = vadd.f32 %v2099, %v2163
    %v2196 = vadd.f32 %v2100, %v2164
    %v2197 = vadd.f32 %v2101, %v2165
    %v2198 = vadd.f32 %v2102, %v2166
    %v2199 = vadd.f32 %v2103, %v2167
    %v2200 = vadd.f32 %v2104, %v2168
    %v2201 = vadd.f32 %v2105, %v2169
    %v2202 = vadd.f32 %v2106, %v2170
    %v2203 = vadd.f32 %v2107, %v2171
    %v2204 = vadd.f32 %v2108, %v2172
    %v2205 = vmax.f32 %v2173, 0.0
    %v2206 = vmax.f32 %v2174, 0.0
    %v2207 = vmax.f32 %v2175, 0.0
    %v2208 = vmax.f32 %v2176, 0.0
    %v2209 = vmax.f32 %v2177, 0.0
    %v2210 = vmax.f32 %v2178, 0.0
    %v2211 = vmax.f32 %v2179, 0.0
    %v2212 = vmax.f32 %v2180, 0.0
    %v2213 = vmax.f32 %v2181, 0.0
    %v2214 = vmax.f32 %v2182, 0.0
    %v2215 = vmax.f32 %v2183, 0.0
    %v2216 = vmax.f32 %v2184, 0.0
    %v2217 = vmax.f32 %v2185, 0.0
    %v2218 = vmax.f32 %v2186, 0.0
    %v2219 = vmax.f32 %v2187, 0.0
    %v2220 = vmax.f32 %v2188, 0.0
    %v2221 = vmax.f32 %v2189, 0.0
    %v2222 = vmax.f32 %v2190, 0.0
    %v2223 = vmax.f32 %v2191, 0.0
    %v2224 = vmax.f32 %v2192, 0.0
    %v2225 = vmax.f32 %v2193, 0.0
    %v2226 = vmax.f32 %v2194, 0.0
    %v2227 = vmax.f32 %v2195, 0.0
    %v2228 = vmax.f32 %v2196, 0.0
    %v2229 = vmax.f32 %v2197, 0.0
    %v2230 = vmax.f32 %v2198, 0.0
    %v2231 = vmax.f32 %v2199, 0.0
    %v2232 = vmax.f32 %v2200, 0.0
    %v2233 = vmax.f32 %v2201, 0.0
    %v2234 = vmax.f32 %v2202, 0.0
    %v2235 = vmax.f32 %v2203, 0.0
    %v2236 = vmax.f32 %v2204, 0.0
    %v2237 = vadd.f32 %v2205, %v2209
    %v2238 = vadd.f32 %v2237, %v2213
    %v2239 = vadd.f32 %v2238, %v2217
    %v2240 = vadd.f32 %v2239, %v2221
    %v2241 = vadd.f32 %v2240, %v2225
    %v2242 = vadd.f32 %v2241, %v2229
    %v2243 = vadd.f32 %v2242, %v2233
    %v2244 = vrot.slane %v2243, 4
    %v2245 = vadd.f32 %v2243, %v2244
    %v2246 = vrot.slane %v2245, 2
    %v2247 = vadd.f32 %v2245, %v2246
    %v2248 = vrot.slane %v2247, 1
    %v2249 = vadd.f32 %v2247, %v2248
    %v2250 = vadd.f32 %v2206, %v2210
    %v2251 = vadd.f32 %v2250, %v2214
    %v2252 = vadd.f32 %v2251, %v2218
    %v2253 = vadd.f32 %v2252, %v2222
    %v2254 = vadd.f32 %v2253, %v2226
    %v2255 = vadd.f32 %v2254, %v2230
    %v2256 = vadd.f32 %v2255, %v2234
    %v2257 = vrot.slane %v2256, 4
    %v2258 = vadd.f32 %v2256, %v2257
    %v2259 = vrot.slane %v2258, 2
    %v2260 = vadd.f32 %v2258, %v2259
    %v2261 = vrot.slane %v2260, 1
    %v2262 = vadd.f32 %v2260, %v2261
    %v2263 = vadd.f32 %v2207, %v2211
    %v2264 = vadd.f32 %v2263, %v2215
    %v2265 = vadd.f32 %v2264, %v2219
    %v2266 = vadd.f32 %v2265, %v2223
    %v2267 = vadd.f32 %v2266, %v2227
    %v2268 = vadd.f32 %v2267, %v2231
    %v2269 = vadd.f32 %v2268, %v2235
    %v2270 = vrot.slane %v2269, 4
    %v2271 = vadd.f32 %v2269, %v2270
    %v2272 = vrot.slane %v2271, 2
    %v2273 = vadd.f32 %v2271, %v2272
    %v2274 = vrot.slane %v2273, 1
    %v2275 = vadd.f32 %v2273, %v2274
    %v2276 = vadd.f32 %v2208, %v2212
    %v2277 = vadd.f32 %v2276, %v2216
    %v2278 = vadd.f32 %v2277, %v2220
    %v2279 = vadd.f32 %v2278, %v2224
    %v2280 = vadd.f32 %v2279, %v2228
    %v2281 = vadd.f32 %v2280, %v2232
    %v2282 = vadd.f32 %v2281, %v2236
    %v2283 = vrot.slane %v2282, 4
    %v2284 = vadd.f32 %v2282, %v2283
    %v2285 = vrot.slane %v2284, 2
    %v2286 = vadd.f32 %v2284, %v2285
    %v2287 = vrot.slane %v2286, 1
    %v2288 = vadd.f32 %v2286, %v2287
    %v2289 = vadd.f32 %v2249, 0.0
    %v2290 = vadd.f32 %v2262, 0.0
    %v2291 = vadd.f32 %v2275, 0.0
    %v2292 = vadd.f32 %v2288, 0.0
    %v2293 = vld [vmem:[%s0 + $0x140] sm:$0xff]
    %v2294 = vld [vmem:[%s0 + $0x148] sm:$0xff]
    %v2295 = vld [vmem:[%s0 + $0x150] sm:$0xff]
    %v2296 = vld [vmem:[%s0 + $0x158] sm:$0xff]
    %v2297 = vld [vmem:[%s0 + $0x160] sm:$0xff]
    %v2298 = vld [vmem:[%s0 + $0x168] sm:$0xff]
    %v2299 = vld [vmem:[%s0 + $0x170] sm:$0xff]
    %v2300 = vld [vmem:[%s0 + $0x178] sm:$0xff]
    %2302 = vset.pattern.permute.xlu0 0
    %2303 = vperm.xlu0 %2302, %v2293
    %v2304 = vpop.permute.xlu0 %2303
    %2307 = vset.pattern.permute.xlu0 0
    %2308 = vperm.xlu0 %2307, %v2294
    %v2309 = vpop.permute.xlu0 %2308
    %2312 = vset.pattern.permute.xlu0 0
    %2313 = vperm.xlu0 %2312, %v2295
    %v2314 = vpop.permute.xlu0 %2313
    %2317 = vset.pattern.permute.xlu0 0
    %2318 = vperm.xlu0 %2317, %v2296
    %v2319 = vpop.permute.xlu0 %2318
    %2322 = vset.pattern.permute.xlu0 0
    %2323 = vperm.xlu0 %2322, %v2297
    %v2324 = vpop.permute.xlu0 %2323
    %2327 = vset.pattern.permute.xlu0 0
    %2328 = vperm.xlu0 %2327, %v2298
    %v2329 = vpop.permute.xlu0 %2328
    %2332 = vset.pattern.permute.xlu0 0
    %2333 = vperm.xlu0 %2332, %v2299
    %v2334 = vpop.permute.xlu0 %2333
    %2337 = vset.pattern.permute.xlu0 0
    %2338 = vperm.xlu0 %2337, %v2300
    %v2339 = vpop.permute.xlu0 %2338
    %v2341 = vmul.f32 %v2304, %v271
    %v2342 = vmul.f32 %v2304, %v275
    %v2343 = vmul.f32 %v2304, %v279
    %v2344 = vmul.f32 %v2304, %v283
    %v2345 = vmul.f32 %v2309, %v271
    %v2346 = vmul.f32 %v2309, %v275
    %v2347 = vmul.f32 %v2309, %v279
    %v2348 = vmul.f32 %v2309, %v283
    %v2349 = vmul.f32 %v2314, %v271
    %v2350 = vmul.f32 %v2314, %v275
    %v2351 = vmul.f32 %v2314, %v279
    %v2352 = vmul.f32 %v2314, %v283
    %v2353 = vmul.f32 %v2319, %v271
    %v2354 = vmul.f32 %v2319, %v275
    %v2355 = vmul.f32 %v2319, %v279
    %v2356 = vmul.f32 %v2319, %v283
    %v2357 = vmul.f32 %v2324, %v271
    %v2358 = vmul.f32 %v2324, %v275
    %v2359 = vmul.f32 %v2324, %v279
    %v2360 = vmul.f32 %v2324, %v283
    %v2361 = vmul.f32 %v2329, %v271
    %v2362 = vmul.f32 %v2329, %v275
    %v2363 = vmul.f32 %v2329, %v279
    %v2364 = vmul.f32 %v2329, %v283
    %v2365 = vmul.f32 %v2334, %v271
    %v2366 = vmul.f32 %v2334, %v275
    %v2367 = vmul.f32 %v2334, %v279
    %v2368 = vmul.f32 %v2334, %v283
    %v2369 = vmul.f32 %v2339, %v271
    %v2370 = vmul.f32 %v2339, %v275
    %v2371 = vmul.f32 %v2339, %v279
    %v2372 = vmul.f32 %v2339, %v283
    %v2373 = vadd.f32 %v320, %v2341
    %v2374 = vadd.f32 %v324, %v2342
    %v2375 = vadd.f32 %v328, %v2343
    %v2376 = vadd.f32 %v332, %v2344
    %v2377 = vadd.f32 %v320, %v2345
    %v2378 = vadd.f32 %v324, %v2346
    %v2379 = vadd.f32 %v328, %v2347
    %v2380 = vadd.f32 %v332, %v2348
    %v2381 = vadd.f32 %v320, %v2349
    %v2382 = vadd.f32 %v324, %v2350
    %v2383 = vadd.f32 %v328, %v2351
    %v2384 = vadd.f32 %v332, %v2352
    %v2385 = vadd.f32 %v320, %v2353
    %v2386 = vadd.f32 %v324, %v2354
    %v2387 = vadd.f32 %v328, %v2355
    %v2388 = vadd.f32 %v332, %v2356
    %v2389 = vadd.f32 %v320, %v2357
    %v2390 = vadd.f32 %v324, %v2358
    %v2391 = vadd.f32 %v328, %v2359
    %v2392 = vadd.f32 %v332, %v2360
    %v2393 = vadd.f32 %v320, %v2361
    %v2394 = vadd.f32 %v324, %v2362
    %v2395 = vadd.f32 %v328, %v2363
    %v2396 = vadd.f32 %v332, %v2364
    %v2397 = vadd.f32 %v320, %v2365
    %v2398 = vadd.f32 %v324, %v2366
    %v2399 = vadd.f32 %v328, %v2367
    %v2400 = vadd.f32 %v332, %v2368
    %v2401 = vadd.f32 %v320, %v2369
    %v2402 = vadd.f32 %v324, %v2370
    %v2403 = vadd.f32 %v328, %v2371
    %v2404 = vadd.f32 %v332, %v2372
    %2405 = vset.pattern.permute.xlu0 1
    %2406 = vperm.xlu0 %2405, %v2293
    %v2407 = vpop.permute.xlu0 %2406
    %2409 = vset.pattern.permute.xlu0 1
    %2410 = vperm.xlu0 %2409, %v2294
    %v2411 = vpop.permute.xlu0 %2410
    %2413 = vset.pattern.permute.xlu0 1
    %2414 = vperm.xlu0 %2413, %v2295
    %v2415 = vpop.permute.xlu0 %2414
    %2417 = vset.pattern.permute.xlu0 1
    %2418 = vperm.xlu0 %2417, %v2296
    %v2419 = vpop.permute.xlu0 %2418
    %2421 = vset.pattern.permute.xlu0 1
    %2422 = vperm.xlu0 %2421, %v2297
    %v2423 = vpop.permute.xlu0 %2422
    %2425 = vset.pattern.permute.xlu0 1
    %2426 = vperm.xlu0 %2425, %v2298
    %v2427 = vpop.permute.xlu0 %2426
    %2429 = vset.pattern.permute.xlu0 1
    %2430 = vperm.xlu0 %2429, %v2299
    %v2431 = vpop.permute.xlu0 %2430
    %2433 = vset.pattern.permute.xlu0 1
    %2434 = vperm.xlu0 %2433, %v2300
    %v2435 = vpop.permute.xlu0 %2434
    %v2437 = vmul.f32 %v2407, %v424
    %v2438 = vmul.f32 %v2407, %v428
    %v2439 = vmul.f32 %v2407, %v432
    %v2440 = vmul.f32 %v2407, %v436
    %v2441 = vmul.f32 %v2411, %v424
    %v2442 = vmul.f32 %v2411, %v428
    %v2443 = vmul.f32 %v2411, %v432
    %v2444 = vmul.f32 %v2411, %v436
    %v2445 = vmul.f32 %v2415, %v424
    %v2446 = vmul.f32 %v2415, %v428
    %v2447 = vmul.f32 %v2415, %v432
    %v2448 = vmul.f32 %v2415, %v436
    %v2449 = vmul.f32 %v2419, %v424
    %v2450 = vmul.f32 %v2419, %v428
    %v2451 = vmul.f32 %v2419, %v432
    %v2452 = vmul.f32 %v2419, %v436
    %v2453 = vmul.f32 %v2423, %v424
    %v2454 = vmul.f32 %v2423, %v428
    %v2455 = vmul.f32 %v2423, %v432
    %v2456 = vmul.f32 %v2423, %v436
    %v2457 = vmul.f32 %v2427, %v424
    %v2458 = vmul.f32 %v2427, %v428
    %v2459 = vmul.f32 %v2427, %v432
    %v2460 = vmul.f32 %v2427, %v436
    %v2461 = vmul.f32 %v2431, %v424
    %v2462 = vmul.f32 %v2431, %v428
    %v2463 = vmul.f32 %v2431, %v432
    %v2464 = vmul.f32 %v2431, %v436
    %v2465 = vmul.f32 %v2435, %v424
    %v2466 = vmul.f32 %v2435, %v428
    %v2467 = vmul.f32 %v2435, %v432
    %v2468 = vmul.f32 %v2435, %v436
    %v2469 = vadd.f32 %v2373, %v2437
    %v2470 = vadd.f32 %v2374, %v2438
    %v2471 = vadd.f32 %v2375, %v2439
    %v2472 = vadd.f32 %v2376, %v2440
    %v2473 = vadd.f32 %v2377, %v2441
    %v2474 = vadd.f32 %v2378, %v2442
    %v2475 = vadd.f32 %v2379, %v2443
    %v2476 = vadd.f32 %v2380, %v2444
    %v2477 = vadd.f32 %v2381, %v2445
    %v2478 = vadd.f32 %v2382, %v2446
    %v2479 = vadd.f32 %v2383, %v2447
    %v2480 = vadd.f32 %v2384, %v2448
    %v2481 = vadd.f32 %v2385, %v2449
    %v2482 = vadd.f32 %v2386, %v2450
    %v2483 = vadd.f32 %v2387, %v2451
    %v2484 = vadd.f32 %v2388, %v2452
    %v2485 = vadd.f32 %v2389, %v2453
    %v2486 = vadd.f32 %v2390, %v2454
    %v2487 = vadd.f32 %v2391, %v2455
    %v2488 = vadd.f32 %v2392, %v2456
    %v2489 = vadd.f32 %v2393, %v2457
    %v2490 = vadd.f32 %v2394, %v2458
    %v2491 = vadd.f32 %v2395, %v2459
    %v2492 = vadd.f32 %v2396, %v2460
    %v2493 = vadd.f32 %v2397, %v2461
    %v2494 = vadd.f32 %v2398, %v2462
    %v2495 = vadd.f32 %v2399, %v2463
    %v2496 = vadd.f32 %v2400, %v2464
    %v2497 = vadd.f32 %v2401, %v2465
    %v2498 = vadd.f32 %v2402, %v2466
    %v2499 = vadd.f32 %v2403, %v2467
    %v2500 = vadd.f32 %v2404, %v2468
    %2501 = vset.pattern.permute.xlu0 2
    %2502 = vperm.xlu0 %2501, %v2293
    %v2503 = vpop.permute.xlu0 %2502
    %2505 = vset.pattern.permute.xlu0 2
    %2506 = vperm.xlu0 %2505, %v2294
    %v2507 = vpop.permute.xlu0 %2506
    %2509 = vset.pattern.permute.xlu0 2
    %2510 = vperm.xlu0 %2509, %v2295
    %v2511 = vpop.permute.xlu0 %2510
    %2513 = vset.pattern.permute.xlu0 2
    %2514 = vperm.xlu0 %2513, %v2296
    %v2515 = vpop.permute.xlu0 %2514
    %2517 = vset.pattern.permute.xlu0 2
    %2518 = vperm.xlu0 %2517, %v2297
    %v2519 = vpop.permute.xlu0 %2518
    %2521 = vset.pattern.permute.xlu0 2
    %2522 = vperm.xlu0 %2521, %v2298
    %v2523 = vpop.permute.xlu0 %2522
    %2525 = vset.pattern.permute.xlu0 2
    %2526 = vperm.xlu0 %2525, %v2299
    %v2527 = vpop.permute.xlu0 %2526
    %2529 = vset.pattern.permute.xlu0 2
    %2530 = vperm.xlu0 %2529, %v2300
    %v2531 = vpop.permute.xlu0 %2530
    %v2533 = vmul.f32 %v2503, %v556
    %v2534 = vmul.f32 %v2503, %v560
    %v2535 = vmul.f32 %v2503, %v564
    %v2536 = vmul.f32 %v2503, %v568
    %v2537 = vmul.f32 %v2507, %v556
    %v2538 = vmul.f32 %v2507, %v560
    %v2539 = vmul.f32 %v2507, %v564
    %v2540 = vmul.f32 %v2507, %v568
    %v2541 = vmul.f32 %v2511, %v556
    %v2542 = vmul.f32 %v2511, %v560
    %v2543 = vmul.f32 %v2511, %v564
    %v2544 = vmul.f32 %v2511, %v568
    %v2545 = vmul.f32 %v2515, %v556
    %v2546 = vmul.f32 %v2515, %v560
    %v2547 = vmul.f32 %v2515, %v564
    %v2548 = vmul.f32 %v2515, %v568
    %v2549 = vmul.f32 %v2519, %v556
    %v2550 = vmul.f32 %v2519, %v560
    %v2551 = vmul.f32 %v2519, %v564
    %v2552 = vmul.f32 %v2519, %v568
    %v2553 = vmul.f32 %v2523, %v556
    %v2554 = vmul.f32 %v2523, %v560
    %v2555 = vmul.f32 %v2523, %v564
    %v2556 = vmul.f32 %v2523, %v568
    %v2557 = vmul.f32 %v2527, %v556
    %v2558 = vmul.f32 %v2527, %v560
    %v2559 = vmul.f32 %v2527, %v564
    %v2560 = vmul.f32 %v2527, %v568
    %v2561 = vmul.f32 %v2531, %v556
    %v2562 = vmul.f32 %v2531, %v560
    %v2563 = vmul.f32 %v2531, %v564
    %v2564 = vmul.f32 %v2531, %v568
    %v2565 = vadd.f32 %v2469, %v2533
    %v2566 = vadd.f32 %v2470, %v2534
    %v2567 = vadd.f32 %v2471, %v2535
    %v2568 = vadd.f32 %v2472, %v2536
    %v2569 = vadd.f32 %v2473, %v2537
    %v2570 = vadd.f32 %v2474, %v2538
    %v2571 = vadd.f32 %v2475, %v2539
    %v2572 = vadd.f32 %v2476, %v2540
    %v2573 = vadd.f32 %v2477, %v2541
    %v2574 = vadd.f32 %v2478, %v2542
    %v2575 = vadd.f32 %v2479, %v2543
    %v2576 = vadd.f32 %v2480, %v2544
    %v2577 = vadd.f32 %v2481, %v2545
    %v2578 = vadd.f32 %v2482, %v2546
    %v2579 = vadd.f32 %v2483, %v2547
    %v2580 = vadd.f32 %v2484, %v2548
    %v2581 = vadd.f32 %v2485, %v2549
    %v2582 = vadd.f32 %v2486, %v2550
    %v2583 = vadd.f32 %v2487, %v2551
    %v2584 = vadd.f32 %v2488, %v2552
    %v2585 = vadd.f32 %v2489, %v2553
    %v2586 = vadd.f32 %v2490, %v2554
    %v2587 = vadd.f32 %v2491, %v2555
    %v2588 = vadd.f32 %v2492, %v2556
    %v2589 = vadd.f32 %v2493, %v2557
    %v2590 = vadd.f32 %v2494, %v2558
    %v2591 = vadd.f32 %v2495, %v2559
    %v2592 = vadd.f32 %v2496, %v2560
    %v2593 = vadd.f32 %v2497, %v2561
    %v2594 = vadd.f32 %v2498, %v2562
    %v2595 = vadd.f32 %v2499, %v2563
    %v2596 = vadd.f32 %v2500, %v2564
    %v2597 = vmax.f32 %v2565, 0.0
    %v2598 = vmax.f32 %v2566, 0.0
    %v2599 = vmax.f32 %v2567, 0.0
    %v2600 = vmax.f32 %v2568, 0.0
    %v2601 = vmax.f32 %v2569, 0.0
    %v2602 = vmax.f32 %v2570, 0.0
    %v2603 = vmax.f32 %v2571, 0.0
    %v2604 = vmax.f32 %v2572, 0.0
    %v2605 = vmax.f32 %v2573, 0.0
    %v2606 = vmax.f32 %v2574, 0.0
    %v2607 = vmax.f32 %v2575, 0.0
    %v2608 = vmax.f32 %v2576, 0.0
    %v2609 = vmax.f32 %v2577, 0.0
    %v2610 = vmax.f32 %v2578, 0.0
    %v2611 = vmax.f32 %v2579, 0.0
    %v2612 = vmax.f32 %v2580, 0.0
    %v2613 = vmax.f32 %v2581, 0.0
    %v2614 = vmax.f32 %v2582, 0.0
    %v2615 = vmax.f32 %v2583, 0.0
    %v2616 = vmax.f32 %v2584, 0.0
    %v2617 = vmax.f32 %v2585, 0.0
    %v2618 = vmax.f32 %v2586, 0.0
    %v2619 = vmax.f32 %v2587, 0.0
    %v2620 = vmax.f32 %v2588, 0.0
    %v2621 = vmax.f32 %v2589, 0.0
    %v2622 = vmax.f32 %v2590, 0.0
    %v2623 = vmax.f32 %v2591, 0.0
    %v2624 = vmax.f32 %v2592, 0.0
    %v2625 = vmax.f32 %v2593, 0.0
    %v2626 = vmax.f32 %v2594, 0.0
    %v2627 = vmax.f32 %v2595, 0.0
    %v2628 = vmax.f32 %v2596, 0.0
    %v2629 = vadd.f32 %v2597, %v2601
    %v2630 = vadd.f32 %v2629, %v2605
    %v2631 = vadd.f32 %v2630, %v2609
    %v2632 = vadd.f32 %v2631, %v2613
    %v2633 = vadd.f32 %v2632, %v2617
    %v2634 = vadd.f32 %v2633, %v2621
    %v2635 = vadd.f32 %v2634, %v2625
    %v2636 = vrot.slane %v2635, 4
    %v2637 = vadd.f32 %v2635, %v2636
    %v2638 = vrot.slane %v2637, 2
    %v2639 = vadd.f32 %v2637, %v2638
    %v2640 = vrot.slane %v2639, 1
    %v2641 = vadd.f32 %v2639, %v2640
    %v2642 = vadd.f32 %v2598, %v2602
    %v2643 = vadd.f32 %v2642, %v2606
    %v2644 = vadd.f32 %v2643, %v2610
    %v2645 = vadd.f32 %v2644, %v2614
    %v2646 = vadd.f32 %v2645, %v2618
    %v2647 = vadd.f32 %v2646, %v2622
    %v2648 = vadd.f32 %v2647, %v2626
    %v2649 = vrot.slane %v2648, 4
    %v2650 = vadd.f32 %v2648, %v2649
    %v2651 = vrot.slane %v2650, 2
    %v2652 = vadd.f32 %v2650, %v2651
    %v2653 = vrot.slane %v2652, 1
    %v2654 = vadd.f32 %v2652, %v2653
    %v2655 = vadd.f32 %v2599, %v2603
    %v2656 = vadd.f32 %v2655, %v2607
    %v2657 = vadd.f32 %v2656, %v2611
    %v2658 = vadd.f32 %v2657, %v2615
    %v2659 = vadd.f32 %v2658, %v2619
    %v2660 = vadd.f32 %v2659, %v2623
    %v2661 = vadd.f32 %v2660, %v2627
    %v2662 = vrot.slane %v2661, 4
    %v2663 = vadd.f32 %v2661, %v2662
    %v2664 = vrot.slane %v2663, 2
    %v2665 = vadd.f32 %v2663, %v2664
    %v2666 = vrot.slane %v2665, 1
    %v2667 = vadd.f32 %v2665, %v2666
    %v2668 = vadd.f32 %v2600, %v2604
    %v2669 = vadd.f32 %v2668, %v2608
    %v2670 = vadd.f32 %v2669, %v2612
    %v2671 = vadd.f32 %v2670, %v2616
    %v2672 = vadd.f32 %v2671, %v2620
    %v2673 = vadd.f32 %v2672, %v2624
    %v2674 = vadd.f32 %v2673, %v2628
    %v2675 = vrot.slane %v2674, 4
    %v2676 = vadd.f32 %v2674, %v2675
    %v2677 = vrot.slane %v2676, 2
    %v2678 = vadd.f32 %v2676, %v2677
    %v2679 = vrot.slane %v2678, 1
    %v2680 = vadd.f32 %v2678, %v2679
    %v2681 = vadd.f32 %v2289, %v2641
    %v2682 = vadd.f32 %v2290, %v2654
    %v2683 = vadd.f32 %v2291, %v2667
    %v2684 = vadd.f32 %v2292, %v2680
    %v2685 = vld [vmem:[%s0 + $0x180] sm:$0xff]
    %v2686 = vld [vmem:[%s0 + $0x188] sm:$0xff]
    %v2687 = vld [vmem:[%s0 + $0x190] sm:$0xff]
    %v2688 = vld [vmem:[%s0 + $0x198] sm:$0xff]
    %v2689 = vld [vmem:[%s0 + $0x1a0] sm:$0xff]
    %v2690 = vld [vmem:[%s0 + $0x1a8] sm:$0xff]
    %v2691 = vld [vmem:[%s0 + $0x1b0] sm:$0xff]
    %v2692 = vld [vmem:[%s0 + $0x1b8] sm:$0xff]
    %2694 = vset.pattern.permute.xlu0 0
    %2695 = vperm.xlu0 %2694, %v2685
    %v2696 = vpop.permute.xlu0 %2695
    %2699 = vset.pattern.permute.xlu0 0
    %2700 = vperm.xlu0 %2699, %v2686
    %v2701 = vpop.permute.xlu0 %2700
    %2704 = vset.pattern.permute.xlu0 0
    %2705 = vperm.xlu0 %2704, %v2687
    %v2706 = vpop.permute.xlu0 %2705
    %2709 = vset.pattern.permute.xlu0 0
    %2710 = vperm.xlu0 %2709, %v2688
    %v2711 = vpop.permute.xlu0 %2710
    %2714 = vset.pattern.permute.xlu0 0
    %2715 = vperm.xlu0 %2714, %v2689
    %v2716 = vpop.permute.xlu0 %2715
    %2719 = vset.pattern.permute.xlu0 0
    %2720 = vperm.xlu0 %2719, %v2690
    %v2721 = vpop.permute.xlu0 %2720
    %2724 = vset.pattern.permute.xlu0 0
    %2725 = vperm.xlu0 %2724, %v2691
    %v2726 = vpop.permute.xlu0 %2725
    %2729 = vset.pattern.permute.xlu0 0
    %2730 = vperm.xlu0 %2729, %v2692
    %v2731 = vpop.permute.xlu0 %2730
    %v2733 = vmul.f32 %v2696, %v271
    %v2734 = vmul.f32 %v2696, %v275
    %v2735 = vmul.f32 %v2696, %v279
    %v2736 = vmul.f32 %v2696, %v283
    %v2737 = vmul.f32 %v2701, %v271
    %v2738 = vmul.f32 %v2701, %v275
    %v2739 = vmul.f32 %v2701, %v279
    %v2740 = vmul.f32 %v2701, %v283
    %v2741 = vmul.f32 %v2706, %v271
    %v2742 = vmul.f32 %v2706, %v275
    %v2743 = vmul.f32 %v2706, %v279
    %v2744 = vmul.f32 %v2706, %v283
    %v2745 = vmul.f32 %v2711, %v271
    %v2746 = vmul.f32 %v2711, %v275
    %v2747 = vmul.f32 %v2711, %v279
    %v2748 = vmul.f32 %v2711, %v283
    %v2749 = vmul.f32 %v2716, %v271
    %v2750 = vmul.f32 %v2716, %v275
    %v2751 = vmul.f32 %v2716, %v279
    %v2752 = vmul.f32 %v2716, %v283
    %v2753 = vmul.f32 %v2721, %v271
    %v2754 = vmul.f32 %v2721, %v275
    %v2755 = vmul.f32 %v2721, %v279
    %v2756 = vmul.f32 %v2721, %v283
    %v2757 = vmul.f32 %v2726, %v271
    %v2758 = vmul.f32 %v2726, %v275
    %v2759 = vmul.f32 %v2726, %v279
    %v2760 = vmul.f32 %v2726, %v283
    %v2761 = vmul.f32 %v2731, %v271
    %v2762 = vmul.f32 %v2731, %v275
    %v2763 = vmul.f32 %v2731, %v279
    %v2764 = vmul.f32 %v2731, %v283
    %v2765 = vadd.f32 %v320, %v2733
    %v2766 = vadd.f32 %v324, %v2734
    %v2767 = vadd.f32 %v328, %v2735
    %v2768 = vadd.f32 %v332, %v2736
    %v2769 = vadd.f32 %v320, %v2737
    %v2770 = vadd.f32 %v324, %v2738
    %v2771 = vadd.f32 %v328, %v2739
    %v2772 = vadd.f32 %v332, %v2740
    %v2773 = vadd.f32 %v320, %v2741
    %v2774 = vadd.f32 %v324, %v2742
    %v2775 = vadd.f32 %v328, %v2743
    %v2776 = vadd.f32 %v332, %v2744
    %v2777 = vadd.f32 %v320, %v2745
    %v2778 = vadd.f32 %v324, %v2746
    %v2779 = vadd.f32 %v328, %v2747
    %v2780 = vadd.f32 %v332, %v2748
    %v2781 = vadd.f32 %v320, %v2749
    %v2782 = vadd.f32 %v324, %v2750
    %v2783 = vadd.f32 %v328, %v2751
    %v2784 = vadd.f32 %v332, %v2752
    %v2785 = vadd.f32 %v320, %v2753
    %v2786 = vadd.f32 %v324, %v2754
    %v2787 = vadd.f32 %v328, %v2755
    %v2788 = vadd.f32 %v332, %v2756
    %v2789 = vadd.f32 %v320, %v2757
    %v2790 = vadd.f32 %v324, %v2758
    %v2791 = vadd.f32 %v328, %v2759
    %v2792 = vadd.f32 %v332, %v2760
    %v2793 = vadd.f32 %v320, %v2761
    %v2794 = vadd.f32 %v324, %v2762
    %v2795 = vadd.f32 %v328, %v2763
    %v2796 = vadd.f32 %v332, %v2764
    %2797 = vset.pattern.permute.xlu0 1
    %2798 = vperm.xlu0 %2797, %v2685
    %v2799 = vpop.permute.xlu0 %2798
    %2801 = vset.pattern.permute.xlu0 1
    %2802 = vperm.xlu0 %2801, %v2686
    %v2803 = vpop.permute.xlu0 %2802
    %2805 = vset.pattern.permute.xlu0 1
    %2806 = vperm.xlu0 %2805, %v2687
    %v2807 = vpop.permute.xlu0 %2806
    %2809 = vset.pattern.permute.xlu0 1
    %2810 = vperm.xlu0 %2809, %v2688
    %v2811 = vpop.permute.xlu0 %2810
    %2813 = vset.pattern.permute.xlu0 1
    %2814 = vperm.xlu0 %2813, %v2689
    %v2815 = vpop.permute.xlu0 %2814
    %2817 = vset.pattern.permute.xlu0 1
    %2818 = vperm.xlu0 %2817, %v2690
    %v2819 = vpop.permute.xlu0 %2818
    %2821 = vset.pattern.permute.xlu0 1
    %2822 = vperm.xlu0 %2821, %v2691
    %v2823 = vpop.permute.xlu0 %2822
    %2825 = vset.pattern.permute.xlu0 1
    %2826 = vperm.xlu0 %2825, %v2692
    %v2827 = vpop.permute.xlu0 %2826
    %v2829 = vmul.f32 %v2799, %v424
    %v2830 = vmul.f32 %v2799, %v428
    %v2831 = vmul.f32 %v2799, %v432
    %v2832 = vmul.f32 %v2799, %v436
    %v2833 = vmul.f32 %v2803, %v424
    %v2834 = vmul.f32 %v2803, %v428
    %v2835 = vmul.f32 %v2803, %v432
    %v2836 = vmul.f32 %v2803, %v436
    %v2837 = vmul.f32 %v2807, %v424
    %v2838 = vmul.f32 %v2807, %v428
    %v2839 = vmul.f32 %v2807, %v432
    %v2840 = vmul.f32 %v2807, %v436
    %v2841 = vmul.f32 %v2811, %v424
    %v2842 = vmul.f32 %v2811, %v428
    %v2843 = vmul.f32 %v2811, %v432
    %v2844 = vmul.f32 %v2811, %v436
    %v2845 = vmul.f32 %v2815, %v424
    %v2846 = vmul.f32 %v2815, %v428
    %v2847 = vmul.f32 %v2815, %v432
    %v2848 = vmul.f32 %v2815, %v436
    %v2849 = vmul.f32 %v2819, %v424
    %v2850 = vmul.f32 %v2819, %v428
    %v2851 = vmul.f32 %v2819, %v432
    %v2852 = vmul.f32 %v2819, %v436
    %v2853 = vmul.f32 %v2823, %v424
    %v2854 = vmul.f32 %v2823, %v428
    %v2855 = vmul.f32 %v2823, %v432
    %v2856 = vmul.f32 %v2823, %v436
    %v2857 = vmul.f32 %v2827, %v424
    %v2858 = vmul.f32 %v2827, %v428
    %v2859 = vmul.f32 %v2827, %v432
    %v2860 = vmul.f32 %v2827, %v436
    %v2861 = vadd.f32 %v2765, %v2829
    %v2862 = vadd.f32 %v2766, %v2830
    %v2863 = vadd.f32 %v2767, %v2831
    %v2864 = vadd.f32 %v2768, %v2832
    %v2865 = vadd.f32 %v2769, %v2833
    %v2866 = vadd.f32 %v2770, %v2834
    %v2867 = vadd.f32 %v2771, %v2835
    %v2868 = vadd.f32 %v2772, %v2836
    %v2869 = vadd.f32 %v2773, %v2837
    %v2870 = vadd.f32 %v2774, %v2838
    %v2871 = vadd.f32 %v2775, %v2839
    %v2872 = vadd.f32 %v2776, %v2840
    %v2873 = vadd.f32 %v2777, %v2841
    %v2874 = vadd.f32 %v2778, %v2842
    %v2875 = vadd.f32 %v2779, %v2843
    %v2876 = vadd.f32 %v2780, %v2844
    %v2877 = vadd.f32 %v2781, %v2845
    %v2878 = vadd.f32 %v2782, %v2846
    %v2879 = vadd.f32 %v2783, %v2847
    %v2880 = vadd.f32 %v2784, %v2848
    %v2881 = vadd.f32 %v2785, %v2849
    %v2882 = vadd.f32 %v2786, %v2850
    %v2883 = vadd.f32 %v2787, %v2851
    %v2884 = vadd.f32 %v2788, %v2852
    %v2885 = vadd.f32 %v2789, %v2853
    %v2886 = vadd.f32 %v2790, %v2854
    %v2887 = vadd.f32 %v2791, %v2855
    %v2888 = vadd.f32 %v2792, %v2856
    %v2889 = vadd.f32 %v2793, %v2857
    %v2890 = vadd.f32 %v2794, %v2858
    %v2891 = vadd.f32 %v2795, %v2859
    %v2892 = vadd.f32 %v2796, %v2860
    %2893 = vset.pattern.permute.xlu0 2
    %2894 = vperm.xlu0 %2893, %v2685
    %v2895 = vpop.permute.xlu0 %2894
    %2897 = vset.pattern.permute.xlu0 2
    %2898 = vperm.xlu0 %2897, %v2686
    %v2899 = vpop.permute.xlu0 %2898
    %2901 = vset.pattern.permute.xlu0 2
    %2902 = vperm.xlu0 %2901, %v2687
    %v2903 = vpop.permute.xlu0 %2902
    %2905 = vset.pattern.permute.xlu0 2
    %2906 = vperm.xlu0 %2905, %v2688
    %v2907 = vpop.permute.xlu0 %2906
    %2909 = vset.pattern.permute.xlu0 2
    %2910 = vperm.xlu0 %2909, %v2689
    %v2911 = vpop.permute.xlu0 %2910
    %2913 = vset.pattern.permute.xlu0 2
    %2914 = vperm.xlu0 %2913, %v2690
    %v2915 = vpop.permute.xlu0 %2914
    %2917 = vset.pattern.permute.xlu0 2
    %2918 = vperm.xlu0 %2917, %v2691
    %v2919 = vpop.permute.xlu0 %2918
    %2921 = vset.pattern.permute.xlu0 2
    %2922 = vperm.xlu0 %2921, %v2692
    %v2923 = vpop.permute.xlu0 %2922
    %v2925 = vmul.f32 %v2895, %v556
    %v2926 = vmul.f32 %v2895, %v560
    %v2927 = vmul.f32 %v2895, %v564
    %v2928 = vmul.f32 %v2895, %v568
    %v2929 = vmul.f32 %v2899, %v556
    %v2930 = vmul.f32 %v2899, %v560
    %v2931 = vmul.f32 %v2899, %v564
    %v2932 = vmul.f32 %v2899, %v568
    %v2933 = vmul.f32 %v2903, %v556
    %v2934 = vmul.f32 %v2903, %v560
    %v2935 = vmul.f32 %v2903, %v564
    %v2936 = vmul.f32 %v2903, %v568
    %v2937 = vmul.f32 %v2907, %v556
    %v2938 = vmul.f32 %v2907, %v560
    %v2939 = vmul.f32 %v2907, %v564
    %v2940 = vmul.f32 %v2907, %v568
    %v2941 = vmul.f32 %v2911, %v556
    %v2942 = vmul.f32 %v2911, %v560
    %v2943 = vmul.f32 %v2911, %v564
    %v2944 = vmul.f32 %v2911, %v568
    %v2945 = vmul.f32 %v2915, %v556
    %v2946 = vmul.f32 %v2915, %v560
    %v2947 = vmul.f32 %v2915, %v564
    %v2948 = vmul.f32 %v2915, %v568
    %v2949 = vmul.f32 %v2919, %v556
    %v2950 = vmul.f32 %v2919, %v560
    %v2951 = vmul.f32 %v2919, %v564
    %v2952 = vmul.f32 %v2919, %v568
    %v2953 = vmul.f32 %v2923, %v556
    %v2954 = vmul.f32 %v2923, %v560
    %v2955 = vmul.f32 %v2923, %v564
    %v2956 = vmul.f32 %v2923, %v568
    %v2957 = vadd.f32 %v2861, %v2925
    %v2958 = vadd.f32 %v2862, %v2926
    %v2959 = vadd.f32 %v2863, %v2927
    %v2960 = vadd.f32 %v2864, %v2928
    %v2961 = vadd.f32 %v2865, %v2929
    %v2962 = vadd.f32 %v2866, %v2930
    %v2963 = vadd.f32 %v2867, %v2931
    %v2964 = vadd.f32 %v2868, %v2932
    %v2965 = vadd.f32 %v2869, %v2933
    %v2966 = vadd.f32 %v2870, %v2934
    %v2967 = vadd.f32 %v2871, %v2935
    %v2968 = vadd.f32 %v2872, %v2936
    %v2969 = vadd.f32 %v2873, %v2937
    %v2970 = vadd.f32 %v2874, %v2938
    %v2971 = vadd.f32 %v2875, %v2939
    %v2972 = vadd.f32 %v2876, %v2940
    %v2973 = vadd.f32 %v2877, %v2941
    %v2974 = vadd.f32 %v2878, %v2942
    %v2975 = vadd.f32 %v2879, %v2943
    %v2976 = vadd.f32 %v2880, %v2944
    %v2977 = vadd.f32 %v2881, %v2945
    %v2978 = vadd.f32 %v2882, %v2946
    %v2979 = vadd.f32 %v2883, %v2947
    %v2980 = vadd.f32 %v2884, %v2948
    %v2981 = vadd.f32 %v2885, %v2949
    %v2982 = vadd.f32 %v2886, %v2950
    %v2983 = vadd.f32 %v2887, %v2951
    %v2984 = vadd.f32 %v2888, %v2952
    %v2985 = vadd.f32 %v2889, %v2953
    %v2986 = vadd.f32 %v2890, %v2954
    %v2987 = vadd.f32 %v2891, %v2955
    %v2988 = vadd.f32 %v2892, %v2956
    %v2989 = vmax.f32 %v2957, 0.0
    %v2990 = vmax.f32 %v2958, 0.0
    %v2991 = vmax.f32 %v2959, 0.0
    %v2992 = vmax.f32 %v2960, 0.0
    %v2993 = vmax.f32 %v2961, 0.0
    %v2994 = vmax.f32 %v2962, 0.0
    %v2995 = vmax.f32 %v2963, 0.0
    %v2996 = vmax.f32 %v2964, 0.0
    %v2997 = vmax.f32 %v2965, 0.0
    %v2998 = vmax.f32 %v2966, 0.0
    %v2999 = vmax.f32 %v2967, 0.0
    %v3000 = vmax.f32 %v2968, 0.0
    %v3001 = vmax.f32 %v2969, 0.0
    %v3002 = vmax.f32 %v2970, 0.0
    %v3003 = vmax.f32 %v2971, 0.0
    %v3004 = vmax.f32 %v2972, 0.0
    %v3005 = vmax.f32 %v2973, 0.0
    %v3006 = vmax.f32 %v2974, 0.0
    %v3007 = vmax.f32 %v2975, 0.0
    %v3008 = vmax.f32 %v2976, 0.0
    %v3009 = vmax.f32 %v2977, 0.0
    %v3010 = vmax.f32 %v2978, 0.0
    %v3011 = vmax.f32 %v2979, 0.0
    %v3012 = vmax.f32 %v2980, 0.0
    %v3013 = vmax.f32 %v2981, 0.0
    %v3014 = vmax.f32 %v2982, 0.0
    %v3015 = vmax.f32 %v2983, 0.0
    %v3016 = vmax.f32 %v2984, 0.0
    %v3017 = vmax.f32 %v2985, 0.0
    %v3018 = vmax.f32 %v2986, 0.0
    %v3019 = vmax.f32 %v2987, 0.0
    %v3020 = vmax.f32 %v2988, 0.0
    %v3021 = vadd.f32 %v2989, %v2993
    %v3022 = vadd.f32 %v3021, %v2997
    %v3023 = vadd.f32 %v3022, %v3001
    %v3024 = vadd.f32 %v3023, %v3005
    %v3025 = vadd.f32 %v3024, %v3009
    %v3026 = vadd.f32 %v3025, %v3013
    %v3027 = vadd.f32 %v3026, %v3017
    %v3028 = vrot.slane %v3027, 4
    %v3029 = vadd.f32 %v3027, %v3028
    %v3030 = vrot.slane %v3029, 2
    %v3031 = vadd.f32 %v3029, %v3030
    %v3032 = vrot.slane %v3031, 1
    %v3033 = vadd.f32 %v3031, %v3032
    %v3034 = vadd.f32 %v2990, %v2994
    %v3035 = vadd.f32 %v3034, %v2998
    %v3036 = vadd.f32 %v3035, %v3002
    %v3037 = vadd.f32 %v3036, %v3006
    %v3038 = vadd.f32 %v3037, %v3010
    %v3039 = vadd.f32 %v3038, %v3014
    %v3040 = vadd.f32 %v3039, %v3018
    %v3041 = vrot.slane %v3040, 4
    %v3042 = vadd.f32 %v3040, %v3041
    %v3043 = vrot.slane %v3042, 2
    %v3044 = vadd.f32 %v3042, %v3043
    %v3045 = vrot.slane %v3044, 1
    %v3046 = vadd.f32 %v3044, %v3045
    %v3047 = vadd.f32 %v2991, %v2995
    %v3048 = vadd.f32 %v3047, %v2999
    %v3049 = vadd.f32 %v3048, %v3003
    %v3050 = vadd.f32 %v3049, %v3007
    %v3051 = vadd.f32 %v3050, %v3011
    %v3052 = vadd.f32 %v3051, %v3015
    %v3053 = vadd.f32 %v3052, %v3019
    %v3054 = vrot.slane %v3053, 4
    %v3055 = vadd.f32 %v3053, %v3054
    %v3056 = vrot.slane %v3055, 2
    %v3057 = vadd.f32 %v3055, %v3056
    %v3058 = vrot.slane %v3057, 1
    %v3059 = vadd.f32 %v3057, %v3058
    %v3060 = vadd.f32 %v2992, %v2996
    %v3061 = vadd.f32 %v3060, %v3000
    %v3062 = vadd.f32 %v3061, %v3004
    %v3063 = vadd.f32 %v3062, %v3008
    %v3064 = vadd.f32 %v3063, %v3012
    %v3065 = vadd.f32 %v3064, %v3016
    %v3066 = vadd.f32 %v3065, %v3020
    %v3067 = vrot.slane %v3066, 4
    %v3068 = vadd.f32 %v3066, %v3067
    %v3069 = vrot.slane %v3068, 2
    %v3070 = vadd.f32 %v3068, %v3069
    %v3071 = vrot.slane %v3070, 1
    %v3072 = vadd.f32 %v3070, %v3071
    %v3073 = vadd.f32 %v2681, %v3033
    %v3074 = vadd.f32 %v2682, %v3046
    %v3075 = vadd.f32 %v2683, %v3059
    %v3076 = vadd.f32 %v2684, %v3072
    %v3077 = vld [vmem:[%s0 + $0x1c0] sm:$0xff]
    %v3078 = vld [vmem:[%s0 + $0x1c8] sm:$0xff]
    %v3079 = vld [vmem:[%s0 + $0x1d0] sm:$0xff]
    %v3080 = vld [vmem:[%s0 + $0x1d8] sm:$0xff]
    %v3081 = vld [vmem:[%s0 + $0x1e0] sm:$0xff]
    %v3082 = vld [vmem:[%s0 + $0x1e8] sm:$0xff]
    %v3083 = vld [vmem:[%s0 + $0x1f0] sm:$0xff]
    %v3084 = vld [vmem:[%s0 + $0x1f8] sm:$0xff]
    %3086 = vset.pattern.permute.xlu0 0
    %3087 = vperm.xlu0 %3086, %v3077
    %v3088 = vpop.permute.xlu0 %3087
    %3091 = vset.pattern.permute.xlu0 0
    %3092 = vperm.xlu0 %3091, %v3078
    %v3093 = vpop.permute.xlu0 %3092
    %3096 = vset.pattern.permute.xlu0 0
    %3097 = vperm.xlu0 %3096, %v3079
    %v3098 = vpop.permute.xlu0 %3097
    %3101 = vset.pattern.permute.xlu0 0
    %3102 = vperm.xlu0 %3101, %v3080
    %v3103 = vpop.permute.xlu0 %3102
    %3106 = vset.pattern.permute.xlu0 0
    %3107 = vperm.xlu0 %3106, %v3081
    %v3108 = vpop.permute.xlu0 %3107
    %3111 = vset.pattern.permute.xlu0 0
    %3112 = vperm.xlu0 %3111, %v3082
    %v3113 = vpop.permute.xlu0 %3112
    %3116 = vset.pattern.permute.xlu0 0
    %3117 = vperm.xlu0 %3116, %v3083
    %v3118 = vpop.permute.xlu0 %3117
    %3121 = vset.pattern.permute.xlu0 0
    %3122 = vperm.xlu0 %3121, %v3084
    %v3123 = vpop.permute.xlu0 %3122
    %v3125 = vmul.f32 %v3088, %v271
    %v3126 = vmul.f32 %v3088, %v275
    %v3127 = vmul.f32 %v3088, %v279
    %v3128 = vmul.f32 %v3088, %v283
    %v3129 = vmul.f32 %v3093, %v271
    %v3130 = vmul.f32 %v3093, %v275
    %v3131 = vmul.f32 %v3093, %v279
    %v3132 = vmul.f32 %v3093, %v283
    %v3133 = vmul.f32 %v3098, %v271
    %v3134 = vmul.f32 %v3098, %v275
    %v3135 = vmul.f32 %v3098, %v279
    %v3136 = vmul.f32 %v3098, %v283
    %v3137 = vmul.f32 %v3103, %v271
    %v3138 = vmul.f32 %v3103, %v275
    %v3139 = vmul.f32 %v3103, %v279
    %v3140 = vmul.f32 %v3103, %v283
    %v3141 = vmul.f32 %v3108, %v271
    %v3142 = vmul.f32 %v3108, %v275
    %v3143 = vmul.f32 %v3108, %v279
    %v3144 = vmul.f32 %v3108, %v283
    %v3145 = vmul.f32 %v3113, %v271
    %v3146 = vmul.f32 %v3113, %v275
    %v3147 = vmul.f32 %v3113, %v279
    %v3148 = vmul.f32 %v3113, %v283
    %v3149 = vmul.f32 %v3118, %v271
    %v3150 = vmul.f32 %v3118, %v275
    %v3151 = vmul.f32 %v3118, %v279
    %v3152 = vmul.f32 %v3118, %v283
    %v3153 = vmul.f32 %v3123, %v271
    %v3154 = vmul.f32 %v3123, %v275
    %v3155 = vmul.f32 %v3123, %v279
    %v3156 = vmul.f32 %v3123, %v283
    %v3157 = vadd.f32 %v320, %v3125
    %v3158 = vadd.f32 %v324, %v3126
    %v3159 = vadd.f32 %v328, %v3127
    %v3160 = vadd.f32 %v332, %v3128
    %v3161 = vadd.f32 %v320, %v3129
    %v3162 = vadd.f32 %v324, %v3130
    %v3163 = vadd.f32 %v328, %v3131
    %v3164 = vadd.f32 %v332, %v3132
    %v3165 = vadd.f32 %v320, %v3133
    %v3166 = vadd.f32 %v324, %v3134
    %v3167 = vadd.f32 %v328, %v3135
    %v3168 = vadd.f32 %v332, %v3136
    %v3169 = vadd.f32 %v320, %v3137
    %v3170 = vadd.f32 %v324, %v3138
    %v3171 = vadd.f32 %v328, %v3139
    %v3172 = vadd.f32 %v332, %v3140
    %v3173 = vadd.f32 %v320, %v3141
    %v3174 = vadd.f32 %v324, %v3142
    %v3175 = vadd.f32 %v328, %v3143
    %v3176 = vadd.f32 %v332, %v3144
    %v3177 = vadd.f32 %v320, %v3145
    %v3178 = vadd.f32 %v324, %v3146
    %v3179 = vadd.f32 %v328, %v3147
    %v3180 = vadd.f32 %v332, %v3148
    %v3181 = vadd.f32 %v320, %v3149
    %v3182 = vadd.f32 %v324, %v3150
    %v3183 = vadd.f32 %v328, %v3151
    %v3184 = vadd.f32 %v332, %v3152
    %v3185 = vadd.f32 %v320, %v3153
    %v3186 = vadd.f32 %v324, %v3154
    %v3187 = vadd.f32 %v328, %v3155
    %v3188 = vadd.f32 %v332, %v3156
    %3189 = vset.pattern.permute.xlu0 1
    %3190 = vperm.xlu0 %3189, %v3077
    %v3191 = vpop.permute.xlu0 %3190
    %3193 = vset.pattern.permute.xlu0 1
    %3194 = vperm.xlu0 %3193, %v3078
    %v3195 = vpop.permute.xlu0 %3194
    %3197 = vset.pattern.permute.xlu0 1
    %3198 = vperm.xlu0 %3197, %v3079
    %v3199 = vpop.permute.xlu0 %3198
    %3201 = vset.pattern.permute.xlu0 1
    %3202 = vperm.xlu0 %3201, %v3080
    %v3203 = vpop.permute.xlu0 %3202
    %3205 = vset.pattern.permute.xlu0 1
    %3206 = vperm.xlu0 %3205, %v3081
    %v3207 = vpop.permute.xlu0 %3206
    %3209 = vset.pattern.permute.xlu0 1
    %3210 = vperm.xlu0 %3209, %v3082
    %v3211 = vpop.permute.xlu0 %3210
    %3213 = vset.pattern.permute.xlu0 1
    %3214 = vperm.xlu0 %3213, %v3083
    %v3215 = vpop.permute.xlu0 %3214
    %3217 = vset.pattern.permute.xlu0 1
    %3218 = vperm.xlu0 %3217, %v3084
    %v3219 = vpop.permute.xlu0 %3218
    %v3221 = vmul.f32 %v3191, %v424
    %v3222 = vmul.f32 %v3191, %v428
    %v3223 = vmul.f32 %v3191, %v432
    %v3224 = vmul.f32 %v3191, %v436
    %v3225 = vmul.f32 %v3195, %v424
    %v3226 = vmul.f32 %v3195, %v428
    %v3227 = vmul.f32 %v3195, %v432
    %v3228 = vmul.f32 %v3195, %v436
    %v3229 = vmul.f32 %v3199, %v424
    %v3230 = vmul.f32 %v3199, %v428
    %v3231 = vmul.f32 %v3199, %v432
    %v3232 = vmul.f32 %v3199, %v436
    %v3233 = vmul.f32 %v3203, %v424
    %v3234 = vmul.f32 %v3203, %v428
    %v3235 = vmul.f32 %v3203, %v432
    %v3236 = vmul.f32 %v3203, %v436
    %v3237 = vmul.f32 %v3207, %v424
    %v3238 = vmul.f32 %v3207, %v428
    %v3239 = vmul.f32 %v3207, %v432
    %v3240 = vmul.f32 %v3207, %v436
    %v3241 = vmul.f32 %v3211, %v424
    %v3242 = vmul.f32 %v3211, %v428
    %v3243 = vmul.f32 %v3211, %v432
    %v3244 = vmul.f32 %v3211, %v436
    %v3245 = vmul.f32 %v3215, %v424
    %v3246 = vmul.f32 %v3215, %v428
    %v3247 = vmul.f32 %v3215, %v432
    %v3248 = vmul.f32 %v3215, %v436
    %v3249 = vmul.f32 %v3219, %v424
    %v3250 = vmul.f32 %v3219, %v428
    %v3251 = vmul.f32 %v3219, %v432
    %v3252 = vmul.f32 %v3219, %v436
    %v3253 = vadd.f32 %v3157, %v3221
    %v3254 = vadd.f32 %v3158, %v3222
    %v3255 = vadd.f32 %v3159, %v3223
    %v3256 = vadd.f32 %v3160, %v3224
    %v3257 = vadd.f32 %v3161, %v3225
    %v3258 = vadd.f32 %v3162, %v3226
    %v3259 = vadd.f32 %v3163, %v3227
    %v3260 = vadd.f32 %v3164, %v3228
    %v3261 = vadd.f32 %v3165, %v3229
    %v3262 = vadd.f32 %v3166, %v3230
    %v3263 = vadd.f32 %v3167, %v3231
    %v3264 = vadd.f32 %v3168, %v3232
    %v3265 = vadd.f32 %v3169, %v3233
    %v3266 = vadd.f32 %v3170, %v3234
    %v3267 = vadd.f32 %v3171, %v3235
    %v3268 = vadd.f32 %v3172, %v3236
    %v3269 = vadd.f32 %v3173, %v3237
    %v3270 = vadd.f32 %v3174, %v3238
    %v3271 = vadd.f32 %v3175, %v3239
    %v3272 = vadd.f32 %v3176, %v3240
    %v3273 = vadd.f32 %v3177, %v3241
    %v3274 = vadd.f32 %v3178, %v3242
    %v3275 = vadd.f32 %v3179, %v3243
    %v3276 = vadd.f32 %v3180, %v3244
    %v3277 = vadd.f32 %v3181, %v3245
    %v3278 = vadd.f32 %v3182, %v3246
    %v3279 = vadd.f32 %v3183, %v3247
    %v3280 = vadd.f32 %v3184, %v3248
    %v3281 = vadd.f32 %v3185, %v3249
    %v3282 = vadd.f32 %v3186, %v3250
    %v3283 = vadd.f32 %v3187, %v3251
    %v3284 = vadd.f32 %v3188, %v3252
    %3285 = vset.pattern.permute.xlu0 2
    %3286 = vperm.xlu0 %3285, %v3077
    %v3287 = vpop.permute.xlu0 %3286
    %3289 = vset.pattern.permute.xlu0 2
    %3290 = vperm.xlu0 %3289, %v3078
    %v3291 = vpop.permute.xlu0 %3290
    %3293 = vset.pattern.permute.xlu0 2
    %3294 = vperm.xlu0 %3293, %v3079
    %v3295 = vpop.permute.xlu0 %3294
    %3297 = vset.pattern.permute.xlu0 2
    %3298 = vperm.xlu0 %3297, %v3080
    %v3299 = vpop.permute.xlu0 %3298
    %3301 = vset.pattern.permute.xlu0 2
    %3302 = vperm.xlu0 %3301, %v3081
    %v3303 = vpop.permute.xlu0 %3302
    %3305 = vset.pattern.permute.xlu0 2
    %3306 = vperm.xlu0 %3305, %v3082
    %v3307 = vpop.permute.xlu0 %3306
    %3309 = vset.pattern.permute.xlu0 2
    %3310 = vperm.xlu0 %3309, %v3083
    %v3311 = vpop.permute.xlu0 %3310
    %3313 = vset.pattern.permute.xlu0 2
    %3314 = vperm.xlu0 %3313, %v3084
    %v3315 = vpop.permute.xlu0 %3314
    %v3317 = vmul.f32 %v3287, %v556
    %v3318 = vmul.f32 %v3287, %v560
    %v3319 = vmul.f32 %v3287, %v564
    %v3320 = vmul.f32 %v3287, %v568
    %v3321 = vmul.f32 %v3291, %v556
    %v3322 = vmul.f32 %v3291, %v560
    %v3323 = vmul.f32 %v3291, %v564
    %v3324 = vmul.f32 %v3291, %v568
    %v3325 = vmul.f32 %v3295, %v556
    %v3326 = vmul.f32 %v3295, %v560
    %v3327 = vmul.f32 %v3295, %v564
    %v3328 = vmul.f32 %v3295, %v568
    %v3329 = vmul.f32 %v3299, %v556
    %v3330 = vmul.f32 %v3299, %v560
    %v3331 = vmul.f32 %v3299, %v564
    %v3332 = vmul.f32 %v3299, %v568
    %v3333 = vmul.f32 %v3303, %v556
    %v3334 = vmul.f32 %v3303, %v560
    %v3335 = vmul.f32 %v3303, %v564
    %v3336 = vmul.f32 %v3303, %v568
    %v3337 = vmul.f32 %v3307, %v556
    %v3338 = vmul.f32 %v3307, %v560
    %v3339 = vmul.f32 %v3307, %v564
    %v3340 = vmul.f32 %v3307, %v568
    %v3341 = vmul.f32 %v3311, %v556
    %v3342 = vmul.f32 %v3311, %v560
    %v3343 = vmul.f32 %v3311, %v564
    %v3344 = vmul.f32 %v3311, %v568
    %v3345 = vmul.f32 %v3315, %v556
    %v3346 = vmul.f32 %v3315, %v560
    %v3347 = vmul.f32 %v3315, %v564
    %v3348 = vmul.f32 %v3315, %v568
    %v3349 = vadd.f32 %v3253, %v3317
    %v3350 = vadd.f32 %v3254, %v3318
    %v3351 = vadd.f32 %v3255, %v3319
    %v3352 = vadd.f32 %v3256, %v3320
    %v3353 = vadd.f32 %v3257, %v3321
    %v3354 = vadd.f32 %v3258, %v3322
    %v3355 = vadd.f32 %v3259, %v3323
    %v3356 = vadd.f32 %v3260, %v3324
    %v3357 = vadd.f32 %v3261, %v3325
    %v3358 = vadd.f32 %v3262, %v3326
    %v3359 = vadd.f32 %v3263, %v3327
    %v3360 = vadd.f32 %v3264, %v3328
    %v3361 = vadd.f32 %v3265, %v3329
    %v3362 = vadd.f32 %v3266, %v3330
    %v3363 = vadd.f32 %v3267, %v3331
    %v3364 = vadd.f32 %v3268, %v3332
    %v3365 = vadd.f32 %v3269, %v3333
    %v3366 = vadd.f32 %v3270, %v3334
    %v3367 = vadd.f32 %v3271, %v3335
    %v3368 = vadd.f32 %v3272, %v3336
    %v3369 = vadd.f32 %v3273, %v3337
    %v3370 = vadd.f32 %v3274, %v3338
    %v3371 = vadd.f32 %v3275, %v3339
    %v3372 = vadd.f32 %v3276, %v3340
    %v3373 = vadd.f32 %v3277, %v3341
    %v3374 = vadd.f32 %v3278, %v3342
    %v3375 = vadd.f32 %v3279, %v3343
    %v3376 = vadd.f32 %v3280, %v3344
    %v3377 = vadd.f32 %v3281, %v3345
    %v3378 = vadd.f32 %v3282, %v3346
    %v3379 = vadd.f32 %v3283, %v3347
    %v3380 = vadd.f32 %v3284, %v3348
    %v3381 = vmax.f32 %v3349, 0.0
    %v3382 = vmax.f32 %v3350, 0.0
    %v3383 = vmax.f32 %v3351, 0.0
    %v3384 = vmax.f32 %v3352, 0.0
    %v3385 = vmax.f32 %v3353, 0.0
    %v3386 = vmax.f32 %v3354, 0.0
    %v3387 = vmax.f32 %v3355, 0.0
    %v3388 = vmax.f32 %v3356, 0.0
    %v3389 = vmax.f32 %v3357, 0.0
    %v3390 = vmax.f32 %v3358, 0.0
    %v3391 = vmax.f32 %v3359, 0.0
    %v3392 = vmax.f32 %v3360, 0.0
    %v3393 = vmax.f32 %v3361, 0.0
    %v3394 = vmax.f32 %v3362, 0.0
    %v3395 = vmax.f32 %v3363, 0.0
    %v3396 = vmax.f32 %v3364, 0.0
    %v3397 = vmax.f32 %v3365, 0.0
    %v3398 = vmax.f32 %v3366, 0.0
    %v3399 = vmax.f32 %v3367, 0.0
    %v3400 = vmax.f32 %v3368, 0.0
    %v3401 = vmax.f32 %v3369, 0.0
    %v3402 = vmax.f32 %v3370, 0.0
    %v3403 = vmax.f32 %v3371, 0.0
    %v3404 = vmax.f32 %v3372, 0.0
    %v3405 = vmax.f32 %v3373, 0.0
    %v3406 = vmax.f32 %v3374, 0.0
    %v3407 = vmax.f32 %v3375, 0.0
    %v3408 = vmax.f32 %v3376, 0.0
    %v3409 = vmax.f32 %v3377, 0.0
    %v3410 = vmax.f32 %v3378, 0.0
    %v3411 = vmax.f32 %v3379, 0.0
    %v3412 = vmax.f32 %v3380, 0.0
    %v3413 = vadd.f32 %v3381, %v3385
    %v3414 = vadd.f32 %v3413, %v3389
    %v3415 = vadd.f32 %v3414, %v3393
    %v3416 = vadd.f32 %v3415, %v3397
    %v3417 = vadd.f32 %v3416, %v3401
    %v3418 = vadd.f32 %v3417, %v3405
    %v3419 = vadd.f32 %v3418, %v3409
    %v3420 = vrot.slane %v3419, 4
    %v3421 = vadd.f32 %v3419, %v3420
    %v3422 = vrot.slane %v3421, 2
    %v3423 = vadd.f32 %v3421, %v3422
    %v3424 = vrot.slane %v3423, 1
    %v3425 = vadd.f32 %v3423, %v3424
    %v3426 = vadd.f32 %v3382, %v3386
    %v3427 = vadd.f32 %v3426, %v3390
    %v3428 = vadd.f32 %v3427, %v3394
    %v3429 = vadd.f32 %v3428, %v3398
    %v3430 = vadd.f32 %v3429, %v3402
    %v3431 = vadd.f32 %v3430, %v3406
    %v3432 = vadd.f32 %v3431, %v3410
    %v3433 = vrot.slane %v3432, 4
    %v3434 = vadd.f32 %v3432, %v3433
    %v3435 = vrot.slane %v3434, 2
    %v3436 = vadd.f32 %v3434, %v3435
    %v3437 = vrot.slane %v3436, 1
    %v3438 = vadd.f32 %v3436, %v3437
    %v3439 = vadd.f32 %v3383, %v3387
    %v3440 = vadd.f32 %v3439, %v3391
    %v3441 = vadd.f32 %v3440, %v3395
    %v3442 = vadd.f32 %v3441, %v3399
    %v3443 = vadd.f32 %v3442, %v3403
    %v3444 = vadd.f32 %v3443, %v3407
    %v3445 = vadd.f32 %v3444, %v3411
    %v3446 = vrot.slane %v3445, 4
    %v3447 = vadd.f32 %v3445, %v3446
    %v3448 = vrot.slane %v3447, 2
    %v3449 = vadd.f32 %v3447, %v3448
    %v3450 = vrot.slane %v3449, 1
    %v3451 = vadd.f32 %v3449, %v3450
    %v3452 = vadd.f32 %v3384, %v3388
    %v3453 = vadd.f32 %v3452, %v3392
    %v3454 = vadd.f32 %v3453, %v3396
    %v3455 = vadd.f32 %v3454, %v3400
    %v3456 = vadd.f32 %v3455, %v3404
    %v3457 = vadd.f32 %v3456, %v3408
    %v3458 = vadd.f32 %v3457, %v3412
    %v3459 = vrot.slane %v3458, 4
    %v3460 = vadd.f32 %v3458, %v3459
    %v3461 = vrot.slane %v3460, 2
    %v3462 = vadd.f32 %v3460, %v3461
    %v3463 = vrot.slane %v3462, 1
    %v3464 = vadd.f32 %v3462, %v3463
    %v3465 = vadd.f32 %v3073, %v3425
    %v3466 = vadd.f32 %v3074, %v3438
    %v3467 = vadd.f32 %v3075, %v3451
    %v3468 = vadd.f32 %v3076, %v3464
    %v3469 = vmul.f32 %v3465, 0.00390625
    %v3470 = vmul.f32 %v3466, 0.00390625
    %v3471 = vmul.f32 %v3467, 0.00390625
    %v3472 = vmul.f32 %v3468, 0.00390625
    %vm3473 = vcmask 1040384
    %v3474 = vsel %vm3473, %v1897, %v3469
    %v3475 = vsel %vm3473, %v1898, %v3470
    %v3476 = vsel %vm3473, %v1899, %v3471
    %v3477 = vsel %vm3473, %v1900, %v3472
    %v3478 = vld [vmem:[#allocation2] sm:$0xff]
    %v3479 = vld [vmem:[#allocation2 + $0x8] sm:$0xff]
    %v3480 = vld [vmem:[%s6] sm:$0xff]
    %v3481 = vld [vmem:[%s6 + $0x8] sm:$0xff]
    %v3482 = vld [vmem:[%s6 + $0x10] sm:$0xff]
    %v3483 = vld [vmem:[%s6 + $0x18] sm:$0xff]
    %v3484 = vld [vmem:[%s7] sm:$0x1]
    %v3486 = vlaneseq
    %v3487 = vshrl.u32 %v3486, 7
    %v3488 = vsub.s32 0, %v3487
    %v3489 = vrot.slane %v3484, %v3488
    %vm3491 = vcmask 261120
    %v3493 = vsel %vm3491, %v3478, 0
    %v3496 = vsel %vm3491, %v3479, 0
    %3498 = vmatprep.subr.mxu0 0.0
    %3499 = vmatpush1.msra.mxu0 0.0
    %3500 = vmatprep.subr.mxu0 0.0
    %3501 = vmatpush1.msra.mxu0 0.0
    %3502 = vmatprep.subr.mxu0 0.0
    %3503 = vmatpush1.msra.mxu0 0.0
    %3504 = vmatprep.subr.mxu0 0.0
    %3505 = vmatpush1.msra.mxu0 0.0
    %3506 = vmatprep.subr.mxu0 0.0
    %3507 = vmatpush1.msra.mxu0 0.0
    %3508 = vmatprep.subr.mxu0 0.0
    %3509 = vmatpush1.msra.mxu0 0.0
    %3510 = vmatprep.subr.mxu0 0.0
    %3511 = vmatpush1.msra.mxu0 0.0
    %3512 = vmatprep.subr.mxu0 0.0
    %3513 = vmatpush1.msra.mxu0 0.0
    %3514 = vmatprep.subr.mxu0 0.0
    %3515 = vmatpush1.msra.mxu0 0.0
    %3516 = vmatprep.subr.mxu0 0.0
    %3517 = vmatpush1.msra.mxu0 0.0
    %3518 = vmatprep.subr.mxu0 0.0
    %3519 = vmatpush1.msra.mxu0 0.0
    %3520 = vmatprep.subr.mxu0 0.0
    %3521 = vmatpush1.msra.mxu0 0.0
    %3522 = vmatprep.subr.mxu0 0.0
    %3523 = vmatpush1.msra.mxu0 %v3483
    %3524 = vmatprep.subr.mxu0 0.0
    %3525 = vmatpush1.msra.mxu0 %v3482
    %3526 = vmatprep.subr.mxu0 0.0
    %3527 = vmatpush1.msra.mxu0 %v3481
    %3528 = vmatprep.subr.mxu0 0.0
    %3529 = vmatpush1.msra.mxu0 %v3480
    %3530 = vmatprep.subr.mxu0 0.0
    %3531 = vmatpush2.msra.mxu0 0.0
    %3532 = vmatprep.subr.mxu0 0.0
    %3533 = vmatpush2.msra.mxu0 0.0
    %3534 = vmatprep.subr.mxu0 0.0
    %3535 = vmatpush2.msra.mxu0 0.0
    %3536 = vmatprep.subr.mxu0 0.0
    %3537 = vmatpush2.msra.mxu0 0.0
    %3538 = vmatprep.subr.mxu0 0.0
    %3539 = vmatpush2.msra.mxu0 0.0
    %3540 = vmatprep.subr.mxu0 0.0
    %3541 = vmatpush2.msra.mxu0 0.0
    %3542 = vmatprep.subr.mxu0 0.0
    %3543 = vmatpush2.msra.mxu0 0.0
    %3544 = vmatprep.subr.mxu0 0.0
    %3545 = vmatpush2.msra.mxu0 0.0
    %3546 = vmatprep.subr.mxu0 0.0
    %3547 = vmatpush2.msra.mxu0 0.0
    %3548 = vmatprep.subr.mxu0 0.0
    %3549 = vmatpush2.msra.mxu0 0.0
    %3550 = vmatprep.subr.mxu0 0.0
    %3551 = vmatpush2.msra.mxu0 0.0
    %3552 = vmatprep.subr.mxu0 0.0
    %3553 = vmatpush2.msra.mxu0 0.0
    %3554 = vmatprep.subr.mxu0 0.0
    %3555 = vmatpush2.msra.mxu0 0.0
    %3556 = vmatprep.subr.mxu0 0.0
    %3557 = vmatpush2.msra.mxu0 0.0
    %3558 = vmatprep.subr.mxu0 0.0
    %3559 = vmatpush2.msra.mxu0 0.0
    %3560 = vmatprep.subr.mxu0 0.0
    %3561 = vmatpush2.msra.mxu0 0.0
    %3562 = vmatprep.mubr.f32.mxu0 0.0
    %3563 = vmatmul.mubr.f32.gmra.mxu0 %v3493
    %v3564 = vpop.f32.mrf.mxu0
    %v3565 = vadd.f32 %v3489, %v3564
    %v3566 = vpop.f32.mrf.mxu0
    %3567 = vmatprep.mubr.f32.mxu0 0.0
    %3568 = vmatmul.mubr.f32.gmra.mxu0 %v3496
    %v3569 = vpop.f32.mrf.mxu0
    %v3570 = vadd.f32 %v3489, %v3569
    %v3571 = vpop.f32.mrf.mxu0
    %3572 = vdwg.mxu0
    %v3573 = vld [vmem:[#allocation10] sm:$0xff]
    %v3574 = vld [vmem:[#allocation10 + $0x8] sm:$0xff]
    %v3575 = vld [vmem:[#allocation10 + $0x10] sm:$0xff]
    %v3576 = vld [vmem:[#allocation10 + $0x18] sm:$0xff]
    %v3577 = vld [vmem:[#allocation11] sm:$0x1]
    %v3579 = vlaneseq
    %v3580 = vshrl.u32 %v3579, 7
    %v3581 = vsub.s32 0, %v3580
    %v3582 = vrot.slane %v3577, %v3581
    %3584 = vmatprep.subr.mxu0 0.0
    %3585 = vmatpush1.msra.mxu0 0.0
    %3586 = vmatprep.subr.mxu0 0.0
    %3587 = vmatpush1.msra.mxu0 0.0
    %3588 = vmatprep.subr.mxu0 0.0
    %3589 = vmatpush1.msra.mxu0 0.0
    %3590 = vmatprep.subr.mxu0 0.0
    %3591 = vmatpush1.msra.mxu0 0.0
    %3592 = vmatprep.subr.mxu0 0.0
    %3593 = vmatpush1.msra.mxu0 0.0
    %3594 = vmatprep.subr.mxu0 0.0
    %3595 = vmatpush1.msra.mxu0 0.0
    %3596 = vmatprep.subr.mxu0 0.0
    %3597 = vmatpush1.msra.mxu0 0.0
    %3598 = vmatprep.subr.mxu0 0.0
    %3599 = vmatpush1.msra.mxu0 0.0
    %3600 = vmatprep.subr.mxu0 0.0
    %3601 = vmatpush1.msra.mxu0 0.0
    %3602 = vmatprep.subr.mxu0 0.0
    %3603 = vmatpush1.msra.mxu0 0.0
    %3604 = vmatprep.subr.mxu0 0.0
    %3605 = vmatpush1.msra.mxu0 0.0
    %3606 = vmatprep.subr.mxu0 0.0
    %3607 = vmatpush1.msra.mxu0 0.0
    %3608 = vmatprep.subr.mxu0 0.0
    %3609 = vmatpush1.msra.mxu0 %v3576
    %3610 = vmatprep.subr.mxu0 0.0
    %3611 = vmatpush1.msra.mxu0 %v3575
    %3612 = vmatprep.subr.mxu0 0.0
    %3613 = vmatpush1.msra.mxu0 %v3574
    %3614 = vmatprep.subr.mxu0 0.0
    %3615 = vmatpush1.msra.mxu0 %v3573
    %3616 = vmatprep.subr.mxu0 0.0
    %3617 = vmatpush2.msra.mxu0 0.0
    %3618 = vmatprep.subr.mxu0 0.0
    %3619 = vmatpush2.msra.mxu0 0.0
    %3620 = vmatprep.subr.mxu0 0.0
    %3621 = vmatpush2.msra.mxu0 0.0
    %3622 = vmatprep.subr.mxu0 0.0
    %3623 = vmatpush2.msra.mxu0 0.0
    %3624 = vmatprep.subr.mxu0 0.0
    %3625 = vmatpush2.msra.mxu0 0.0
    %3626 = vmatprep.subr.mxu0 0.0
    %3627 = vmatpush2.msra.mxu0 0.0
    %3628 = vmatprep.subr.mxu0 0.0
    %3629 = vmatpush2.msra.mxu0 0.0
    %3630 = vmatprep.subr.mxu0 0.0
    %3631 = vmatpush2.msra.mxu0 0.0
    %3632 = vmatprep.subr.mxu0 0.0
    %3633 = vmatpush2.msra.mxu0 0.0
    %3634 = vmatprep.subr.mxu0 0.0
    %3635 = vmatpush2.msra.mxu0 0.0
    %3636 = vmatprep.subr.mxu0 0.0
    %3637 = vmatpush2.msra.mxu0 0.0
    %3638 = vmatprep.subr.mxu0 0.0
    %3639 = vmatpush2.msra.mxu0 0.0
    %3640 = vmatprep.subr.mxu0 0.0
    %3641 = vmatpush2.msra.mxu0 0.0
    %3642 = vmatprep.subr.mxu0 0.0
    %3643 = vmatpush2.msra.mxu0 0.0
    %3644 = vmatprep.subr.mxu0 0.0
    %3645 = vmatpush2.msra.mxu0 0.0
    %3646 = vmatprep.subr.mxu0 0.0
    %3647 = vmatpush2.msra.mxu0 0.0
    %3648 = vmatprep.mubr.f32.mxu0 0.0
    %3649 = vmatmul.mubr.f32.gmra.mxu0 %v3493
    %v3650 = vpop.f32.mrf.mxu0
    %v3651 = vadd.f32 %v3582, %v3650
    %v3652 = vpop.f32.mrf.mxu0
    %3653 = vmatprep.mubr.f32.mxu0 0.0
    %3654 = vmatmul.mubr.f32.gmra.mxu0 %v3496
    %v3655 = vpop.f32.mrf.mxu0
    %v3656 = vadd.f32 %v3582, %v3655
    %v3657 = vpop.f32.mrf.mxu0
    %3658 = vdwg.mxu0
    %v3659 = vld [vmem:[#allocation13] sm:$0xff]
    %v3660 = vld [vmem:[#allocation13 + $0x8] sm:$0xff]
    %v3661 = vld [vmem:[#allocation13 + $0x10] sm:$0xff]
    %v3662 = vld [vmem:[#allocation13 + $0x18] sm:$0xff]
    %v3663 = vld [vmem:[#allocation14] sm:$0x1]
    %v3665 = vlaneseq
    %v3666 = vshrl.u32 %v3665, 7
    %v3667 = vsub.s32 0, %v3666
    %v3668 = vrot.slane %v3663, %v3667
    %3670 = vmatprep.subr.mxu0 0.0
    %3671 = vmatpush1.msra.mxu0 0.0
    %3672 = vmatprep.subr.mxu0 0.0
    %3673 = vmatpush1.msra.mxu0 0.0
    %3674 = vmatprep.subr.mxu0 0.0
    %3675 = vmatpush1.msra.mxu0 0.0
    %3676 = vmatprep.subr.mxu0 0.0
    %3677 = vmatpush1.msra.mxu0 0.0
    %3678 = vmatprep.subr.mxu0 0.0
    %3679 = vmatpush1.msra.mxu0 0.0
    %3680 = vmatprep.subr.mxu0 0.0
    %3681 = vmatpush1.msra.mxu0 0.0
    %3682 = vmatprep.subr.mxu0 0.0
    %3683 = vmatpush1.msra.mxu0 0.0
    %3684 = vmatprep.subr.mxu0 0.0
    %3685 = vmatpush1.msra.mxu0 0.0
    %3686 = vmatprep.subr.mxu0 0.0
    %3687 = vmatpush1.msra.mxu0 0.0
    %3688 = vmatprep.subr.mxu0 0.0
    %3689 = vmatpush1.msra.mxu0 0.0
    %3690 = vmatprep.subr.mxu0 0.0
    %3691 = vmatpush1.msra.mxu0 0.0
    %3692 = vmatprep.subr.mxu0 0.0
    %3693 = vmatpush1.msra.mxu0 0.0
    %3694 = vmatprep.subr.mxu0 0.0
    %3695 = vmatpush1.msra.mxu0 %v3662
    %3696 = vmatprep.subr.mxu0 0.0
    %3697 = vmatpush1.msra.mxu0 %v3661
    %3698 = vmatprep.subr.mxu0 0.0
    %3699 = vmatpush1.msra.mxu0 %v3660
    %3700 = vmatprep.subr.mxu0 0.0
    %3701 = vmatpush1.msra.mxu0 %v3659
    %3702 = vmatprep.subr.mxu0 0.0
    %3703 = vmatpush2.msra.mxu0 0.0
    %3704 = vmatprep.subr.mxu0 0.0
    %3705 = vmatpush2.msra.mxu0 0.0
    %3706 = vmatprep.subr.mxu0 0.0
    %3707 = vmatpush2.msra.mxu0 0.0
    %3708 = vmatprep.subr.mxu0 0.0
    %3709 = vmatpush2.msra.mxu0 0.0
    %3710 = vmatprep.subr.mxu0 0.0
    %3711 = vmatpush2.msra.mxu0 0.0
    %3712 = vmatprep.subr.mxu0 0.0
    %3713 = vmatpush2.msra.mxu0 0.0
    %3714 = vmatprep.subr.mxu0 0.0
    %3715 = vmatpush2.msra.mxu0 0.0
    %3716 = vmatprep.subr.mxu0 0.0
    %3717 = vmatpush2.msra.mxu0 0.0
    %3718 = vmatprep.subr.mxu0 0.0
    %3719 = vmatpush2.msra.mxu0 0.0
    %3720 = vmatprep.subr.mxu0 0.0
    %3721 = vmatpush2.msra.mxu0 0.0
    %3722 = vmatprep.subr.mxu0 0.0
    %3723 = vmatpush2.msra.mxu0 0.0
    %3724 = vmatprep.subr.mxu0 0.0
    %3725 = vmatpush2.msra.mxu0 0.0
    %3726 = vmatprep.subr.mxu0 0.0
    %3727 = vmatpush2.msra.mxu0 0.0
    %3728 = vmatprep.subr.mxu0 0.0
    %3729 = vmatpush2.msra.mxu0 0.0
    %3730 = vmatprep.subr.mxu0 0.0
    %3731 = vmatpush2.msra.mxu0 0.0
    %3732 = vmatprep.subr.mxu0 0.0
    %3733 = vmatpush2.msra.mxu0 0.0
    %3734 = vmatprep.mubr.f32.mxu0 0.0
    %3735 = vmatmul.mubr.f32.gmra.mxu0 %v3493
    %v3736 = vpop.f32.mrf.mxu0
    %v3737 = vadd.f32 %v3668, %v3736
    %v3738 = vpop.f32.mrf.mxu0
    %3739 = vmatprep.mubr.f32.mxu0 0.0
    %3740 = vmatmul.mubr.f32.gmra.mxu0 %v3496
    %v3741 = vpop.f32.mrf.mxu0
    %v3742 = vadd.f32 %v3668, %v3741
    %v3743 = vpop.f32.mrf.mxu0
    %3744 = vdwg.mxu0
    %v3745 = vld [vmem:[#allocation5] sm:$0xff]
    %v3746 = vld [vmem:[#allocation5 + $0x8] sm:$0xff]
    %vm3747 = vcmask 523264
    %v3749 = vsel %vm3747, %v3565, 0
    %v3752 = vsel %vm3747, %v3570, 0
    %v3755 = vsel %vm3747, %v3651, 0
    %v3758 = vsel %vm3747, %v3656, 0
    %3760 = vmatprep.subr.mxu0 0.0
    %3761 = vmatpush1.xpose.msra.mxu0 0.0
    %3762 = vmatprep.subr.mxu0 0.0
    %3763 = vmatpush1.xpose.msra.mxu0 0.0
    %3764 = vmatprep.subr.mxu0 0.0
    %3765 = vmatpush1.xpose.msra.mxu0 0.0
    %3766 = vmatprep.subr.mxu0 0.0
    %3767 = vmatpush1.xpose.msra.mxu0 0.0
    %3768 = vmatprep.subr.mxu0 0.0
    %3769 = vmatpush1.xpose.msra.mxu0 0.0
    %3770 = vmatprep.subr.mxu0 0.0
    %3771 = vmatpush1.xpose.msra.mxu0 0.0
    %3772 = vmatprep.subr.mxu0 0.0
    %3773 = vmatpush1.xpose.msra.mxu0 0.0
    %3774 = vmatprep.subr.mxu0 0.0
    %3775 = vmatpush1.xpose.msra.mxu0 0.0
    %3776 = vmatprep.subr.mxu0 0.0
    %3777 = vmatpush1.xpose.msra.mxu0 0.0
    %3778 = vmatprep.subr.mxu0 0.0
    %3779 = vmatpush1.xpose.msra.mxu0 0.0
    %3780 = vmatprep.subr.mxu0 0.0
    %3781 = vmatpush1.xpose.msra.mxu0 0.0
    %3782 = vmatprep.subr.mxu0 0.0
    %3783 = vmatpush1.xpose.msra.mxu0 0.0
    %3784 = vmatprep.subr.mxu0 0.0
    %3785 = vmatpush1.xpose.msra.mxu0 0.0
    %3786 = vmatprep.subr.mxu0 0.0
    %3787 = vmatpush1.xpose.msra.mxu0 0.0
    %3788 = vmatprep.subr.mxu0 0.0
    %3789 = vmatpush1.xpose.msra.mxu0 %v3758
    %3790 = vmatprep.subr.mxu0 0.0
    %3791 = vmatpush1.xpose.msra.mxu0 %v3755
    %3792 = vmatprep.subr.mxu0 0.0
    %3793 = vmatpush2.xpose.msra.mxu0 0.0
    %3794 = vmatprep.subr.mxu0 0.0
    %3795 = vmatpush2.xpose.msra.mxu0 0.0
    %3796 = vmatprep.subr.mxu0 0.0
    %3797 = vmatpush2.xpose.msra.mxu0 0.0
    %3798 = vmatprep.subr.mxu0 0.0
    %3799 = vmatpush2.xpose.msra.mxu0 0.0
    %3800 = vmatprep.subr.mxu0 0.0
    %3801 = vmatpush2.xpose.msra.mxu0 0.0
    %3802 = vmatprep.subr.mxu0 0.0
    %3803 = vmatpush2.xpose.msra.mxu0 0.0
    %3804 = vmatprep.subr.mxu0 0.0
    %3805 = vmatpush2.xpose.msra.mxu0 0.0
    %3806 = vmatprep.subr.mxu0 0.0
    %3807 = vmatpush2.xpose.msra.mxu0 0.0
    %3808 = vmatprep.subr.mxu0 0.0
    %3809 = vmatpush2.xpose.msra.mxu0 0.0
    %3810 = vmatprep.subr.mxu0 0.0
    %3811 = vmatpush2.xpose.msra.mxu0 0.0
    %3812 = vmatprep.subr.mxu0 0.0
    %3813 = vmatpush2.xpose.msra.mxu0 0.0
    %3814 = vmatprep.subr.mxu0 0.0
    %3815 = vmatpush2.xpose.msra.mxu0 0.0
    %3816 = vmatprep.subr.mxu0 0.0
    %3817 = vmatpush2.xpose.msra.mxu0 0.0
    %3818 = vmatprep.subr.mxu0 0.0
    %3819 = vmatpush2.xpose.msra.mxu0 0.0
    %3820 = vmatprep.subr.mxu0 0.0
    %3821 = vmatpush2.xpose.msra.mxu0 0.0
    %3822 = vmatprep.subr.mxu0 0.0
    %3823 = vmatpush2.xpose.msra.mxu0 0.0
    %3824 = vmatprep.mubr.f32.mxu0 0.0
    %3825 = vmatmul.mubr.f32.gmra.mxu0 %v3749
    %v3826 = vpop.f32.mrf.mxu0
    %v3827 = vadd.f32 %v3745, %v3826
    %v3828 = vpop.f32.mrf.mxu0
    %3829 = vmatprep.mubr.f32.mxu0 0.0
    %3830 = vmatmul.mubr.f32.gmra.mxu0 %v3752
    %v3831 = vpop.f32.mrf.mxu0
    %v3832 = vadd.f32 %v3746, %v3831
    %v3833 = vpop.f32.mrf.mxu0
    %3834 = vdwg.mxu0
    %vm3835 = vcmask 130048
    %v3836 = vsel %vm3835, %v3827, -inf
    %3837 = vmax.xlane.f32.xlu0 %v3836
    %v3838 = vpop.xlane.xlu0 %3837
    %v3839 = vsel %vm3835, %v3832, -inf
    %3840 = vmax.xlane.f32.xlu0 %v3839
    %v3841 = vpop.xlane.xlu0 %3840
    %v3842 = vsub.f32 %v3827, %v3838
    %v3843 = vsub.f32 %v3832, %v3841
    %v3844 = vmul.f32 %v3842, 1.442695
    %v3845 = vpow.pop %v3844
    %v3846 = vmul.f32 %v3843, 1.442695
    %v3847 = vpow.pop %v3846
    %v3848 = vsel %vm3835, %v3845, 0.0
    %3849 = vadd.xlane.f32.xlu0 %v3848
    %v3850 = vpop.xlane.xlu0 %3849
    %v3851 = vsel %vm3835, %v3847, 0.0
    %3852 = vadd.xlane.f32.xlu0 %v3851
    %v3853 = vpop.xlane.xlu0 %3852
    %v3854 = vrcp.pop %v3850
    %v3855 = vrcp.pop %v3853
    %v3856 = vmul.f32 %v3845, %v3854
    %v3857 = vmul.f32 %v3847, %v3855
    %v3859 = vsel %vm3835, %v3856, 0
    %v3862 = vsel %vm3835, %v3857, 0
    %3864 = vmatprep.subr.mxu0 0.0
    %3865 = vmatpush1.msra.mxu0 0.0
    %3866 = vmatprep.subr.mxu0 0.0
    %3867 = vmatpush1.msra.mxu0 0.0
    %3868 = vmatprep.subr.mxu0 0.0
    %3869 = vmatpush1.msra.mxu0 0.0
    %3870 = vmatprep.subr.mxu0 0.0
    %3871 = vmatpush1.msra.mxu0 0.0
    %3872 = vmatprep.subr.mxu0 0.0
    %3873 = vmatpush1.msra.mxu0 0.0
    %3874 = vmatprep.subr.mxu0 0.0
    %3875 = vmatpush1.msra.mxu0 0.0
    %3876 = vmatprep.subr.mxu0 0.0
    %3877 = vmatpush1.msra.mxu0 0.0
    %3878 = vmatprep.subr.mxu0 0.0
    %3879 = vmatpush1.msra.mxu0 0.0
    %3880 = vmatprep.subr.mxu0 0.0
    %3881 = vmatpush1.msra.mxu0 0.0
    %3882 = vmatprep.subr.mxu0 0.0
    %3883 = vmatpush1.msra.mxu0 0.0
    %3884 = vmatprep.subr.mxu0 0.0
    %3885 = vmatpush1.msra.mxu0 0.0
    %3886 = vmatprep.subr.mxu0 0.0
    %3887 = vmatpush1.msra.mxu0 0.0
    %3888 = vmatprep.subr.mxu0 0.0
    %3889 = vmatpush1.msra.mxu0 0.0
    %3890 = vmatprep.subr.mxu0 0.0
    %3891 = vmatpush1.msra.mxu0 0.0
    %3892 = vmatprep.subr.mxu0 0.0
    %3893 = vmatpush1.msra.mxu0 %v3742
    %3894 = vmatprep.subr.mxu0 0.0
    %3895 = vmatpush1.msra.mxu0 %v3737
    %3896 = vmatprep.subr.mxu0 0.0
    %3897 = vmatpush2.msra.mxu0 0.0
    %3898 = vmatprep.subr.mxu0 0.0
    %3899 = vmatpush2.msra.mxu0 0.0
    %3900 = vmatprep.subr.mxu0 0.0
    %3901 = vmatpush2.msra.mxu0 0.0
    %3902 = vmatprep.subr.mxu0 0.0
    %3903 = vmatpush2.msra.mxu0 0.0
    %3904 = vmatprep.subr.mxu0 0.0
    %3905 = vmatpush2.msra.mxu0 0.0
    %3906 = vmatprep.subr.mxu0 0.0
    %3907 = vmatpush2.msra.mxu0 0.0
    %3908 = vmatprep.subr.mxu0 0.0
    %3909 = vmatpush2.msra.mxu0 0.0
    %3910 = vmatprep.subr.mxu0 0.0
    %3911 = vmatpush2.msra.mxu0 0.0
    %3912 = vmatprep.subr.mxu0 0.0
    %3913 = vmatpush2.msra.mxu0 0.0
    %3914 = vmatprep.subr.mxu0 0.0
    %3915 = vmatpush2.msra.mxu0 0.0
    %3916 = vmatprep.subr.mxu0 0.0
    %3917 = vmatpush2.msra.mxu0 0.0
    %3918 = vmatprep.subr.mxu0 0.0
    %3919 = vmatpush2.msra.mxu0 0.0
    %3920 = vmatprep.subr.mxu0 0.0
    %3921 = vmatpush2.msra.mxu0 0.0
    %3922 = vmatprep.subr.mxu0 0.0
    %3923 = vmatpush2.msra.mxu0 0.0
    %3924 = vmatprep.subr.mxu0 0.0
    %3925 = vmatpush2.msra.mxu0 0.0
    %3926 = vmatprep.subr.mxu0 0.0
    %3927 = vmatpush2.msra.mxu0 0.0
    %3928 = vmatprep.mubr.f32.mxu0 0.0
    %3929 = vmatmul.mubr.f32.gmra.mxu0 %v3859
    %v3930 = vpop.f32.mrf.mxu0
    %v3931 = vadd.f32 0.0, %v3930
    %v3932 = vpop.f32.mrf.mxu0
    %3933 = vmatprep.mubr.f32.mxu0 0.0
    %3934 = vmatmul.mubr.f32.gmra.mxu0 %v3862
    %v3935 = vpop.f32.mrf.mxu0
    %v3936 = vadd.f32 0.0, %v3935
    %v3937 = vpop.f32.mrf.mxu0
    %3938 = vdwg.mxu0
    %v3939 = vld [vmem:[#allocation7] sm:$0x3]
    %v3941 = vsel %vm3835, %v3939, 0
    %3943 = vmatprep.subr.mxu0 0.0
    %3944 = vmatpush1.msra.mxu0 0.0
    %3945 = vmatprep.subr.mxu0 0.0
    %3946 = vmatpush1.msra.mxu0 0.0
    %3947 = vmatprep.subr.mxu0 0.0
    %3948 = vmatpush1.msra.mxu0 0.0
    %3949 = vmatprep.subr.mxu0 0.0
    %3950 = vmatpush1.msra.mxu0 0.0
    %3951 = vmatprep.subr.mxu0 0.0
    %3952 = vmatpush1.msra.mxu0 0.0
    %3953 = vmatprep.subr.mxu0 0.0
    %3954 = vmatpush1.msra.mxu0 0.0
    %3955 = vmatprep.subr.mxu0 0.0
    %3956 = vmatpush1.msra.mxu0 0.0
    %3957 = vmatprep.subr.mxu0 0.0
    %3958 = vmatpush1.msra.mxu0 0.0
    %3959 = vmatprep.subr.mxu0 0.0
    %3960 = vmatpush1.msra.mxu0 0.0
    %3961 = vmatprep.subr.mxu0 0.0
    %3962 = vmatpush1.msra.mxu0 0.0
    %3963 = vmatprep.subr.mxu0 0.0
    %3964 = vmatpush1.msra.mxu0 0.0
    %3965 = vmatprep.subr.mxu0 0.0
    %3966 = vmatpush1.msra.mxu0 0.0
    %3967 = vmatprep.subr.mxu0 0.0
    %3968 = vmatpush1.msra.mxu0 0.0
    %3969 = vmatprep.subr.mxu0 0.0
    %3970 = vmatpush1.msra.mxu0 0.0
    %3971 = vmatprep.subr.mxu0 0.0
    %3972 = vmatpush1.msra.mxu0 %v3936
    %3973 = vmatprep.subr.mxu0 0.0
    %3974 = vmatpush1.msra.mxu0 %v3931
    %3975 = vmatprep.subr.mxu0 0.0
    %3976 = vmatpush2.msra.mxu0 0.0
    %3977 = vmatprep.subr.mxu0 0.0
    %3978 = vmatpush2.msra.mxu0 0.0
    %3979 = vmatprep.subr.mxu0 0.0
    %3980 = vmatpush2.msra.mxu0 0.0
    %3981 = vmatprep.subr.mxu0 0.0
    %3982 = vmatpush2.msra.mxu0 0.0
    %3983 = vmatprep.subr.mxu0 0.0
    %3984 = vmatpush2.msra.mxu0 0.0
    %3985 = vmatprep.subr.mxu0 0.0
    %3986 = vmatpush2.msra.mxu0 0.0
    %3987 = vmatprep.subr.mxu0 0.0
    %3988 = vmatpush2.msra.mxu0 0.0
    %3989 = vmatprep.subr.mxu0 0.0
    %3990 = vmatpush2.msra.mxu0 0.0
    %3991 = vmatprep.subr.mxu0 0.0
    %3992 = vmatpush2.msra.mxu0 0.0
    %3993 = vmatprep.subr.mxu0 0.0
    %3994 = vmatpush2.msra.mxu0 0.0
    %3995 = vmatprep.subr.mxu0 0.0
    %3996 = vmatpush2.msra.mxu0 0.0
    %3997 = vmatprep.subr.mxu0 0.0
    %3998 = vmatpush2.msra.mxu0 0.0
    %3999 = vmatprep.subr.mxu0 0.0
    %4000 = vmatpush2.msra.mxu0 0.0
    %4001 = vmatprep.subr.mxu0 0.0
    %4002 = vmatpush2.msra.mxu0 0.0
    %4003 = vmatprep.subr.mxu0 0.0
    %4004 = vmatpush2.msra.mxu0 0.0
    %4005 = vmatprep.subr.mxu0 0.0
    %4006 = vmatpush2.msra.mxu0 0.0
    %4007 = vmatprep.mubr.f32.mxu0 0.0
    %4008 = vmatmul.mubr.f32.gmra.mxu0 %v3941
    %v4009 = vpop.f32.mrf.mxu0
    %v4010 = vadd.f32 0.0, %v4009
    %v4011 = vpop.f32.mrf.mxu0
    %4012 = vdwg.mxu0
    %v4013 = vld [vmem:[%s12] sm:$0xff]
    %v4014 = vld [vmem:[%s12 + $0x8] sm:$0xff]
    %v4015 = vld [vmem:[%s12 + $0x10] sm:$0xff]
    %v4016 = vld [vmem:[%s12 + $0x18] sm:$0xff]
    %v4017 = vld [vmem:[%s12 + $0x20] sm:$0xff]
    %v4018 = vld [vmem:[%s12 + $0x28] sm:$0xff]
    %v4019 = vld [vmem:[%s12 + $0x30] sm:$0xff]
    %v4020 = vld [vmem:[%s12 + $0x38] sm:$0xff]
    %v4021 = vld [vmem:[%s12 + $0x40] sm:$0xff]
    %v4022 = vld [vmem:[%s12 + $0x48] sm:$0xff]
    %v4023 = vld [vmem:[%s12 + $0x50] sm:$0xff]
    %v4024 = vld [vmem:[%s12 + $0x58] sm:$0xff]
    %v4025 = vld [vmem:[%s12 + $0x60] sm:$0xff]
    %v4026 = vld [vmem:[%s12 + $0x68] sm:$0xff]
    %v4027 = vld [vmem:[%s12 + $0x70] sm:$0xff]
    %v4028 = vld [vmem:[%s12 + $0x78] sm:$0xff]
    %v4029 = vld [vmem:[%s12 + $0x80] sm:$0xff]
    %v4030 = vld [vmem:[%s12 + $0x88] sm:$0xff]
    %v4031 = vld [vmem:[%s12 + $0x90] sm:$0xff]
    %v4032 = vld [vmem:[%s12 + $0x98] sm:$0xff]
    %v4033 = vld [vmem:[%s12 + $0xa0] sm:$0xff]
    %v4034 = vld [vmem:[%s12 + $0xa8] sm:$0xff]
    %v4035 = vld [vmem:[%s12 + $0xb0] sm:$0xff]
    %v4036 = vld [vmem:[%s12 + $0xb8] sm:$0xff]
    %v4037 = vld [vmem:[%s12 + $0xc0] sm:$0xff]
    %v4038 = vld [vmem:[%s12 + $0xc8] sm:$0xff]
    %v4039 = vld [vmem:[%s12 + $0xd0] sm:$0xff]
    %v4040 = vld [vmem:[%s12 + $0xd8] sm:$0xff]
    %v4041 = vld [vmem:[%s12 + $0xe0] sm:$0xff]
    %v4042 = vld [vmem:[%s12 + $0xe8] sm:$0xff]
    %v4043 = vld [vmem:[%s12 + $0xf0] sm:$0xff]
    %v4044 = vld [vmem:[%s12 + $0xf8] sm:$0xff]
    %v4045 = vld [vmem:[%s12 + $0x100] sm:$0xff]
    %v4046 = vld [vmem:[%s12 + $0x108] sm:$0xff]
    %v4047 = vld [vmem:[%s12 + $0x110] sm:$0xff]
    %v4048 = vld [vmem:[%s12 + $0x118] sm:$0xff]
    %v4049 = vld [vmem:[%s12 + $0x120] sm:$0xff]
    %v4050 = vld [vmem:[%s12 + $0x128] sm:$0xff]
    %v4051 = vld [vmem:[%s12 + $0x130] sm:$0xff]
    %v4052 = vld [vmem:[%s12 + $0x138] sm:$0xff]
    %v4053 = vld [vmem:[%s12 + $0x140] sm:$0xff]
    %v4054 = vld [vmem:[%s12 + $0x148] sm:$0xff]
    %v4055 = vld [vmem:[%s12 + $0x150] sm:$0xff]
    %v4056 = vld [vmem:[%s12 + $0x158] sm:$0xff]
    %v4057 = vld [vmem:[%s12 + $0x160] sm:$0xff]
    %v4058 = vld [vmem:[%s12 + $0x168] sm:$0xff]
    %v4059 = vld [vmem:[%s12 + $0x170] sm:$0xff]
    %v4060 = vld [vmem:[%s12 + $0x178] sm:$0xff]
    %v4061 = vld [vmem:[%s12 + $0x180] sm:$0xff]
    %v4062 = vld [vmem:[%s12 + $0x188] sm:$0xff]
    %v4063 = vld [vmem:[%s12 + $0x190] sm:$0xff]
    %v4064 = vld [vmem:[%s12 + $0x198] sm:$0xff]
    %v4065 = vld [vmem:[%s12 + $0x1a0] sm:$0xff]
    %v4066 = vld [vmem:[%s12 + $0x1a8] sm:$0xff]
    %v4067 = vld [vmem:[%s12 + $0x1b0] sm:$0xff]
    %v4068 = vld [vmem:[%s12 + $0x1b8] sm:$0xff]
    %v4069 = vld [vmem:[%s12 + $0x1c0] sm:$0xff]
    %v4070 = vld [vmem:[%s12 + $0x1c8] sm:$0xff]
    %v4071 = vld [vmem:[%s12 + $0x1d0] sm:$0xff]
    %v4072 = vld [vmem:[%s12 + $0x1d8] sm:$0xff]
    %v4073 = vld [vmem:[%s12 + $0x1e0] sm:$0xff]
    %v4074 = vld [vmem:[%s12 + $0x1e8] sm:$0xff]
    %v4075 = vld [vmem:[%s12 + $0x1f0] sm:$0xff]
    %v4076 = vld [vmem:[%s12 + $0x1f8] sm:$0xff]
    %v4077 = vld [vmem:[#allocation16] sm:$0x1]
    %v4079 = vlaneseq
    %v4080 = vshrl.u32 %v4079, 7
    %v4081 = vsub.s32 0, %v4080
    %v4082 = vrot.slane %v4077, %v4081
    %4084 = vmatprep.subr.mxu0 0.0
    %4085 = vmatpush1.msra.mxu0 %v4028
    %4086 = vmatprep.subr.mxu0 0.0
    %4087 = vmatpush1.msra.mxu0 %v4027
    %4088 = vmatprep.subr.mxu0 0.0
    %4089 = vmatpush1.msra.mxu0 %v4026
    %4090 = vmatprep.subr.mxu0 0.0
    %4091 = vmatpush1.msra.mxu0 %v4025
    %4092 = vmatprep.subr.mxu0 0.0
    %4093 = vmatpush1.msra.mxu0 %v4024
    %4094 = vmatprep.subr.mxu0 0.0
    %4095 = vmatpush1.msra.mxu0 %v4023
    %4096 = vmatprep.subr.mxu0 0.0
    %4097 = vmatpush1.msra.mxu0 %v4022
    %4098 = vmatprep.subr.mxu0 0.0
    %4099 = vmatpush1.msra.mxu0 %v4021
    %4100 = vmatprep.subr.mxu0 0.0
    %4101 = vmatpush1.msra.mxu0 %v4020
    %4102 = vmatprep.subr.mxu0 0.0
    %4103 = vmatpush1.msra.mxu0 %v4019
    %4104 = vmatprep.subr.mxu0 0.0
    %4105 = vmatpush1.msra.mxu0 %v4018
    %4106 = vmatprep.subr.mxu0 0.0
    %4107 = vmatpush1.msra.mxu0 %v4017
    %4108 = vmatprep.subr.mxu0 0.0
    %4109 = vmatpush1.msra.mxu0 %v4016
    %4110 = vmatprep.subr.mxu0 0.0
    %4111 = vmatpush1.msra.mxu0 %v4015
    %4112 = vmatprep.subr.mxu0 0.0
    %4113 = vmatpush1.msra.mxu0 %v4014
    %4114 = vmatprep.subr.mxu0 0.0
    %4115 = vmatpush1.msra.mxu0 %v4013
    %4116 = vmatprep.subr.mxu0 0.0
    %4117 = vmatpush2.msra.mxu0 %v4044
    %4118 = vmatprep.subr.mxu0 0.0
    %4119 = vmatpush2.msra.mxu0 %v4043
    %4120 = vmatprep.subr.mxu0 0.0
    %4121 = vmatpush2.msra.mxu0 %v4042
    %4122 = vmatprep.subr.mxu0 0.0
    %4123 = vmatpush2.msra.mxu0 %v4041
    %4124 = vmatprep.subr.mxu0 0.0
    %4125 = vmatpush2.msra.mxu0 %v4040
    %4126 = vmatprep.subr.mxu0 0.0
    %4127 = vmatpush2.msra.mxu0 %v4039
    %4128 = vmatprep.subr.mxu0 0.0
    %4129 = vmatpush2.msra.mxu0 %v4038
    %4130 = vmatprep.subr.mxu0 0.0
    %4131 = vmatpush2.msra.mxu0 %v4037
    %4132 = vmatprep.subr.mxu0 0.0
    %4133 = vmatpush2.msra.mxu0 %v4036
    %4134 = vmatprep.subr.mxu0 0.0
    %4135 = vmatpush2.msra.mxu0 %v4035
    %4136 = vmatprep.subr.mxu0 0.0
    %4137 = vmatpush2.msra.mxu0 %v4034
    %4138 = vmatprep.subr.mxu0 0.0
    %4139 = vmatpush2.msra.mxu0 %v4033
    %4140 = vmatprep.subr.mxu0 0.0
    %4141 = vmatpush2.msra.mxu0 %v4032
    %4142 = vmatprep.subr.mxu0 0.0
    %4143 = vmatpush2.msra.mxu0 %v4031
    %4144 = vmatprep.subr.mxu0 0.0
    %4145 = vmatpush2.msra.mxu0 %v4030
    %4146 = vmatprep.subr.mxu0 0.0
    %4147 = vmatpush2.msra.mxu0 %v4029
    %4148 = vmatprep.mubr.f32.mxu0 %v3475
    %4149 = vmatmul.mubr.f32.gmra.mxu0 %v3474
    %v4150 = vpop.f32.mrf.mxu0
    %v4151 = vadd.f32 %v4082, %v4150
    %v4152 = vpop.f32.mrf.mxu0
    %4153 = vdwg.mxu0
    %4154 = vmatprep.subr.mxu0 0.0
    %4155 = vmatpush1.msra.mxu0 %v4060
    %4156 = vmatprep.subr.mxu0 0.0
    %4157 = vmatpush1.msra.mxu0 %v4059
    %4158 = vmatprep.subr.mxu0 0.0
    %4159 = vmatpush1.msra.mxu0 %v4058
    %4160 = vmatprep.subr.mxu0 0.0
    %4161 = vmatpush1.msra.mxu0 %v4057
    %4162 = vmatprep.subr.mxu0 0.0
    %4163 = vmatpush1.msra.mxu0 %v4056
    %4164 = vmatprep.subr.mxu0 0.0
    %4165 = vmatpush1.msra.mxu0 %v4055
    %4166 = vmatprep.subr.mxu0 0.0
    %4167 = vmatpush1.msra.mxu0 %v4054
    %4168 = vmatprep.subr.mxu0 0.0
    %4169 = vmatpush1.msra.mxu0 %v4053
    %4170 = vmatprep.subr.mxu0 0.0
    %4171 = vmatpush1.msra.mxu0 %v4052
    %4172 = vmatprep.subr.mxu0 0.0
    %4173 = vmatpush1.msra.mxu0 %v4051
    %4174 = vmatprep.subr.mxu0 0.0
    %4175 = vmatpush1.msra.mxu0 %v4050
    %4176 = vmatprep.subr.mxu0 0.0
    %4177 = vmatpush1.msra.mxu0 %v4049
    %4178 = vmatprep.subr.mxu0 0.0
    %4179 = vmatpush1.msra.mxu0 %v4048
    %4180 = vmatprep.subr.mxu0 0.0
    %4181 = vmatpush1.msra.mxu0 %v4047
    %4182 = vmatprep.subr.mxu0 0.0
    %4183 = vmatpush1.msra.mxu0 %v4046
    %4184 = vmatprep.subr.mxu0 0.0
    %4185 = vmatpush1.msra.mxu0 %v4045
    %4186 = vmatprep.subr.mxu0 0.0
    %4187 = vmatpush2.msra.mxu0 %v4076
    %4188 = vmatprep.subr.mxu0 0.0
    %4189 = vmatpush2.msra.mxu0 %v4075
    %4190 = vmatprep.subr.mxu0 0.0
    %4191 = vmatpush2.msra.mxu0 %v4074
    %4192 = vmatprep.subr.mxu0 0.0
    %4193 = vmatpush2.msra.mxu0 %v4073
    %4194 = vmatprep.subr.mxu0 0.0
    %4195 = vmatpush2.msra.mxu0 %v4072
    %4196 = vmatprep.subr.mxu0 0.0
    %4197 = vmatpush2.msra.mxu0 %v4071
    %4198 = vmatprep.subr.mxu0 0.0
    %4199 = vmatpush2.msra.mxu0 %v4070
    %4200 = vmatprep.subr.mxu0 0.0
    %4201 = vmatpush2.msra.mxu0 %v4069
    %4202 = vmatprep.subr.mxu0 0.0
    %4203 = vmatpush2.msra.mxu0 %v4068
    %4204 = vmatprep.subr.mxu0 0.0
    %4205 = vmatpush2.msra.mxu0 %v4067
    %4206 = vmatprep.subr.mxu0 0.0
    %4207 = vmatpush2.msra.mxu0 %v4066
    %4208 = vmatprep.subr.mxu0 0.0
    %4209 = vmatpush2.msra.mxu0 %v4065
    %4210 = vmatprep.subr.mxu0 0.0
    %4211 = vmatpush2.msra.mxu0 %v4064
    %4212 = vmatprep.subr.mxu0 0.0
    %4213 = vmatpush2.msra.mxu0 %v4063
    %4214 = vmatprep.subr.mxu0 0.0
    %4215 = vmatpush2.msra.mxu0 %v4062
    %4216 = vmatprep.subr.mxu0 0.0
    %4217 = vmatpush2.msra.mxu0 %v4061
    %4218 = vmatprep.mubr.f32.mxu0 %v3477
    %4219 = vmatmul.mubr.f32.gmra.mxu0 %v3476
    %v4220 = vpop.f32.mrf.mxu0
    %v4221 = vadd.f32 %v4151, %v4220
    %v4222 = vpop.f32.mrf.mxu0
    %4223 = vdwg.mxu0
    %v4224 = vld [vmem:[%s14] sm:$0xff]
    %v4225 = vld [vmem:[%s14 + $0x8] sm:$0xff]
    %v4226 = vld [vmem:[%s14 + $0x10] sm:$0xff]
    %v4227 = vld [vmem:[%s14 + $0x18] sm:$0xff]
    %v4228 = vld [vmem:[%s14 + $0x20] sm:$0xff]
    %v4229 = vld [vmem:[%s14 + $0x28] sm:$0xff]
    %v4230 = vld [vmem:[%s14 + $0x30] sm:$0xff]
    %v4231 = vld [vmem:[%s14 + $0x38] sm:$0xff]
    %v4232 = vld [vmem:[%s14 + $0x40] sm:$0xff]
    %v4233 = vld [vmem:[%s14 + $0x48] sm:$0xff]
    %v4234 = vld [vmem:[%s14 + $0x50] sm:$0xff]
    %v4235 = vld [vmem:[%s14 + $0x58] sm:$0xff]
    %v4236 = vld [vmem:[%s14 + $0x60] sm:$0xff]
    %v4237 = vld [vmem:[%s14 + $0x68] sm:$0xff]
    %v4238 = vld [vmem:[%s14 + $0x70] sm:$0xff]
    %v4239 = vld [vmem:[%s14 + $0x78] sm:$0xff]
    %v4240 = vld [vmem:[%s15] sm:$0xff]
    %v4241 = vld [vmem:[%s15 + $0x8] sm:$0xff]
    %v4242 = vld [vmem:[%s15 + $0x10] sm:$0xff]
    %v4243 = vld [vmem:[%s15 + $0x18] sm:$0xff]
    %v4244 = vld [vmem:[%s15 + $0x20] sm:$0xff]
    %v4245 = vld [vmem:[%s15 + $0x28] sm:$0xff]
    %v4246 = vld [vmem:[%s15 + $0x30] sm:$0xff]
    %v4247 = vld [vmem:[%s15 + $0x38] sm:$0xff]
    %v4249 = vsel %vm3747, %v4010, 0
    %4251 = vmatprep.subr.mxu0 0.0
    %4252 = vmatpush1.msra.mxu0 0.0
    %4253 = vmatprep.subr.mxu0 0.0
    %4254 = vmatpush1.msra.mxu0 0.0
    %4255 = vmatprep.subr.mxu0 0.0
    %4256 = vmatpush1.msra.mxu0 0.0
    %4257 = vmatprep.subr.mxu0 0.0
    %4258 = vmatpush1.msra.mxu0 0.0
    %4259 = vmatprep.subr.mxu0 0.0
    %4260 = vmatpush1.msra.mxu0 0.0
    %4261 = vmatprep.subr.mxu0 0.0
    %4262 = vmatpush1.msra.mxu0 0.0
    %4263 = vmatprep.subr.mxu0 0.0
    %4264 = vmatpush1.msra.mxu0 0.0
    %4265 = vmatprep.subr.mxu0 0.0
    %4266 = vmatpush1.msra.mxu0 0.0
    %4267 = vmatprep.subr.mxu0 0.0
    %4268 = vmatpush1.msra.mxu0 %v4247
    %4269 = vmatprep.subr.mxu0 0.0
    %4270 = vmatpush1.msra.mxu0 %v4246
    %4271 = vmatprep.subr.mxu0 0.0
    %4272 = vmatpush1.msra.mxu0 %v4245
    %4273 = vmatprep.subr.mxu0 0.0
    %4274 = vmatpush1.msra.mxu0 %v4244
    %4275 = vmatprep.subr.mxu0 0.0
    %4276 = vmatpush1.msra.mxu0 %v4243
    %4277 = vmatprep.subr.mxu0 0.0
    %4278 = vmatpush1.msra.mxu0 %v4242
    %4279 = vmatprep.subr.mxu0 0.0
    %4280 = vmatpush1.msra.mxu0 %v4241
    %4281 = vmatprep.subr.mxu0 0.0
    %4282 = vmatpush1.msra.mxu0 %v4240
    %4283 = vmatprep.subr.mxu0 0.0
    %4284 = vmatpush2.msra.mxu0 0.0
    %4285 = vmatprep.subr.mxu0 0.0
    %4286 = vmatpush2.msra.mxu0 0.0
    %4287 = vmatprep.subr.mxu0 0.0
    %4288 = vmatpush2.msra.mxu0 0.0
    %4289 = vmatprep.subr.mxu0 0.0
    %4290 = vmatpush2.msra.mxu0 0.0
    %4291 = vmatprep.subr.mxu0 0.0
    %4292 = vmatpush2.msra.mxu0 0.0
    %4293 = vmatprep.subr.mxu0 0.0
    %4294 = vmatpush2.msra.mxu0 0.0
    %4295 = vmatprep.subr.mxu0 0.0
    %4296 = vmatpush2.msra.mxu0 0.0
    %4297 = vmatprep.subr.mxu0 0.0
    %4298 = vmatpush2.msra.mxu0 0.0
    %4299 = vmatprep.subr.mxu0 0.0
    %4300 = vmatpush2.msra.mxu0 0.0
    %4301 = vmatprep.subr.mxu0 0.0
    %4302 = vmatpush2.msra.mxu0 0.0
    %4303 = vmatprep.subr.mxu0 0.0
    %4304 = vmatpush2.msra.mxu0 0.0
    %4305 = vmatprep.subr.mxu0 0.0
    %4306 = vmatpush2.msra.mxu0 0.0
    %4307 = vmatprep.subr.mxu0 0.0
    %4308 = vmatpush2.msra.mxu0 0.0
    %4309 = vmatprep.subr.mxu0 0.0
    %4310 = vmatpush2.msra.mxu0 0.0
    %4311 = vmatprep.subr.mxu0 0.0
    %4312 = vmatpush2.msra.mxu0 0.0
    %4313 = vmatprep.subr.mxu0 0.0
    %4314 = vmatpush2.msra.mxu0 0.0
    %4315 = vmatprep.mubr.f32.mxu0 0.0
    %4316 = vmatmul.mubr.f32.gmra.mxu0 %v4249
    %v4317 = vpop.f32.mrf.mxu0
    %v4318 = vadd.f32 0.0, %v4317
    %v4319 = vpop.f32.mrf.mxu0
    %4320 = vdwg.mxu0
    %4321 = vmatprep.subr.mxu0 0.0
    %4322 = vmatpush1.msra.mxu0 %v4239
    %4323 = vmatprep.subr.mxu0 0.0
    %4324 = vmatpush1.msra.mxu0 %v4238
    %4325 = vmatprep.subr.mxu0 0.0
    %4326 = vmatpush1.msra.mxu0 %v4237
    %4327 = vmatprep.subr.mxu0 0.0
    %4328 = vmatpush1.msra.mxu0 %v4236
    %4329 = vmatprep.subr.mxu0 0.0
    %4330 = vmatpush1.msra.mxu0 %v4235
    %4331 = vmatprep.subr.mxu0 0.0
    %4332 = vmatpush1.msra.mxu0 %v4234
    %4333 = vmatprep.subr.mxu0 0.0
    %4334 = vmatpush1.msra.mxu0 %v4233
    %4335 = vmatprep.subr.mxu0 0.0
    %4336 = vmatpush1.msra.mxu0 %v4232
    %4337 = vmatprep.subr.mxu0 0.0
    %4338 = vmatpush1.msra.mxu0 %v4231
    %4339 = vmatprep.subr.mxu0 0.0
    %4340 = vmatpush1.msra.mxu0 %v4230
    %4341 = vmatprep.subr.mxu0 0.0
    %4342 = vmatpush1.msra.mxu0 %v4229
    %4343 = vmatprep.subr.mxu0 0.0
    %4344 = vmatpush1.msra.mxu0 %v4228
    %4345 = vmatprep.subr.mxu0 0.0
    %4346 = vmatpush1.msra.mxu0 %v4227
    %4347 = vmatprep.subr.mxu0 0.0
    %4348 = vmatpush1.msra.mxu0 %v4226
    %4349 = vmatprep.subr.mxu0 0.0
    %4350 = vmatpush1.msra.mxu0 %v4225
    %4351 = vmatprep.subr.mxu0 0.0
    %4352 = vmatpush1.msra.mxu0 %v4224
    %4353 = vmatprep.subr.mxu0 0.0
    %4354 = vmatpush2.msra.mxu0 0.0
    %4355 = vmatprep.subr.mxu0 0.0
    %4356 = vmatpush2.msra.mxu0 0.0
    %4357 = vmatprep.subr.mxu0 0.0
    %4358 = vmatpush2.msra.mxu0 0.0
    %4359 = vmatprep.subr.mxu0 0.0
    %4360 = vmatpush2.msra.mxu0 0.0
    %4361 = vmatprep.subr.mxu0 0.0
    %4362 = vmatpush2.msra.mxu0 0.0
    %4363 = vmatprep.subr.mxu0 0.0
    %4364 = vmatpush2.msra.mxu0 0.0
    %4365 = vmatprep.subr.mxu0 0.0
    %4366 = vmatpush2.msra.mxu0 0.0
    %4367 = vmatprep.subr.mxu0 0.0
    %4368 = vmatpush2.msra.mxu0 0.0
    %4369 = vmatprep.subr.mxu0 0.0
    %4370 = vmatpush2.msra.mxu0 0.0
    %4371 = vmatprep.subr.mxu0 0.0
    %4372 = vmatpush2.msra.mxu0 0.0
    %4373 = vmatprep.subr.mxu0 0.0
    %4374 = vmatpush2.msra.mxu0 0.0
    %4375 = vmatprep.subr.mxu0 0.0
    %4376 = vmatpush2.msra.mxu0 0.0
    %4377 = vmatprep.subr.mxu0 0.0
    %4378 = vmatpush2.msra.mxu0 0.0
    %4379 = vmatprep.subr.mxu0 0.0
    %4380 = vmatpush2.msra.mxu0 0.0
    %4381 = vmatprep.subr.mxu0 0.0
    %4382 = vmatpush2.msra.mxu0 0.0
    %4383 = vmatprep.subr.mxu0 0.0
    %4384 = vmatpush2.msra.mxu0 0.0
    %4385 = vmatprep.mubr.f32.mxu0 0.0
    %4386 = vmatmul.mubr.f32.gmra.mxu0 %v4221
    %v4387 = vpop.f32.mrf.mxu0
    %v4388 = vadd.f32 %v4318, %v4387
    %v4389 = vpop.f32.mrf.mxu0
    %4390 = vdwg.mxu0
    %v4391 = vld [vmem:[%s16] sm:$0x1]
    %v4393 = vlaneseq
    %v4394 = vshrl.u32 %v4393, 7
    %v4395 = vsub.s32 0, %v4394
    %v4396 = vrot.slane %v4391, %v4395
    %v4398 = vadd.f32 %v4388, %v4396
    %v4399 = vmax.f32 %v4398, 0.0
    %v4400 = vld [vmem:[%s17] sm:$0xff]
    %v4401 = vld [vmem:[%s17 + $0x8] sm:$0xff]
    %v4402 = vld [vmem:[%s17 + $0x10] sm:$0xff]
    %v4403 = vld [vmem:[%s17 + $0x18] sm:$0xff]
    %v4404 = vld [vmem:[%s17 + $0x20] sm:$0xff]
    %v4405 = vld [vmem:[%s17 + $0x28] sm:$0xff]
    %v4406 = vld [vmem:[%s17 + $0x30] sm:$0xff]
    %v4407 = vld [vmem:[%s17 + $0x38] sm:$0xff]
    %v4408 = vld [vmem:[%s17 + $0x40] sm:$0xff]
    %v4409 = vld [vmem:[%s17 + $0x48] sm:$0xff]
    %v4410 = vld [vmem:[%s17 + $0x50] sm:$0xff]
    %v4411 = vld [vmem:[%s17 + $0x58] sm:$0xff]
    %v4412 = vld [vmem:[%s17 + $0x60] sm:$0xff]
    %v4413 = vld [vmem:[%s17 + $0x68] sm:$0xff]
    %v4414 = vld [vmem:[%s17 + $0x70] sm:$0xff]
    %v4415 = vld [vmem:[%s17 + $0x78] sm:$0xff]
    %v4416 = vld [vmem:[%s18] sm:$0x1]
    %v4418 = vlaneseq
    %v4419 = vshrl.u32 %v4418, 7
    %v4420 = vsub.s32 0, %v4419
    %v4421 = vrot.slane %v4416, %v4420
    %4423 = vmatprep.subr.mxu0 0.0
    %4424 = vmatpush1.msra.mxu0 %v4415
    %4425 = vmatprep.subr.mxu0 0.0
    %4426 = vmatpush1.msra.mxu0 %v4414
    %4427 = vmatprep.subr.mxu0 0.0
    %4428 = vmatpush1.msra.mxu0 %v4413
    %4429 = vmatprep.subr.mxu0 0.0
    %4430 = vmatpush1.msra.mxu0 %v4412
    %4431 = vmatprep.subr.mxu0 0.0
    %4432 = vmatpush1.msra.mxu0 %v4411
    %4433 = vmatprep.subr.mxu0 0.0
    %4434 = vmatpush1.msra.mxu0 %v4410
    %4435 = vmatprep.subr.mxu0 0.0
    %4436 = vmatpush1.msra.mxu0 %v4409
    %4437 = vmatprep.subr.mxu0 0.0
    %4438 = vmatpush1.msra.mxu0 %v4408
    %4439 = vmatprep.subr.mxu0 0.0
    %4440 = vmatpush1.msra.mxu0 %v4407
    %4441 = vmatprep.subr.mxu0 0.0
    %4442 = vmatpush1.msra.mxu0 %v4406
    %4443 = vmatprep.subr.mxu0 0.0
    %4444 = vmatpush1.msra.mxu0 %v4405
    %4445 = vmatprep.subr.mxu0 0.0
    %4446 = vmatpush1.msra.mxu0 %v4404
    %4447 = vmatprep.subr.mxu0 0.0
    %4448 = vmatpush1.msra.mxu0 %v4403
    %4449 = vmatprep.subr.mxu0 0.0
    %4450 = vmatpush1.msra.mxu0 %v4402
    %4451 = vmatprep.subr.mxu0 0.0
    %4452 = vmatpush1.msra.mxu0 %v4401
    %4453 = vmatprep.subr.mxu0 0.0
    %4454 = vmatpush1.msra.mxu0 %v4400
    %4455 = vmatprep.subr.mxu0 0.0
    %4456 = vmatpush2.msra.mxu0 0.0
    %4457 = vmatprep.subr.mxu0 0.0
    %4458 = vmatpush2.msra.mxu0 0.0
    %4459 = vmatprep.subr.mxu0 0.0
    %4460 = vmatpush2.msra.mxu0 0.0
    %4461 = vmatprep.subr.mxu0 0.0
    %4462 = vmatpush2.msra.mxu0 0.0
    %4463 = vmatprep.subr.mxu0 0.0
    %4464 = vmatpush2.msra.mxu0 0.0
    %4465 = vmatprep.subr.mxu0 0.0
    %4466 = vmatpush2.msra.mxu0 0.0
    %4467 = vmatprep.subr.mxu0 0.0
    %4468 = vmatpush2.msra.mxu0 0.0
    %4469 = vmatprep.subr.mxu0 0.0
    %4470 = vmatpush2.msra.mxu0 0.0
    %4471 = vmatprep.subr.mxu0 0.0
    %4472 = vmatpush2.msra.mxu0 0.0
    %4473 = vmatprep.subr.mxu0 0.0
    %4474 = vmatpush2.msra.mxu0 0.0
    %4475 = vmatprep.subr.mxu0 0.0
    %4476 = vmatpush2.msra.mxu0 0.0
    %4477 = vmatprep.subr.mxu0 0.0
    %4478 = vmatpush2.msra.mxu0 0.0
    %4479 = vmatprep.subr.mxu0 0.0
    %4480 = vmatpush2.msra.mxu0 0.0
    %4481 = vmatprep.subr.mxu0 0.0
    %4482 = vmatpush2.msra.mxu0 0.0
    %4483 = vmatprep.subr.mxu0 0.0
    %4484 = vmatpush2.msra.mxu0 0.0
    %4485 = vmatprep.subr.mxu0 0.0
    %4486 = vmatpush2.msra.mxu0 0.0
    %4487 = vmatprep.mubr.f32.mxu0 0.0
    %4488 = vmatmul.mubr.f32.gmra.mxu0 %v4399
    %v4489 = vpop.f32.mrf.mxu0
    %v4490 = vadd.f32 %v4421, %v4489
    %v4491 = vpop.f32.mrf.mxu0
    %4492 = vdwg.mxu0
    %v4493 = vmax.f32 %v4490, 0.0
    %v4494 = vld [vmem:[#allocation17] sm:$0xff]
    %v4495 = vld [vmem:[#allocation17 + $0x8] sm:$0xff]
    %v4496 = vld [vmem:[#allocation17 + $0x10] sm:$0xff]
    %v4497 = vld [vmem:[#allocation17 + $0x18] sm:$0xff]
    %v4498 = vld [vmem:[#allocation17 + $0x20] sm:$0xff]
    %v4499 = vld [vmem:[#allocation17 + $0x28] sm:$0xff]
    %v4500 = vld [vmem:[#allocation17 + $0x30] sm:$0xff]
    %v4501 = vld [vmem:[#allocation17 + $0x38] sm:$0xff]
    %v4502 = vld [vmem:[%s20] sm:$0x1]
    %v4504 = vlaneseq
    %v4505 = vshrl.u32 %v4504, 7
    %v4506 = vsub.s32 0, %v4505
    %v4507 = vrot.slane %v4502, %v4506
    %v4510 = vsel %vm3747, %v4493, 0
    %4512 = vmatprep.subr.mxu0 0.0
    %4513 = vmatpush1.msra.mxu0 0.0
    %4514 = vmatprep.subr.mxu0 0.0
    %4515 = vmatpush1.msra.mxu0 0.0
    %4516 = vmatprep.subr.mxu0 0.0
    %4517 = vmatpush1.msra.mxu0 0.0
    %4518 = vmatprep.subr.mxu0 0.0
    %4519 = vmatpush1.msra.mxu0 0.0
    %4520 = vmatprep.subr.mxu0 0.0
    %4521 = vmatpush1.msra.mxu0 0.0
    %4522 = vmatprep.subr.mxu0 0.0
    %4523 = vmatpush1.msra.mxu0 0.0
    %4524 = vmatprep.subr.mxu0 0.0
    %4525 = vmatpush1.msra.mxu0 0.0
    %4526 = vmatprep.subr.mxu0 0.0
    %4527 = vmatpush1.msra.mxu0 0.0
    %4528 = vmatprep.subr.mxu0 0.0
    %4529 = vmatpush1.msra.mxu0 %v4501
    %4530 = vmatprep.subr.mxu0 0.0
    %4531 = vmatpush1.msra.mxu0 %v4500
    %4532 = vmatprep.subr.mxu0 0.0
    %4533 = vmatpush1.msra.mxu0 %v4499
    %4534 = vmatprep.subr.mxu0 0.0
    %4535 = vmatpush1.msra.mxu0 %v4498
    %4536 = vmatprep.subr.mxu0 0.0
    %4537 = vmatpush1.msra.mxu0 %v4497
    %4538 = vmatprep.subr.mxu0 0.0
    %4539 = vmatpush1.msra.mxu0 %v4496
    %4540 = vmatprep.subr.mxu0 0.0
    %4541 = vmatpush1.msra.mxu0 %v4495
    %4542 = vmatprep.subr.mxu0 0.0
    %4543 = vmatpush1.msra.mxu0 %v4494
    %4544 = vmatprep.subr.mxu0 0.0
    %4545 = vmatpush2.msra.mxu0 0.0
    %4546 = vmatprep.subr.mxu0 0.0
    %4547 = vmatpush2.msra.mxu0 0.0
    %4548 = vmatprep.subr.mxu0 0.0
    %4549 = vmatpush2.msra.mxu0 0.0
    %4550 = vmatprep.subr.mxu0 0.0
    %4551 = vmatpush2.msra.mxu0 0.0
    %4552 = vmatprep.subr.mxu0 0.0
    %4553 = vmatpush2.msra.mxu0 0.0
    %4554 = vmatprep.subr.mxu0 0.0
    %4555 = vmatpush2.msra.mxu0 0.0
    %4556 = vmatprep.subr.mxu0 0.0
    %4557 = vmatpush2.msra.mxu0 0.0
    %4558 = vmatprep.subr.mxu0 0.0
    %4559 = vmatpush2.msra.mxu0 0.0
    %4560 = vmatprep.subr.mxu0 0.0
    %4561 = vmatpush2.msra.mxu0 0.0
    %4562 = vmatprep.subr.mxu0 0.0
    %4563 = vmatpush2.msra.mxu0 0.0
    %4564 = vmatprep.subr.mxu0 0.0
    %4565 = vmatpush2.msra.mxu0 0.0
    %4566 = vmatprep.subr.mxu0 0.0
    %4567 = vmatpush2.msra.mxu0 0.0
    %4568 = vmatprep.subr.mxu0 0.0
    %4569 = vmatpush2.msra.mxu0 0.0
    %4570 = vmatprep.subr.mxu0 0.0
    %4571 = vmatpush2.msra.mxu0 0.0
    %4572 = vmatprep.subr.mxu0 0.0
    %4573 = vmatpush2.msra.mxu0 0.0
    %4574 = vmatprep.subr.mxu0 0.0
    %4575 = vmatpush2.msra.mxu0 0.0
    %4576 = vmatprep.mubr.f32.mxu0 0.0
    %4577 = vmatmul.mubr.f32.gmra.mxu0 %v4510
    %v4578 = vpop.f32.mrf.mxu0
    %v4579 = vadd.f32 %v4507, %v4578
    %v4580 = vpop.f32.mrf.mxu0
    %4581 = vdwg.mxu0
    %v4582 = vsub.f32 0.0, %v4579
    %v4583 = vmul.f32 %v4582, 1.442695
    %v4584 = vpow.pop %v4583
    %v4585 = vadd.f32 %v4584, 1.0
    %v4586 = vrcp.pop %v4585
    %v4587 = vmax.f32 %v4586, 0.0
    %v4588 = vmin.f32 %v4587, 1.0
    %4589 = vst [vmem:[#allocation19] sm:$0x3] %v4588
    // Predicated region
    $region126: #{tpu_custom_call.1} parent=1 // pred_check
      _
    $region127: #{tpu_custom_call.1} parent=1 // pred_check_branch
      %4591 = sbr.rel (0) target = $region129
    $region128: #{tpu_custom_call.1} parent=1 // pred_region
      %s4593 = ssub.s32 32, 32
      %4594 = vsyncadd [#allocation4], %s4593
      %s4596 = sshll.u32 [#allocation19], 4
      %s4597 = int_to_ptr.vmem [resolvable:$true] %s4596
      %4599 = dma.vmem_to_hbm [thread:$0]  %s4597, 32, %s21, [#allocation4]
    $region129: #{tpu_custom_call.1} parent=1 // pred_fallthru
      _
    // Predicated region
    $region130: #{tpu_custom_call.1} parent=1 // pred_check
      _
    $region131: #{tpu_custom_call.1} parent=1 // pred_check_branch
      %4601 = sbr.rel (0) target = $region133
    $region132: #{tpu_custom_call.1} parent=1 // pred_region
      %4602 = dma.done [#allocation4], 32
    $region133: #{tpu_custom_call.1} parent=1 // pred_fallthru
      _
    %4603 = vsyncpa [#allocation3], 1
    %4604 = vsyncpa [#allocation6], 1
    %4605 = vsyncpa [#allocation9], 1
    %4606 = vsyncpa [#allocation12], 1
    %4607 = vsyncpa [#allocation15], 1
    %4608 = vsyncpa [#allocation18], 1
    %4609 = vsyncpa [#allocation4], 1

</llo_original>
